<compile_context>
chip_gen: v7x
topology: tpu7x:2x2x1
jax: 0.10.0
libtpu: 0.0.40
codegen_flags: <defaults>
</compile_context>

<pallas_src>
import functools

import numpy as np
import jax
import jax.numpy as jnp
from jax.experimental import pallas as pl
from jax.experimental.pallas import tpu as pltpu


def _round_up(x, m):
    return (x + m - 1) // m * m


# ------------------------------ Pallas kernel -------------------------------


def fused_csnn_kernel(x_ref, w1_ref, b1_ref, w2_ref, b2_ref, wf_ref, bf_ref,
                      out_ref, s1_ref, s2_ref, *, T, tau):
    """Whole SDDTP_CSNN eval forward for one batch tile of BB images.

    x_ref : [BB, 896]       bf16 flattened (zero-padded) 28x28 images
    w1    : [896, 640] bf16, b1 [1, 640] f32   (conv1 5x5 + 2x2 avgpool, folded)
    w2    : [640, 128] bf16, b2 [1, 128] f32   (conv2 5x5 + 2x2 avgpool, folded)
    wf    : [128, 128] bf16, bf [1, 128] f32   (classifier, out padded 10->128)
    out   : [BB, 128] f32   firing rate (mean spike over T)
    s1/s2 : VMEM scratch [T*BB, 640] / [T*BB, 128] bf16 time-major spike slabs
    """
    inv_tau = jnp.float32(1.0 / tau)
    decay = jnp.float32(1.0 - 1.0 / tau)
    BB = x_ref.shape[0]

    # ---- layer 1: conv+pool current (input is broadcast over T -> compute once)
    i1 = jnp.dot(x_ref[...], w1_ref[...],
                 preferred_element_type=jnp.float32) + b1_ref[...]      # [BB, 640]
    i1s = i1 * inv_tau                                                  # hoisted

    # ---- layer-1 LIF recurrence over T (unrolled; elementwise on [BB, S1]) ----
    v = jnp.zeros_like(i1)
    for t in range(T):
        v = v * decay + i1s
        spike = v >= 1.0
        s1_ref[pl.ds(t * BB, BB), :] = jnp.where(spike, 1.0, 0.0).astype(jnp.bfloat16)
        v = jnp.where(spike, 0.0, v)                                    # hard reset

    # ---- layer 2: conv+pool current for ALL T timesteps in one MXU matmul ----
    i2 = jnp.dot(s1_ref[...], w2_ref[...],
                 preferred_element_type=jnp.float32) + b2_ref[...]      # [T*BB, 128]
    i2s = i2 * inv_tau

    v = jnp.zeros((BB, i2.shape[1]), jnp.float32)
    for t in range(T):
        v = v * decay + i2s[t * BB:(t + 1) * BB, :]
        spike = v >= 1.0
        s2_ref[pl.ds(t * BB, BB), :] = jnp.where(spike, 1.0, 0.0).astype(jnp.bfloat16)
        v = jnp.where(spike, 0.0, v)

    # ---- classifier: linear current for ALL T timesteps in one matmul ----
    i3 = jnp.dot(s2_ref[...], wf_ref[...],
                 preferred_element_type=jnp.float32) + bf_ref[...]      # [T*BB, 128]
    i3s = i3 * inv_tau

    # ---- classifier LIF + firing-rate accumulation ----
    v = jnp.zeros((BB, i3.shape[1]), jnp.float32)
    acc = jnp.zeros((BB, i3.shape[1]), jnp.float32)
    for t in range(T):
        v = v * decay + i3s[t * BB:(t + 1) * BB, :]
        spike = v >= 1.0
        acc = acc + jnp.where(spike, 1.0, 0.0)
        v = jnp.where(spike, 0.0, v)
    out_ref[...] = acc * jnp.float32(1.0 / T)


# ------------------------------ Pallas wrapper -------------------------------


def sddtp_csnn_forward(x_nchw, labels, params, *, T, tau, block_b=128):
    """Eval-mode forward of SDDTP_CSNN.  Returns (rate [B,10], mse_loss).

    block_b: batch-tile size (multiple of 16).  128 is a good default on all
    chips; 256 fills the v6e/v7x MXU even better at large batch.
    """
    B = x_nchw.shape[0]
    O = labels.shape[1]
    K_pad, S1p = params["w1"].shape
    S2p = params["w2"].shape[1]
    Op = params["wf"].shape[1]

    # Batch tile: multiple of 16 (bf16 sublane packing) and of block_b when
    # the batch is large.  Grid extent is even at realistic B for v7x's 2 TCs.
    BB = min(block_b, _round_up(B, 16))
    B_pad = _round_up(B, BB)

    x_flat = x_nchw.reshape(B, -1).astype(jnp.float32)                  # [B, 784]
    x_flat = jnp.pad(x_flat, ((0, B_pad - B), (0, K_pad - x_flat.shape[1])))
    x_flat = x_flat.astype(jnp.bfloat16)

    kernel = functools.partial(fused_csnn_kernel, T=T, tau=tau)

    rate_pad = pl.pallas_call(
        kernel,
        out_shape=jax.ShapeDtypeStruct((B_pad, Op), jnp.float32),
        grid_spec=pltpu.PrefetchScalarGridSpec(
            num_scalar_prefetch=0,
            grid=(B_pad // BB,),
            in_specs=[
                pl.BlockSpec((BB, K_pad), lambda i: (i, 0)),
                pl.BlockSpec(params["w1"].shape, lambda i: (0, 0)),
                pl.BlockSpec(params["b1"].shape, lambda i: (0, 0)),
                pl.BlockSpec(params["w2"].shape, lambda i: (0, 0)),
                pl.BlockSpec(params["b2"].shape, lambda i: (0, 0)),
                pl.BlockSpec(params["wf"].shape, lambda i: (0, 0)),
                pl.BlockSpec(params["bf"].shape, lambda i: (0, 0)),
            ],
            out_specs=pl.BlockSpec((BB, Op), lambda i: (i, 0)),
            scratch_shapes=[
                pltpu.VMEM((T * BB, S1p), jnp.bfloat16),   # layer-1 spikes, time-major
                pltpu.VMEM((T * BB, S2p), jnp.bfloat16),   # layer-2 spikes, time-major
            ],
        ),
        compiler_params=pltpu.CompilerParams(
            dimension_semantics=("parallel",),             # batch tiles across TCs
            vmem_limit_bytes=32 * 1024 * 1024,
        ),
    )(x_flat, params["w1"], params["b1"], params["w2"], params["b2"],
      params["wf"], params["bf"])

    rate = rate_pad[:B, :O]                                # drop batch / lane padding
    loss = jnp.mean((rate - labels) ** 2)                  # F.mse_loss
    return rate, loss


# ----------------------- parameter / matrix construction ---------------------


def make_conv_pool_matrix(h, w, cin, cout, ksize, pool, w_conv, b_conv):
    """Fold a valid ksize x ksize conv (stride 1) + pool x pool avg-pool into one
    dense matrix.  Flat layouts: input index = (row*w + col)*cin + ci, output
    index = (prow*wp + pcol)*cout + co (spatial-major, channels last).

    w_conv: [k, k, cin, cout]; b_conv: [cout]
    Returns (W [h*w*cin, hp*wp*cout], b [1, hp*wp*cout]) float32.
    """
    ho, wo = h - ksize + 1, w - ksize + 1
    hp, wp = ho // pool, wo // pool
    W = np.zeros((h * w * cin, hp * wp * cout), np.float32)
    scale = 1.0 / (pool * pool)
    for pi in range(ho):
        for pj in range(wo):
            q = (pi // pool) * wp + (pj // pool)
            for kh in range(ksize):
                for kw in range(ksize):
                    r = (pi + kh) * w + (pj + kw)
                    W[r * cin:(r + 1) * cin, q * cout:(q + 1) * cout] += (
                        w_conv[kh, kw] * scale)
    b = np.tile(np.asarray(b_conv, np.float32).reshape(1, cout), (1, hp * wp))
    return W, b


def init_params(key, channels, label_size, *, k_pad=896, lane=128):
    c1, c2 = channels, channels * 2
    k1, k2, k3 = jax.random.split(key, 3)
    wc1 = np.asarray(jax.random.normal(k1, (5, 5, 1, c1), jnp.float32)) / np.sqrt(25.0)
    bc1 = np.zeros((c1,), np.float32)
    wc2 = np.asarray(jax.random.normal(k2, (5, 5, c1, c2), jnp.float32)) / np.sqrt(25.0 * c1)
    bc2 = np.zeros((c2,), np.float32)

    w1, b1 = make_conv_pool_matrix(28, 28, 1, c1, 5, 2, wc1, bc1)    # [784, 144*c1]
    w2, b2 = make_conv_pool_matrix(12, 12, c1, c2, 5, 2, wc2, bc2)   # [144*c1, 16*c2]

    # Classifier weight rows follow this implementation's spatial-major flatten;
    # weights are random in-script, so this is an equivalent re-parameterization
    # of PyTorch's channel-major flatten.
    f_in = c2 * 4 * 4
    wf = np.asarray(jax.random.normal(k3, (f_in, label_size), jnp.float32)) / np.sqrt(f_in)
    bf = np.zeros((1, label_size), np.float32)

    # --- lane / MXU alignment padding: zero rows & columns => exact no-op ---
    s1, s2 = w1.shape[1], w2.shape[1]
    s1p, s2p, op = _round_up(s1, lane), _round_up(s2, lane), _round_up(label_size, lane)

    w1p = np.zeros((k_pad, s1p), np.float32); w1p[:w1.shape[0], :s1] = w1
    b1p = np.zeros((1, s1p), np.float32);     b1p[:, :s1] = b1
    w2p = np.zeros((s1p, s2p), np.float32);   w2p[:s1, :s2] = w2
    b2p = np.zeros((1, s2p), np.float32);     b2p[:, :s2] = b2
    wfp = np.zeros((s2p, op), np.float32);    wfp[:s2, :label_size] = wf
    bfp = np.zeros((1, op), np.float32);      bfp[:, :label_size] = bf

    # padded bias columns must stay zero so padded lanes never spike
    assert np.all(b1p[:, s1:] == 0.0) and np.all(b2p[:, s2:] == 0.0)
    assert np.all(bfp[:, label_size:] == 0.0)

    return dict(
        w1=jnp.asarray(w1p, jnp.bfloat16), b1=jnp.asarray(b1p, jnp.float32),
        w2=jnp.asarray(w2p, jnp.bfloat16), b2=jnp.asarray(b2p, jnp.float32),
        wf=jnp.asarray(wfp, jnp.bfloat16), bf=jnp.asarray(bfp, jnp.float32))


# ----------------------------------- main ------------------------------------


if __name__ == "__main__":
    B, T, channels, label_size, tau = 2, 8, 4, 10, 2.0

    key = jax.random.PRNGKey(0)
    kx, kl = jax.random.split(key)
    x = jax.random.uniform(kx, (B, 1, 28, 28), jnp.float32)          # FMNIST-like
    labels = jax.nn.one_hot(
        jax.random.randint(kl, (B,), 0, label_size), label_size).astype(jnp.float32)

    params = init_params(jax.random.PRNGKey(42), channels, label_size)

    fwd = jax.jit(functools.partial(sddtp_csnn_forward, T=T, tau=tau))
    rate, loss = fwd(x, labels, params)
    jax.block_until_ready((rate, loss))

    assert rate.shape == (B, label_size)
    assert loss.shape == ()
    print("KERNEL_OK")
</pallas_src>

<mosaic_0001>
module attributes {stable_mosaic.version = 11 : i64} {
  func.func @fused_csnn_kernel(%arg0: i32, %arg1: memref<16x896xbf16, #tpu.memory_space<vmem>>, %arg2: memref<896x640xbf16, #tpu.memory_space<vmem>>, %arg3: memref<1x640xf32, #tpu.memory_space<vmem>>, %arg4: memref<640x128xbf16, #tpu.memory_space<vmem>>, %arg5: memref<1x128xf32, #tpu.memory_space<vmem>>, %arg6: memref<128x128xbf16, #tpu.memory_space<vmem>>, %arg7: memref<1x128xf32, #tpu.memory_space<vmem>>, %arg8: memref<16x128xf32, #tpu.memory_space<vmem>>, %arg9: memref<128x640xbf16, #tpu.memory_space<vmem>>, %arg10: memref<128x128xbf16, #tpu.memory_space<vmem>>) attributes {dimension_semantics = [#tpu.dimension_semantics<parallel>], iteration_bounds = array<i64: 1>, scalar_prefetch = 0 : i64, scratch_operands = 2 : i64, tpu.core_type = #tpu.core_type<tc>, window_params = [{transform_indices = @transform_0, window_bounds = array<i64: 16, 896>}, {pipeline_mode = #tpu.pipeline_mode<synchronous>, transform_indices = @transform_1, window_bounds = array<i64: 896, 640>}, {pipeline_mode = #tpu.pipeline_mode<synchronous>, transform_indices = @transform_2, window_bounds = array<i64: 1, 640>}, {pipeline_mode = #tpu.pipeline_mode<synchronous>, transform_indices = @transform_3, window_bounds = array<i64: 640, 128>}, {pipeline_mode = #tpu.pipeline_mode<synchronous>, transform_indices = @transform_4, window_bounds = array<i64: 1, 128>}, {pipeline_mode = #tpu.pipeline_mode<synchronous>, transform_indices = @transform_5, window_bounds = array<i64: 128, 128>}, {pipeline_mode = #tpu.pipeline_mode<synchronous>, transform_indices = @transform_6, window_bounds = array<i64: 1, 128>}, {transform_indices = @transform_7, window_bounds = array<i64: 16, 128>}]} {
    %c0 = arith.constant 0 : index
    %c0_0 = arith.constant 0 : index
    %0 = vector.load %arg1[%c0, %c0_0] : memref<16x896xbf16, #tpu.memory_space<vmem>>, vector<16x896xbf16>
    %c0_1 = arith.constant 0 : index
    %c0_2 = arith.constant 0 : index
    %1 = vector.load %arg2[%c0_1, %c0_2] : memref<896x640xbf16, #tpu.memory_space<vmem>>, vector<896x640xbf16>
    %cst = arith.constant dense<0.000000e+00> : vector<16x640xf32>
    %2 = tpu.matmul %0, %1, %cst {dimension_numbers = #tpu.dot_dimension_numbers<[1], [0], [0], [1], [0, 0, 1, 1], [], []>} : vector<16x896xbf16>, vector<896x640xbf16>, vector<16x640xf32> -> vector<16x640xf32>
    %c0_3 = arith.constant 0 : index
    %c0_4 = arith.constant 0 : index
    %3 = vector.load %arg3[%c0_3, %c0_4] : memref<1x640xf32, #tpu.memory_space<vmem>>, vector<1x640xf32>
    %4 = vector.broadcast %3 : vector<1x640xf32> to vector<16x640xf32>
    %5 = arith.addf %2, %4 : vector<16x640xf32>
    %cst_5 = arith.constant 5.000000e-01 : f32
    %6 = vector.broadcast %cst_5 : f32 to vector<16x640xf32>
    %7 = arith.mulf %5, %6 : vector<16x640xf32>
    %cst_6 = arith.constant 0.000000e+00 : f32
    %8 = vector.broadcast %cst_6 : f32 to vector<16x640xf32>
    %cst_7 = arith.constant 5.000000e-01 : f32
    %9 = vector.broadcast %cst_7 : f32 to vector<16x640xf32>
    %10 = arith.mulf %8, %9 : vector<16x640xf32>
    %11 = arith.addf %10, %7 : vector<16x640xf32>
    %cst_8 = arith.constant 1.000000e+00 : f32
    %12 = vector.broadcast %cst_8 : f32 to vector<16x640xf32>
    %13 = arith.cmpf oge, %11, %12 : vector<16x640xf32>
    %cst_9 = arith.constant 1.000000e+00 : f32
    %cst_10 = arith.constant 0.000000e+00 : f32
    %14 = vector.broadcast %cst_9 : f32 to vector<16x640xf32>
    %15 = vector.broadcast %cst_10 : f32 to vector<16x640xf32>
    %16 = arith.select %13, %14, %15 : vector<16x640xi1>, vector<16x640xf32>
    %17 = arith.truncf %16 : vector<16x640xf32> to vector<16x640xbf16>
    %c0_11 = arith.constant 0 : index
    %c0_12 = arith.constant 0 : index
    %18 = vector.load %arg9[%c0_11, %c0_12] : memref<128x640xbf16, #tpu.memory_space<vmem>>, vector<16x640xbf16>
    tpu.vector_store %arg9[%c0_11, %c0_12], %17 {strides = array<i32>} : memref<128x640xbf16, #tpu.memory_space<vmem>>, vector<16x640xbf16>,
    %cst_13 = arith.constant 0.000000e+00 : f32
    %19 = vector.broadcast %cst_13 : f32 to vector<16x640xf32>
    %20 = arith.select %13, %19, %11 : vector<16x640xi1>, vector<16x640xf32>
    %cst_14 = arith.constant 5.000000e-01 : f32
    %21 = vector.broadcast %cst_14 : f32 to vector<16x640xf32>
    %22 = arith.mulf %20, %21 : vector<16x640xf32>
    %23 = arith.addf %22, %7 : vector<16x640xf32>
    %cst_15 = arith.constant 1.000000e+00 : f32
    %24 = vector.broadcast %cst_15 : f32 to vector<16x640xf32>
    %25 = arith.cmpf oge, %23, %24 : vector<16x640xf32>
    %cst_16 = arith.constant 1.000000e+00 : f32
    %cst_17 = arith.constant 0.000000e+00 : f32
    %26 = vector.broadcast %cst_16 : f32 to vector<16x640xf32>
    %27 = vector.broadcast %cst_17 : f32 to vector<16x640xf32>
    %28 = arith.select %25, %26, %27 : vector<16x640xi1>, vector<16x640xf32>
    %29 = arith.truncf %28 : vector<16x640xf32> to vector<16x640xbf16>
    %c16 = arith.constant 16 : index
    %c0_18 = arith.constant 0 : index
    %30 = vector.load %arg9[%c16, %c0_18] : memref<128x640xbf16, #tpu.memory_space<vmem>>, vector<16x640xbf16>
    tpu.vector_store %arg9[%c16, %c0_18], %29 {strides = array<i32>} : memref<128x640xbf16, #tpu.memory_space<vmem>>, vector<16x640xbf16>,
    %cst_19 = arith.constant 0.000000e+00 : f32
    %31 = vector.broadcast %cst_19 : f32 to vector<16x640xf32>
    %32 = arith.select %25, %31, %23 : vector<16x640xi1>, vector<16x640xf32>
    %cst_20 = arith.constant 5.000000e-01 : f32
    %33 = vector.broadcast %cst_20 : f32 to vector<16x640xf32>
    %34 = arith.mulf %32, %33 : vector<16x640xf32>
    %35 = arith.addf %34, %7 : vector<16x640xf32>
    %cst_21 = arith.constant 1.000000e+00 : f32
    %36 = vector.broadcast %cst_21 : f32 to vector<16x640xf32>
    %37 = arith.cmpf oge, %35, %36 : vector<16x640xf32>
    %cst_22 = arith.constant 1.000000e+00 : f32
    %cst_23 = arith.constant 0.000000e+00 : f32
    %38 = vector.broadcast %cst_22 : f32 to vector<16x640xf32>
    %39 = vector.broadcast %cst_23 : f32 to vector<16x640xf32>
    %40 = arith.select %37, %38, %39 : vector<16x640xi1>, vector<16x640xf32>
    %41 = arith.truncf %40 : vector<16x640xf32> to vector<16x640xbf16>
    %c32 = arith.constant 32 : index
    %c0_24 = arith.constant 0 : index
    %42 = vector.load %arg9[%c32, %c0_24] : memref<128x640xbf16, #tpu.memory_space<vmem>>, vector<16x640xbf16>
    tpu.vector_store %arg9[%c32, %c0_24], %41 {strides = array<i32>} : memref<128x640xbf16, #tpu.memory_space<vmem>>, vector<16x640xbf16>,
    %cst_25 = arith.constant 0.000000e+00 : f32
    %43 = vector.broadcast %cst_25 : f32 to vector<16x640xf32>
    %44 = arith.select %37, %43, %35 : vector<16x640xi1>, vector<16x640xf32>
    %cst_26 = arith.constant 5.000000e-01 : f32
    %45 = vector.broadcast %cst_26 : f32 to vector<16x640xf32>
    %46 = arith.mulf %44, %45 : vector<16x640xf32>
    %47 = arith.addf %46, %7 : vector<16x640xf32>
    %cst_27 = arith.constant 1.000000e+00 : f32
    %48 = vector.broadcast %cst_27 : f32 to vector<16x640xf32>
    %49 = arith.cmpf oge, %47, %48 : vector<16x640xf32>
    %cst_28 = arith.constant 1.000000e+00 : f32
    %cst_29 = arith.constant 0.000000e+00 : f32
    %50 = vector.broadcast %cst_28 : f32 to vector<16x640xf32>
    %51 = vector.broadcast %cst_29 : f32 to vector<16x640xf32>
    %52 = arith.select %49, %50, %51 : vector<16x640xi1>, vector<16x640xf32>
    %53 = arith.truncf %52 : vector<16x640xf32> to vector<16x640xbf16>
    %c48 = arith.constant 48 : index
    %c0_30 = arith.constant 0 : index
    %54 = vector.load %arg9[%c48, %c0_30] : memref<128x640xbf16, #tpu.memory_space<vmem>>, vector<16x640xbf16>
    tpu.vector_store %arg9[%c48, %c0_30], %53 {strides = array<i32>} : memref<128x640xbf16, #tpu.memory_space<vmem>>, vector<16x640xbf16>,
    %cst_31 = arith.constant 0.000000e+00 : f32
    %55 = vector.broadcast %cst_31 : f32 to vector<16x640xf32>
    %56 = arith.select %49, %55, %47 : vector<16x640xi1>, vector<16x640xf32>
    %cst_32 = arith.constant 5.000000e-01 : f32
    %57 = vector.broadcast %cst_32 : f32 to vector<16x640xf32>
    %58 = arith.mulf %56, %57 : vector<16x640xf32>
    %59 = arith.addf %58, %7 : vector<16x640xf32>
    %cst_33 = arith.constant 1.000000e+00 : f32
    %60 = vector.broadcast %cst_33 : f32 to vector<16x640xf32>
    %61 = arith.cmpf oge, %59, %60 : vector<16x640xf32>
    %cst_34 = arith.constant 1.000000e+00 : f32
    %cst_35 = arith.constant 0.000000e+00 : f32
    %62 = vector.broadcast %cst_34 : f32 to vector<16x640xf32>
    %63 = vector.broadcast %cst_35 : f32 to vector<16x640xf32>
    %64 = arith.select %61, %62, %63 : vector<16x640xi1>, vector<16x640xf32>
    %65 = arith.truncf %64 : vector<16x640xf32> to vector<16x640xbf16>
    %c64 = arith.constant 64 : index
    %c0_36 = arith.constant 0 : index
    %66 = vector.load %arg9[%c64, %c0_36] : memref<128x640xbf16, #tpu.memory_space<vmem>>, vector<16x640xbf16>
    tpu.vector_store %arg9[%c64, %c0_36], %65 {strides = array<i32>} : memref<128x640xbf16, #tpu.memory_space<vmem>>, vector<16x640xbf16>,
    %cst_37 = arith.constant 0.000000e+00 : f32
    %67 = vector.broadcast %cst_37 : f32 to vector<16x640xf32>
    %68 = arith.select %61, %67, %59 : vector<16x640xi1>, vector<16x640xf32>
    %cst_38 = arith.constant 5.000000e-01 : f32
    %69 = vector.broadcast %cst_38 : f32 to vector<16x640xf32>
    %70 = arith.mulf %68, %69 : vector<16x640xf32>
    %71 = arith.addf %70, %7 : vector<16x640xf32>
    %cst_39 = arith.constant 1.000000e+00 : f32
    %72 = vector.broadcast %cst_39 : f32 to vector<16x640xf32>
    %73 = arith.cmpf oge, %71, %72 : vector<16x640xf32>
    %cst_40 = arith.constant 1.000000e+00 : f32
    %cst_41 = arith.constant 0.000000e+00 : f32
    %74 = vector.broadcast %cst_40 : f32 to vector<16x640xf32>
    %75 = vector.broadcast %cst_41 : f32 to vector<16x640xf32>
    %76 = arith.select %73, %74, %75 : vector<16x640xi1>, vector<16x640xf32>
    %77 = arith.truncf %76 : vector<16x640xf32> to vector<16x640xbf16>
    %c80 = arith.constant 80 : index
    %c0_42 = arith.constant 0 : index
    %78 = vector.load %arg9[%c80, %c0_42] : memref<128x640xbf16, #tpu.memory_space<vmem>>, vector<16x640xbf16>
    tpu.vector_store %arg9[%c80, %c0_42], %77 {strides = array<i32>} : memref<128x640xbf16, #tpu.memory_space<vmem>>, vector<16x640xbf16>,
    %cst_43 = arith.constant 0.000000e+00 : f32
    %79 = vector.broadcast %cst_43 : f32 to vector<16x640xf32>
    %80 = arith.select %73, %79, %71 : vector<16x640xi1>, vector<16x640xf32>
    %cst_44 = arith.constant 5.000000e-01 : f32
    %81 = vector.broadcast %cst_44 : f32 to vector<16x640xf32>
    %82 = arith.mulf %80, %81 : vector<16x640xf32>
    %83 = arith.addf %82, %7 : vector<16x640xf32>
    %cst_45 = arith.constant 1.000000e+00 : f32
    %84 = vector.broadcast %cst_45 : f32 to vector<16x640xf32>
    %85 = arith.cmpf oge, %83, %84 : vector<16x640xf32>
    %cst_46 = arith.constant 1.000000e+00 : f32
    %cst_47 = arith.constant 0.000000e+00 : f32
    %86 = vector.broadcast %cst_46 : f32 to vector<16x640xf32>
    %87 = vector.broadcast %cst_47 : f32 to vector<16x640xf32>
    %88 = arith.select %85, %86, %87 : vector<16x640xi1>, vector<16x640xf32>
    %89 = arith.truncf %88 : vector<16x640xf32> to vector<16x640xbf16>
    %c96 = arith.constant 96 : index
    %c0_48 = arith.constant 0 : index
    %90 = vector.load %arg9[%c96, %c0_48] : memref<128x640xbf16, #tpu.memory_space<vmem>>, vector<16x640xbf16>
    tpu.vector_store %arg9[%c96, %c0_48], %89 {strides = array<i32>} : memref<128x640xbf16, #tpu.memory_space<vmem>>, vector<16x640xbf16>,
    %cst_49 = arith.constant 0.000000e+00 : f32
    %91 = vector.broadcast %cst_49 : f32 to vector<16x640xf32>
    %92 = arith.select %85, %91, %83 : vector<16x640xi1>, vector<16x640xf32>
    %cst_50 = arith.constant 5.000000e-01 : f32
    %93 = vector.broadcast %cst_50 : f32 to vector<16x640xf32>
    %94 = arith.mulf %92, %93 : vector<16x640xf32>
    %95 = arith.addf %94, %7 : vector<16x640xf32>
    %cst_51 = arith.constant 1.000000e+00 : f32
    %96 = vector.broadcast %cst_51 : f32 to vector<16x640xf32>
    %97 = arith.cmpf oge, %95, %96 : vector<16x640xf32>
    %cst_52 = arith.constant 1.000000e+00 : f32
    %cst_53 = arith.constant 0.000000e+00 : f32
    %98 = vector.broadcast %cst_52 : f32 to vector<16x640xf32>
    %99 = vector.broadcast %cst_53 : f32 to vector<16x640xf32>
    %100 = arith.select %97, %98, %99 : vector<16x640xi1>, vector<16x640xf32>
    %101 = arith.truncf %100 : vector<16x640xf32> to vector<16x640xbf16>
    %c112 = arith.constant 112 : index
    %c0_54 = arith.constant 0 : index
    %102 = vector.load %arg9[%c112, %c0_54] : memref<128x640xbf16, #tpu.memory_space<vmem>>, vector<16x640xbf16>
    tpu.vector_store %arg9[%c112, %c0_54], %101 {strides = array<i32>} : memref<128x640xbf16, #tpu.memory_space<vmem>>, vector<16x640xbf16>,
    %c0_55 = arith.constant 0 : index
    %c0_56 = arith.constant 0 : index
    %103 = vector.load %arg9[%c0_55, %c0_56] : memref<128x640xbf16, #tpu.memory_space<vmem>>, vector<128x640xbf16>
    %c0_57 = arith.constant 0 : index
    %c0_58 = arith.constant 0 : index
    %104 = vector.load %arg4[%c0_57, %c0_58] : memref<640x128xbf16, #tpu.memory_space<vmem>>, vector<640x128xbf16>
    %cst_59 = arith.constant dense<0.000000e+00> : vector<128x128xf32>
    %105 = tpu.matmul %103, %104, %cst_59 {dimension_numbers = #tpu.dot_dimension_numbers<[1], [0], [0], [1], [0, 0, 1, 1], [], []>} : vector<128x640xbf16>, vector<640x128xbf16>, vector<128x128xf32> -> vector<128x128xf32>
    %c0_60 = arith.constant 0 : index
    %c0_61 = arith.constant 0 : index
    %106 = vector.load %arg5[%c0_60, %c0_61] : memref<1x128xf32, #tpu.memory_space<vmem>>, vector<1x128xf32>
    %107 = vector.broadcast %106 : vector<1x128xf32> to vector<128x128xf32>
    %108 = arith.addf %105, %107 : vector<128x128xf32>
    %cst_62 = arith.constant 5.000000e-01 : f32
    %109 = vector.broadcast %cst_62 : f32 to vector<128x128xf32>
    %110 = arith.mulf %108, %109 : vector<128x128xf32>
    %cst_63 = arith.constant 0.000000e+00 : f32
    %111 = vector.broadcast %cst_63 : f32 to vector<16x128xf32>
    %cst_64 = arith.constant 5.000000e-01 : f32
    %112 = vector.broadcast %cst_64 : f32 to vector<16x128xf32>
    %113 = arith.mulf %111, %112 : vector<16x128xf32>
    %114 = vector.extract_strided_slice %110 {offsets = [0, 0], sizes = [16, 128], strides = [1, 1]} : vector<128x128xf32> to vector<16x128xf32>
    %115 = arith.addf %113, %114 : vector<16x128xf32>
    %cst_65 = arith.constant 1.000000e+00 : f32
    %116 = vector.broadcast %cst_65 : f32 to vector<16x128xf32>
    %117 = arith.cmpf oge, %115, %116 : vector<16x128xf32>
    %cst_66 = arith.constant 1.000000e+00 : f32
    %cst_67 = arith.constant 0.000000e+00 : f32
    %118 = vector.broadcast %cst_66 : f32 to vector<16x128xf32>
    %119 = vector.broadcast %cst_67 : f32 to vector<16x128xf32>
    %120 = arith.select %117, %118, %119 : vector<16x128xi1>, vector<16x128xf32>
    %121 = arith.truncf %120 : vector<16x128xf32> to vector<16x128xbf16>
    %c0_68 = arith.constant 0 : index
    %c0_69 = arith.constant 0 : index
    %122 = vector.load %arg10[%c0_68, %c0_69] : memref<128x128xbf16, #tpu.memory_space<vmem>>, vector<16x128xbf16>
    tpu.vector_store %arg10[%c0_68, %c0_69], %121 {strides = array<i32>} : memref<128x128xbf16, #tpu.memory_space<vmem>>, vector<16x128xbf16>,
    %cst_70 = arith.constant 0.000000e+00 : f32
    %123 = vector.broadcast %cst_70 : f32 to vector<16x128xf32>
    %124 = arith.select %117, %123, %115 : vector<16x128xi1>, vector<16x128xf32>
    %cst_71 = arith.constant 5.000000e-01 : f32
    %125 = vector.broadcast %cst_71 : f32 to vector<16x128xf32>
    %126 = arith.mulf %124, %125 : vector<16x128xf32>
    %127 = vector.extract_strided_slice %110 {offsets = [16, 0], sizes = [16, 128], strides = [1, 1]} : vector<128x128xf32> to vector<16x128xf32>
    %128 = arith.addf %126, %127 : vector<16x128xf32>
    %cst_72 = arith.constant 1.000000e+00 : f32
    %129 = vector.broadcast %cst_72 : f32 to vector<16x128xf32>
    %130 = arith.cmpf oge, %128, %129 : vector<16x128xf32>
    %cst_73 = arith.constant 1.000000e+00 : f32
    %cst_74 = arith.constant 0.000000e+00 : f32
    %131 = vector.broadcast %cst_73 : f32 to vector<16x128xf32>
    %132 = vector.broadcast %cst_74 : f32 to vector<16x128xf32>
    %133 = arith.select %130, %131, %132 : vector<16x128xi1>, vector<16x128xf32>
    %134 = arith.truncf %133 : vector<16x128xf32> to vector<16x128xbf16>
    %c16_75 = arith.constant 16 : index
    %c0_76 = arith.constant 0 : index
    %135 = vector.load %arg10[%c16_75, %c0_76] : memref<128x128xbf16, #tpu.memory_space<vmem>>, vector<16x128xbf16>
    tpu.vector_store %arg10[%c16_75, %c0_76], %134 {strides = array<i32>} : memref<128x128xbf16, #tpu.memory_space<vmem>>, vector<16x128xbf16>,
    %cst_77 = arith.constant 0.000000e+00 : f32
    %136 = vector.broadcast %cst_77 : f32 to vector<16x128xf32>
    %137 = arith.select %130, %136, %128 : vector<16x128xi1>, vector<16x128xf32>
    %cst_78 = arith.constant 5.000000e-01 : f32
    %138 = vector.broadcast %cst_78 : f32 to vector<16x128xf32>
    %139 = arith.mulf %137, %138 : vector<16x128xf32>
    %140 = vector.extract_strided_slice %110 {offsets = [32, 0], sizes = [16, 128], strides = [1, 1]} : vector<128x128xf32> to vector<16x128xf32>
    %141 = arith.addf %139, %140 : vector<16x128xf32>
    %cst_79 = arith.constant 1.000000e+00 : f32
    %142 = vector.broadcast %cst_79 : f32 to vector<16x128xf32>
    %143 = arith.cmpf oge, %141, %142 : vector<16x128xf32>
    %cst_80 = arith.constant 1.000000e+00 : f32
    %cst_81 = arith.constant 0.000000e+00 : f32
    %144 = vector.broadcast %cst_80 : f32 to vector<16x128xf32>
    %145 = vector.broadcast %cst_81 : f32 to vector<16x128xf32>
    %146 = arith.select %143, %144, %145 : vector<16x128xi1>, vector<16x128xf32>
    %147 = arith.truncf %146 : vector<16x128xf32> to vector<16x128xbf16>
    %c32_82 = arith.constant 32 : index
    %c0_83 = arith.constant 0 : index
    %148 = vector.load %arg10[%c32_82, %c0_83] : memref<128x128xbf16, #tpu.memory_space<vmem>>, vector<16x128xbf16>
    tpu.vector_store %arg10[%c32_82, %c0_83], %147 {strides = array<i32>} : memref<128x128xbf16, #tpu.memory_space<vmem>>, vector<16x128xbf16>,
    %cst_84 = arith.constant 0.000000e+00 : f32
    %149 = vector.broadcast %cst_84 : f32 to vector<16x128xf32>
    %150 = arith.select %143, %149, %141 : vector<16x128xi1>, vector<16x128xf32>
    %cst_85 = arith.constant 5.000000e-01 : f32
    %151 = vector.broadcast %cst_85 : f32 to vector<16x128xf32>
    %152 = arith.mulf %150, %151 : vector<16x128xf32>
    %153 = vector.extract_strided_slice %110 {offsets = [48, 0], sizes = [16, 128], strides = [1, 1]} : vector<128x128xf32> to vector<16x128xf32>
    %154 = arith.addf %152, %153 : vector<16x128xf32>
    %cst_86 = arith.constant 1.000000e+00 : f32
    %155 = vector.broadcast %cst_86 : f32 to vector<16x128xf32>
    %156 = arith.cmpf oge, %154, %155 : vector<16x128xf32>
    %cst_87 = arith.constant 1.000000e+00 : f32
    %cst_88 = arith.constant 0.000000e+00 : f32
    %157 = vector.broadcast %cst_87 : f32 to vector<16x128xf32>
    %158 = vector.broadcast %cst_88 : f32 to vector<16x128xf32>
    %159 = arith.select %156, %157, %158 : vector<16x128xi1>, vector<16x128xf32>
    %160 = arith.truncf %159 : vector<16x128xf32> to vector<16x128xbf16>
    %c48_89 = arith.constant 48 : index
    %c0_90 = arith.constant 0 : index
    %161 = vector.load %arg10[%c48_89, %c0_90] : memref<128x128xbf16, #tpu.memory_space<vmem>>, vector<16x128xbf16>
    tpu.vector_store %arg10[%c48_89, %c0_90], %160 {strides = array<i32>} : memref<128x128xbf16, #tpu.memory_space<vmem>>, vector<16x128xbf16>,
    %cst_91 = arith.constant 0.000000e+00 : f32
    %162 = vector.broadcast %cst_91 : f32 to vector<16x128xf32>
    %163 = arith.select %156, %162, %154 : vector<16x128xi1>, vector<16x128xf32>
    %cst_92 = arith.constant 5.000000e-01 : f32
    %164 = vector.broadcast %cst_92 : f32 to vector<16x128xf32>
    %165 = arith.mulf %163, %164 : vector<16x128xf32>
    %166 = vector.extract_strided_slice %110 {offsets = [64, 0], sizes = [16, 128], strides = [1, 1]} : vector<128x128xf32> to vector<16x128xf32>
    %167 = arith.addf %165, %166 : vector<16x128xf32>
    %cst_93 = arith.constant 1.000000e+00 : f32
    %168 = vector.broadcast %cst_93 : f32 to vector<16x128xf32>
    %169 = arith.cmpf oge, %167, %168 : vector<16x128xf32>
    %cst_94 = arith.constant 1.000000e+00 : f32
    %cst_95 = arith.constant 0.000000e+00 : f32
    %170 = vector.broadcast %cst_94 : f32 to vector<16x128xf32>
    %171 = vector.broadcast %cst_95 : f32 to vector<16x128xf32>
    %172 = arith.select %169, %170, %171 : vector<16x128xi1>, vector<16x128xf32>
    %173 = arith.truncf %172 : vector<16x128xf32> to vector<16x128xbf16>
    %c64_96 = arith.constant 64 : index
    %c0_97 = arith.constant 0 : index
    %174 = vector.load %arg10[%c64_96, %c0_97] : memref<128x128xbf16, #tpu.memory_space<vmem>>, vector<16x128xbf16>
    tpu.vector_store %arg10[%c64_96, %c0_97], %173 {strides = array<i32>} : memref<128x128xbf16, #tpu.memory_space<vmem>>, vector<16x128xbf16>,
    %cst_98 = arith.constant 0.000000e+00 : f32
    %175 = vector.broadcast %cst_98 : f32 to vector<16x128xf32>
    %176 = arith.select %169, %175, %167 : vector<16x128xi1>, vector<16x128xf32>
    %cst_99 = arith.constant 5.000000e-01 : f32
    %177 = vector.broadcast %cst_99 : f32 to vector<16x128xf32>
    %178 = arith.mulf %176, %177 : vector<16x128xf32>
    %179 = vector.extract_strided_slice %110 {offsets = [80, 0], sizes = [16, 128], strides = [1, 1]} : vector<128x128xf32> to vector<16x128xf32>
    %180 = arith.addf %178, %179 : vector<16x128xf32>
    %cst_100 = arith.constant 1.000000e+00 : f32
    %181 = vector.broadcast %cst_100 : f32 to vector<16x128xf32>
    %182 = arith.cmpf oge, %180, %181 : vector<16x128xf32>
    %cst_101 = arith.constant 1.000000e+00 : f32
    %cst_102 = arith.constant 0.000000e+00 : f32
    %183 = vector.broadcast %cst_101 : f32 to vector<16x128xf32>
    %184 = vector.broadcast %cst_102 : f32 to vector<16x128xf32>
    %185 = arith.select %182, %183, %184 : vector<16x128xi1>, vector<16x128xf32>
    %186 = arith.truncf %185 : vector<16x128xf32> to vector<16x128xbf16>
    %c80_103 = arith.constant 80 : index
    %c0_104 = arith.constant 0 : index
    %187 = vector.load %arg10[%c80_103, %c0_104] : memref<128x128xbf16, #tpu.memory_space<vmem>>, vector<16x128xbf16>
    tpu.vector_store %arg10[%c80_103, %c0_104], %186 {strides = array<i32>} : memref<128x128xbf16, #tpu.memory_space<vmem>>, vector<16x128xbf16>,
    %cst_105 = arith.constant 0.000000e+00 : f32
    %188 = vector.broadcast %cst_105 : f32 to vector<16x128xf32>
    %189 = arith.select %182, %188, %180 : vector<16x128xi1>, vector<16x128xf32>
    %cst_106 = arith.constant 5.000000e-01 : f32
    %190 = vector.broadcast %cst_106 : f32 to vector<16x128xf32>
    %191 = arith.mulf %189, %190 : vector<16x128xf32>
    %192 = vector.extract_strided_slice %110 {offsets = [96, 0], sizes = [16, 128], strides = [1, 1]} : vector<128x128xf32> to vector<16x128xf32>
    %193 = arith.addf %191, %192 : vector<16x128xf32>
    %cst_107 = arith.constant 1.000000e+00 : f32
    %194 = vector.broadcast %cst_107 : f32 to vector<16x128xf32>
    %195 = arith.cmpf oge, %193, %194 : vector<16x128xf32>
    %cst_108 = arith.constant 1.000000e+00 : f32
    %cst_109 = arith.constant 0.000000e+00 : f32
    %196 = vector.broadcast %cst_108 : f32 to vector<16x128xf32>
    %197 = vector.broadcast %cst_109 : f32 to vector<16x128xf32>
    %198 = arith.select %195, %196, %197 : vector<16x128xi1>, vector<16x128xf32>
    %199 = arith.truncf %198 : vector<16x128xf32> to vector<16x128xbf16>
    %c96_110 = arith.constant 96 : index
    %c0_111 = arith.constant 0 : index
    %200 = vector.load %arg10[%c96_110, %c0_111] : memref<128x128xbf16, #tpu.memory_space<vmem>>, vector<16x128xbf16>
    tpu.vector_store %arg10[%c96_110, %c0_111], %199 {strides = array<i32>} : memref<128x128xbf16, #tpu.memory_space<vmem>>, vector<16x128xbf16>,
    %cst_112 = arith.constant 0.000000e+00 : f32
    %201 = vector.broadcast %cst_112 : f32 to vector<16x128xf32>
    %202 = arith.select %195, %201, %193 : vector<16x128xi1>, vector<16x128xf32>
    %cst_113 = arith.constant 5.000000e-01 : f32
    %203 = vector.broadcast %cst_113 : f32 to vector<16x128xf32>
    %204 = arith.mulf %202, %203 : vector<16x128xf32>
    %205 = vector.extract_strided_slice %110 {offsets = [112, 0], sizes = [16, 128], strides = [1, 1]} : vector<128x128xf32> to vector<16x128xf32>
    %206 = arith.addf %204, %205 : vector<16x128xf32>
    %cst_114 = arith.constant 1.000000e+00 : f32
    %207 = vector.broadcast %cst_114 : f32 to vector<16x128xf32>
    %208 = arith.cmpf oge, %206, %207 : vector<16x128xf32>
    %cst_115 = arith.constant 1.000000e+00 : f32
    %cst_116 = arith.constant 0.000000e+00 : f32
    %209 = vector.broadcast %cst_115 : f32 to vector<16x128xf32>
    %210 = vector.broadcast %cst_116 : f32 to vector<16x128xf32>
    %211 = arith.select %208, %209, %210 : vector<16x128xi1>, vector<16x128xf32>
    %212 = arith.truncf %211 : vector<16x128xf32> to vector<16x128xbf16>
    %c112_117 = arith.constant 112 : index
    %c0_118 = arith.constant 0 : index
    %213 = vector.load %arg10[%c112_117, %c0_118] : memref<128x128xbf16, #tpu.memory_space<vmem>>, vector<16x128xbf16>
    tpu.vector_store %arg10[%c112_117, %c0_118], %212 {strides = array<i32>} : memref<128x128xbf16, #tpu.memory_space<vmem>>, vector<16x128xbf16>,
    %c0_119 = arith.constant 0 : index
    %c0_120 = arith.constant 0 : index
    %214 = vector.load %arg10[%c0_119, %c0_120] : memref<128x128xbf16, #tpu.memory_space<vmem>>, vector<128x128xbf16>
    %c0_121 = arith.constant 0 : index
    %c0_122 = arith.constant 0 : index
    %215 = vector.load %arg6[%c0_121, %c0_122] : memref<128x128xbf16, #tpu.memory_space<vmem>>, vector<128x128xbf16>
    %cst_123 = arith.constant dense<0.000000e+00> : vector<128x128xf32>
    %216 = tpu.matmul %214, %215, %cst_123 {dimension_numbers = #tpu.dot_dimension_numbers<[1], [0], [0], [1], [0, 0, 1, 1], [], []>} : vector<128x128xbf16>, vector<128x128xbf16>, vector<128x128xf32> -> vector<128x128xf32>
    %c0_124 = arith.constant 0 : index
    %c0_125 = arith.constant 0 : index
    %217 = vector.load %arg7[%c0_124, %c0_125] : memref<1x128xf32, #tpu.memory_space<vmem>>, vector<1x128xf32>
    %218 = vector.broadcast %217 : vector<1x128xf32> to vector<128x128xf32>
    %219 = arith.addf %216, %218 : vector<128x128xf32>
    %cst_126 = arith.constant 5.000000e-01 : f32
    %220 = vector.broadcast %cst_126 : f32 to vector<128x128xf32>
    %221 = arith.mulf %219, %220 : vector<128x128xf32>
    %cst_127 = arith.constant 0.000000e+00 : f32
    %222 = vector.broadcast %cst_127 : f32 to vector<16x128xf32>
    %cst_128 = arith.constant 0.000000e+00 : f32
    %223 = vector.broadcast %cst_128 : f32 to vector<16x128xf32>
    %cst_129 = arith.constant 5.000000e-01 : f32
    %224 = vector.broadcast %cst_129 : f32 to vector<16x128xf32>
    %225 = arith.mulf %222, %224 : vector<16x128xf32>
    %226 = vector.extract_strided_slice %221 {offsets = [0, 0], sizes = [16, 128], strides = [1, 1]} : vector<128x128xf32> to vector<16x128xf32>
    %227 = arith.addf %225, %226 : vector<16x128xf32>
    %cst_130 = arith.constant 1.000000e+00 : f32
    %228 = vector.broadcast %cst_130 : f32 to vector<16x128xf32>
    %229 = arith.cmpf oge, %227, %228 : vector<16x128xf32>
    %cst_131 = arith.constant 1.000000e+00 : f32
    %cst_132 = arith.constant 0.000000e+00 : f32
    %230 = vector.broadcast %cst_131 : f32 to vector<16x128xf32>
    %231 = vector.broadcast %cst_132 : f32 to vector<16x128xf32>
    %232 = arith.select %229, %230, %231 : vector<16x128xi1>, vector<16x128xf32>
    %233 = arith.addf %223, %232 : vector<16x128xf32>
    %cst_133 = arith.constant 0.000000e+00 : f32
    %234 = vector.broadcast %cst_133 : f32 to vector<16x128xf32>
    %235 = arith.select %229, %234, %227 : vector<16x128xi1>, vector<16x128xf32>
    %cst_134 = arith.constant 5.000000e-01 : f32
    %236 = vector.broadcast %cst_134 : f32 to vector<16x128xf32>
    %237 = arith.mulf %235, %236 : vector<16x128xf32>
    %238 = vector.extract_strided_slice %221 {offsets = [16, 0], sizes = [16, 128], strides = [1, 1]} : vector<128x128xf32> to vector<16x128xf32>
    %239 = arith.addf %237, %238 : vector<16x128xf32>
    %cst_135 = arith.constant 1.000000e+00 : f32
    %240 = vector.broadcast %cst_135 : f32 to vector<16x128xf32>
    %241 = arith.cmpf oge, %239, %240 : vector<16x128xf32>
    %cst_136 = arith.constant 1.000000e+00 : f32
    %cst_137 = arith.constant 0.000000e+00 : f32
    %242 = vector.broadcast %cst_136 : f32 to vector<16x128xf32>
    %243 = vector.broadcast %cst_137 : f32 to vector<16x128xf32>
    %244 = arith.select %241, %242, %243 : vector<16x128xi1>, vector<16x128xf32>
    %245 = arith.addf %233, %244 : vector<16x128xf32>
    %cst_138 = arith.constant 0.000000e+00 : f32
    %246 = vector.broadcast %cst_138 : f32 to vector<16x128xf32>
    %247 = arith.select %241, %246, %239 : vector<16x128xi1>, vector<16x128xf32>
    %cst_139 = arith.constant 5.000000e-01 : f32
    %248 = vector.broadcast %cst_139 : f32 to vector<16x128xf32>
    %249 = arith.mulf %247, %248 : vector<16x128xf32>
    %250 = vector.extract_strided_slice %221 {offsets = [32, 0], sizes = [16, 128], strides = [1, 1]} : vector<128x128xf32> to vector<16x128xf32>
    %251 = arith.addf %249, %250 : vector<16x128xf32>
    %cst_140 = arith.constant 1.000000e+00 : f32
    %252 = vector.broadcast %cst_140 : f32 to vector<16x128xf32>
    %253 = arith.cmpf oge, %251, %252 : vector<16x128xf32>
    %cst_141 = arith.constant 1.000000e+00 : f32
    %cst_142 = arith.constant 0.000000e+00 : f32
    %254 = vector.broadcast %cst_141 : f32 to vector<16x128xf32>
    %255 = vector.broadcast %cst_142 : f32 to vector<16x128xf32>
    %256 = arith.select %253, %254, %255 : vector<16x128xi1>, vector<16x128xf32>
    %257 = arith.addf %245, %256 : vector<16x128xf32>
    %cst_143 = arith.constant 0.000000e+00 : f32
    %258 = vector.broadcast %cst_143 : f32 to vector<16x128xf32>
    %259 = arith.select %253, %258, %251 : vector<16x128xi1>, vector<16x128xf32>
    %cst_144 = arith.constant 5.000000e-01 : f32
    %260 = vector.broadcast %cst_144 : f32 to vector<16x128xf32>
    %261 = arith.mulf %259, %260 : vector<16x128xf32>
    %262 = vector.extract_strided_slice %221 {offsets = [48, 0], sizes = [16, 128], strides = [1, 1]} : vector<128x128xf32> to vector<16x128xf32>
    %263 = arith.addf %261, %262 : vector<16x128xf32>
    %cst_145 = arith.constant 1.000000e+00 : f32
    %264 = vector.broadcast %cst_145 : f32 to vector<16x128xf32>
    %265 = arith.cmpf oge, %263, %264 : vector<16x128xf32>
    %cst_146 = arith.constant 1.000000e+00 : f32
    %cst_147 = arith.constant 0.000000e+00 : f32
    %266 = vector.broadcast %cst_146 : f32 to vector<16x128xf32>
    %267 = vector.broadcast %cst_147 : f32 to vector<16x128xf32>
    %268 = arith.select %265, %266, %267 : vector<16x128xi1>, vector<16x128xf32>
    %269 = arith.addf %257, %268 : vector<16x128xf32>
    %cst_148 = arith.constant 0.000000e+00 : f32
    %270 = vector.broadcast %cst_148 : f32 to vector<16x128xf32>
    %271 = arith.select %265, %270, %263 : vector<16x128xi1>, vector<16x128xf32>
    %cst_149 = arith.constant 5.000000e-01 : f32
    %272 = vector.broadcast %cst_149 : f32 to vector<16x128xf32>
    %273 = arith.mulf %271, %272 : vector<16x128xf32>
    %274 = vector.extract_strided_slice %221 {offsets = [64, 0], sizes = [16, 128], strides = [1, 1]} : vector<128x128xf32> to vector<16x128xf32>
    %275 = arith.addf %273, %274 : vector<16x128xf32>
    %cst_150 = arith.constant 1.000000e+00 : f32
    %276 = vector.broadcast %cst_150 : f32 to vector<16x128xf32>
    %277 = arith.cmpf oge, %275, %276 : vector<16x128xf32>
    %cst_151 = arith.constant 1.000000e+00 : f32
    %cst_152 = arith.constant 0.000000e+00 : f32
    %278 = vector.broadcast %cst_151 : f32 to vector<16x128xf32>
    %279 = vector.broadcast %cst_152 : f32 to vector<16x128xf32>
    %280 = arith.select %277, %278, %279 : vector<16x128xi1>, vector<16x128xf32>
    %281 = arith.addf %269, %280 : vector<16x128xf32>
    %cst_153 = arith.constant 0.000000e+00 : f32
    %282 = vector.broadcast %cst_153 : f32 to vector<16x128xf32>
    %283 = arith.select %277, %282, %275 : vector<16x128xi1>, vector<16x128xf32>
    %cst_154 = arith.constant 5.000000e-01 : f32
    %284 = vector.broadcast %cst_154 : f32 to vector<16x128xf32>
    %285 = arith.mulf %283, %284 : vector<16x128xf32>
    %286 = vector.extract_strided_slice %221 {offsets = [80, 0], sizes = [16, 128], strides = [1, 1]} : vector<128x128xf32> to vector<16x128xf32>
    %287 = arith.addf %285, %286 : vector<16x128xf32>
    %cst_155 = arith.constant 1.000000e+00 : f32
    %288 = vector.broadcast %cst_155 : f32 to vector<16x128xf32>
    %289 = arith.cmpf oge, %287, %288 : vector<16x128xf32>
    %cst_156 = arith.constant 1.000000e+00 : f32
    %cst_157 = arith.constant 0.000000e+00 : f32
    %290 = vector.broadcast %cst_156 : f32 to vector<16x128xf32>
    %291 = vector.broadcast %cst_157 : f32 to vector<16x128xf32>
    %292 = arith.select %289, %290, %291 : vector<16x128xi1>, vector<16x128xf32>
    %293 = arith.addf %281, %292 : vector<16x128xf32>
    %cst_158 = arith.constant 0.000000e+00 : f32
    %294 = vector.broadcast %cst_158 : f32 to vector<16x128xf32>
    %295 = arith.select %289, %294, %287 : vector<16x128xi1>, vector<16x128xf32>
    %cst_159 = arith.constant 5.000000e-01 : f32
    %296 = vector.broadcast %cst_159 : f32 to vector<16x128xf32>
    %297 = arith.mulf %295, %296 : vector<16x128xf32>
    %298 = vector.extract_strided_slice %221 {offsets = [96, 0], sizes = [16, 128], strides = [1, 1]} : vector<128x128xf32> to vector<16x128xf32>
    %299 = arith.addf %297, %298 : vector<16x128xf32>
    %cst_160 = arith.constant 1.000000e+00 : f32
    %300 = vector.broadcast %cst_160 : f32 to vector<16x128xf32>
    %301 = arith.cmpf oge, %299, %300 : vector<16x128xf32>
    %cst_161 = arith.constant 1.000000e+00 : f32
    %cst_162 = arith.constant 0.000000e+00 : f32
    %302 = vector.broadcast %cst_161 : f32 to vector<16x128xf32>
    %303 = vector.broadcast %cst_162 : f32 to vector<16x128xf32>
    %304 = arith.select %301, %302, %303 : vector<16x128xi1>, vector<16x128xf32>
    %305 = arith.addf %293, %304 : vector<16x128xf32>
    %cst_163 = arith.constant 0.000000e+00 : f32
    %306 = vector.broadcast %cst_163 : f32 to vector<16x128xf32>
    %307 = arith.select %301, %306, %299 : vector<16x128xi1>, vector<16x128xf32>
    %cst_164 = arith.constant 5.000000e-01 : f32
    %308 = vector.broadcast %cst_164 : f32 to vector<16x128xf32>
    %309 = arith.mulf %307, %308 : vector<16x128xf32>
    %310 = vector.extract_strided_slice %221 {offsets = [112, 0], sizes = [16, 128], strides = [1, 1]} : vector<128x128xf32> to vector<16x128xf32>
    %311 = arith.addf %309, %310 : vector<16x128xf32>
    %cst_165 = arith.constant 1.000000e+00 : f32
    %312 = vector.broadcast %cst_165 : f32 to vector<16x128xf32>
    %313 = arith.cmpf oge, %311, %312 : vector<16x128xf32>
    %cst_166 = arith.constant 1.000000e+00 : f32
    %cst_167 = arith.constant 0.000000e+00 : f32
    %314 = vector.broadcast %cst_166 : f32 to vector<16x128xf32>
    %315 = vector.broadcast %cst_167 : f32 to vector<16x128xf32>
    %316 = arith.select %313, %314, %315 : vector<16x128xi1>, vector<16x128xf32>
    %317 = arith.addf %305, %316 : vector<16x128xf32>
    %cst_168 = arith.constant 1.250000e-01 : f32
    %318 = vector.broadcast %cst_168 : f32 to vector<16x128xf32>
    %319 = arith.mulf %317, %318 : vector<16x128xf32>
    %c0_169 = arith.constant 0 : index
    %c0_170 = arith.constant 0 : index
    %320 = vector.load %arg8[%c0_169, %c0_170] : memref<16x128xf32, #tpu.memory_space<vmem>>, vector<16x128xf32>
    tpu.vector_store %arg8[%c0_169, %c0_170], %319 {strides = array<i32>} : memref<16x128xf32, #tpu.memory_space<vmem>>, vector<16x128xf32>,
    return
  }
  func.func @transform_0(%arg0: i32) -> (i32, i32) {
    %c0_i32 = arith.constant 0 : i32
    %c0_i32_0 = arith.constant 0 : i32
    return %arg0, %c0_i32 : i32, i32
  }
  func.func @transform_1(%arg0: i32) -> (i32, i32) {
    %c0_i32 = arith.constant 0 : i32
    %c0_i32_0 = arith.constant 0 : i32
    %c0_i32_1 = arith.constant 0 : i32
    return %c0_i32, %c0_i32_0 : i32, i32
  }
  func.func @transform_2(%arg0: i32) -> (i32, i32) {
    %c0_i32 = arith.constant 0 : i32
    %c0_i32_0 = arith.constant 0 : i32
    %c0_i32_1 = arith.constant 0 : i32
    return %c0_i32, %c0_i32_0 : i32, i32
  }
  func.func @transform_3(%arg0: i32) -> (i32, i32) {
    %c0_i32 = arith.constant 0 : i32
    %c0_i32_0 = arith.constant 0 : i32
    %c0_i32_1 = arith.constant 0 : i32
    return %c0_i32, %c0_i32_0 : i32, i32
  }
  func.func @transform_4(%arg0: i32) -> (i32, i32) {
    %c0_i32 = arith.constant 0 : i32
    %c0_i32_0 = arith.constant 0 : i32
    %c0_i32_1 = arith.constant 0 : i32
    return %c0_i32, %c0_i32_0 : i32, i32
  }
  func.func @transform_5(%arg0: i32) -> (i32, i32) {
    %c0_i32 = arith.constant 0 : i32
    %c0_i32_0 = arith.constant 0 : i32
    %c0_i32_1 = arith.constant 0 : i32
    return %c0_i32, %c0_i32_0 : i32, i32
  }
  func.func @transform_6(%arg0: i32) -> (i32, i32) {
    %c0_i32 = arith.constant 0 : i32
    %c0_i32_0 = arith.constant 0 : i32
    %c0_i32_1 = arith.constant 0 : i32
    return %c0_i32, %c0_i32_0 : i32, i32
  }
  func.func @transform_7(%arg0: i32) -> (i32, i32) {
    %c0_i32 = arith.constant 0 : i32
    %c0_i32_0 = arith.constant 0 : i32
    return %arg0, %c0_i32 : i32, i32
  }
}

</mosaic_0001>

<llo_original>
// kernel: sddtp_csnn_forward.1
$region0: #{sddtp_csnn_forward.1}
  #allocation0 [shape = 'u32[]', space=smem, size = 0x4, offset = 0x4, fixed_abs, tag = 'smem constant byte address 0x4 - core index']
  #allocation1 [shape = 'u32[144,128]{1,0:T(1,128)}', space=vmem, size = 0x12000, scoped, tag = 'internal scratch']
  #allocation2 [shape = 'bf16[128,640]{1,0:T(16,128)(2,1)}', space=vmem, size = 0x28000, scoped, tag = 'scratch operand']
  #allocation3 [shape = 'bf16[128,128]{1,0:T(16,128)(2,1)}', space=vmem, size = 0x8000, scoped, tag = 'scratch operand']
  %s0 = inlined_call_operand.vmem [shape: bf16[16,896], index: 0, kind: input, shape index: {}]
  %s1 = inlined_call_operand.hbm [shape: bf16[896,640], index: 1, kind: input, shape index: {}]
  %s2 = inlined_call_operand.hbm [shape: f32[1,640], index: 2, kind: input, shape index: {}]
  %s3 = inlined_call_operand.hbm [shape: bf16[640,128], index: 3, kind: input, shape index: {}]
  %s4 = inlined_call_operand.hbm [shape: f32[1,128], index: 4, kind: input, shape index: {}]
  %s5 = inlined_call_operand.hbm [shape: bf16[128,128], index: 5, kind: input, shape index: {}]
  %s6 = inlined_call_operand.hbm [shape: f32[1,128], index: 6, kind: input, shape index: {}]
  %s7 = inlined_call_operand.vmem [shape: f32[16,128], index: 7, kind: output, shape index: {}]
  %s8 = sld [smem:[#allocation0]]
  $region62: #{sddtp_csnn_forward.1} parent=0
    _
  %s10 = ssub.s32 1, %s8
  %s11 = scalar_select 0, %s10, %s8
  $region1: #{sddtp_csnn_forward.1} parent=0
    #allocation4 [shape = 'u8[1146880]{0}', space=vmem, size = 0x118000, scoped, tag = 'input window, operand 1, single buffered']
    #allocation5 [shape = 's32[1]{0}', space=sflag, size = 0x4, scoped, tag = 'scoped memory for sddtp_csnn_forward.1']
    #allocation6 [shape = 'u8[2560]{0}', space=vmem, size = 0xc00, scoped, tag = 'input window, operand 2, single buffered']
    #allocation7 [shape = 's32[1]{0}', space=sflag, size = 0x4, scoped, tag = 'scoped memory for sddtp_csnn_forward.1']
    #allocation8 [shape = 'u8[163840]{0}', space=vmem, size = 0x28000, scoped, tag = 'input window, operand 3, single buffered']
    #allocation9 [shape = 'u8[512]{0}', space=vmem, size = 0x400, scoped, tag = 'input window, operand 4, single buffered']
    #allocation10 [shape = 's32[1]{0}', space=sflag, size = 0x4, scoped, tag = 'scoped memory for sddtp_csnn_forward.1']
    #allocation11 [shape = 'u8[32768]{0}', space=vmem, size = 0x8000, scoped, tag = 'input window, operand 5, single buffered']
    #allocation12 [shape = 'u8[512]{0}', space=vmem, size = 0x400, scoped, tag = 'input window, operand 6, single buffered']
    #allocation13 [shape = 's32[1]{0}', space=sflag, size = 0x4, scoped, tag = 'scoped memory for sddtp_csnn_forward.1']
    %12 = vsyncpa [#allocation5], 0
    %13 = vsyncpa [#allocation7], 0
    %14 = vsyncpa [#allocation10], 0
    %15 = vsyncpa [#allocation13], 0
    // Predicated region
    $region2: #{sddtp_csnn_forward.1} parent=1 // pred_check
      _
    $region3: #{sddtp_csnn_forward.1} parent=1 // pred_check_branch
      %17 = sbr.rel (0) target = $region5
    $region4: #{sddtp_csnn_forward.1} parent=1 // pred_region
      _
    $region5: #{sddtp_csnn_forward.1} parent=1 // pred_fallthru
      _
    // Predicated region
    $region6: #{sddtp_csnn_forward.1} parent=1 // pred_check
      _
    $region7: #{sddtp_csnn_forward.1} parent=1 // pred_check_branch
      %19 = sbr.rel (0) target = $region9
    $region8: #{sddtp_csnn_forward.1} parent=1 // pred_region
      %s21 = ssub.s32 35840, 35840
      %22 = vsyncadd [#allocation5], %s21
      %s23 = sshll.u32 [#allocation4], 4
      %s24 = int_to_ptr.vmem [resolvable:$true] %s23
      %29 = dma.hbm_to_vmem [thread:$0]  %s1, 35840, %s24, [#allocation5], 320, 320, 20
    $region9: #{sddtp_csnn_forward.1} parent=1 // pred_fallthru
      _
    // Predicated region
    $region10: #{sddtp_csnn_forward.1} parent=1 // pred_check
      _
    $region11: #{sddtp_csnn_forward.1} parent=1 // pred_check_branch
      %31 = sbr.rel (0) target = $region13
    $region12: #{sddtp_csnn_forward.1} parent=1 // pred_region
      %s33 = ssub.s32 80, 80
      %34 = vsyncadd [#allocation7], %s33
      %s36 = sshll.u32 [#allocation6], 4
      %s37 = int_to_ptr.vmem [resolvable:$true] %s36
      %39 = dma.hbm_to_vmem [thread:$0]  %s2, 80, %s37, [#allocation7]
    $region13: #{sddtp_csnn_forward.1} parent=1 // pred_fallthru
      _
    // Predicated region
    $region14: #{sddtp_csnn_forward.1} parent=1 // pred_check
      _
    $region15: #{sddtp_csnn_forward.1} parent=1 // pred_check_branch
      %41 = sbr.rel (0) target = $region17
    $region16: #{sddtp_csnn_forward.1} parent=1 // pred_region
      %s43 = ssub.s32 5120, 5120
      %44 = vsyncadd [#allocation7], %s43
      %s45 = sshll.u32 [#allocation8], 4
      %s46 = int_to_ptr.vmem [resolvable:$true] %s45
      %51 = dma.hbm_to_vmem [thread:$0]  %s3, 5120, %s46, [#allocation7], 64, 64, 4
    $region17: #{sddtp_csnn_forward.1} parent=1 // pred_fallthru
      _
    // Predicated region
    $region18: #{sddtp_csnn_forward.1} parent=1 // pred_check
      _
    $region19: #{sddtp_csnn_forward.1} parent=1 // pred_check_branch
      %53 = sbr.rel (0) target = $region21
    $region20: #{sddtp_csnn_forward.1} parent=1 // pred_region
      %s55 = ssub.s32 16, 16
      %56 = vsyncadd [#allocation10], %s55
      %s58 = sshll.u32 [#allocation9], 4
      %s59 = int_to_ptr.vmem [resolvable:$true] %s58
      %61 = dma.hbm_to_vmem [thread:$0]  %s4, 16, %s59, [#allocation10]
    $region21: #{sddtp_csnn_forward.1} parent=1 // pred_fallthru
      _
    // Predicated region
    $region22: #{sddtp_csnn_forward.1} parent=1 // pred_check
      _
    $region23: #{sddtp_csnn_forward.1} parent=1 // pred_check_branch
      %63 = sbr.rel (0) target = $region25
    $region24: #{sddtp_csnn_forward.1} parent=1 // pred_region
      %s65 = ssub.s32 1024, 1024
      %66 = vsyncadd [#allocation10], %s65
      %s67 = sshll.u32 [#allocation11], 4
      %s68 = int_to_ptr.vmem [resolvable:$true] %s67
      %73 = dma.hbm_to_vmem [thread:$0]  %s5, 1024, %s68, [#allocation10], 64, 64, 4
    $region25: #{sddtp_csnn_forward.1} parent=1 // pred_fallthru
      _
    // Predicated region
    $region26: #{sddtp_csnn_forward.1} parent=1 // pred_check
      _
    $region27: #{sddtp_csnn_forward.1} parent=1 // pred_check_branch
      %75 = sbr.rel (0) target = $region29
    $region28: #{sddtp_csnn_forward.1} parent=1 // pred_region
      %s77 = ssub.s32 16, 16
      %78 = vsyncadd [#allocation13], %s77
      %s80 = sshll.u32 [#allocation12], 4
      %s81 = int_to_ptr.vmem [resolvable:$true] %s80
      %83 = dma.hbm_to_vmem [thread:$0]  %s6, 16, %s81, [#allocation13]
    $region29: #{sddtp_csnn_forward.1} parent=1 // pred_fallthru
      _
    // Predicated region
    $region30: #{sddtp_csnn_forward.1} parent=1 // pred_check
      _
    $region31: #{sddtp_csnn_forward.1} parent=1 // pred_check_branch
      %85 = sbr.rel (0) target = $region33
    $region32: #{sddtp_csnn_forward.1} parent=1 // pred_region
      %86 = dma.done [#allocation5], 35840
    $region33: #{sddtp_csnn_forward.1} parent=1 // pred_fallthru
      _
    // Predicated region
    $region34: #{sddtp_csnn_forward.1} parent=1 // pred_check
      _
    $region35: #{sddtp_csnn_forward.1} parent=1 // pred_check_branch
      %88 = sbr.rel (0) target = $region37
    $region36: #{sddtp_csnn_forward.1} parent=1 // pred_region
      %89 = dma.done [#allocation7], 80
    $region37: #{sddtp_csnn_forward.1} parent=1 // pred_fallthru
      _
    // Predicated region
    $region38: #{sddtp_csnn_forward.1} parent=1 // pred_check
      _
    $region39: #{sddtp_csnn_forward.1} parent=1 // pred_check_branch
      %91 = sbr.rel (0) target = $region41
    $region40: #{sddtp_csnn_forward.1} parent=1 // pred_region
      %92 = dma.done [#allocation7], 5120
    $region41: #{sddtp_csnn_forward.1} parent=1 // pred_fallthru
      _
    // Predicated region
    $region42: #{sddtp_csnn_forward.1} parent=1 // pred_check
      _
    $region43: #{sddtp_csnn_forward.1} parent=1 // pred_check_branch
      %94 = sbr.rel (0) target = $region45
    $region44: #{sddtp_csnn_forward.1} parent=1 // pred_region
      %95 = dma.done [#allocation10], 16
    $region45: #{sddtp_csnn_forward.1} parent=1 // pred_fallthru
      _
    // Predicated region
    $region46: #{sddtp_csnn_forward.1} parent=1 // pred_check
      _
    $region47: #{sddtp_csnn_forward.1} parent=1 // pred_check_branch
      %97 = sbr.rel (0) target = $region49
    $region48: #{sddtp_csnn_forward.1} parent=1 // pred_region
      %98 = dma.done [#allocation10], 1024
    $region49: #{sddtp_csnn_forward.1} parent=1 // pred_fallthru
      _
    // Predicated region
    $region50: #{sddtp_csnn_forward.1} parent=1 // pred_check
      _
    $region51: #{sddtp_csnn_forward.1} parent=1 // pred_check_branch
      %100 = sbr.rel (0) target = $region53
    $region52: #{sddtp_csnn_forward.1} parent=1 // pred_region
      %101 = dma.done [#allocation13], 16
    $region53: #{sddtp_csnn_forward.1} parent=1 // pred_fallthru
      _
    %v103 = vld [vmem:[%s0] sm:$0xff]
    %v104 = vld [vmem:[%s0 + $0x8] sm:$0xff]
    %v105 = vld [vmem:[%s0 + $0x10] sm:$0xff]
    %v106 = vld [vmem:[%s0 + $0x18] sm:$0xf]
    %v107 = vld [vmem:[%s0 + $0x1c] sm:$0xff]
    %v108 = vld [vmem:[%s0 + $0x24] sm:$0xff]
    %v109 = vld [vmem:[%s0 + $0x2c] sm:$0xff]
    %v110 = vld [vmem:[%s0 + $0x34] sm:$0xf]
    %v111 = vld [vmem:[#allocation4] sm:$0xff]
    %v112 = vld [vmem:[#allocation4 + $0x8] sm:$0xff]
    %v113 = vld [vmem:[#allocation4 + $0x10] sm:$0xf]
    %v114 = vld [vmem:[#allocation4 + $0x14] sm:$0xff]
    %v115 = vld [vmem:[#allocation4 + $0x1c] sm:$0xff]
    %v116 = vld [vmem:[#allocation4 + $0x24] sm:$0xf]
    %v117 = vld [vmem:[#allocation4 + $0x28] sm:$0xff]
    %v118 = vld [vmem:[#allocation4 + $0x30] sm:$0xff]
    %v119 = vld [vmem:[#allocation4 + $0x38] sm:$0xf]
    %v120 = vld [vmem:[#allocation4 + $0x3c] sm:$0xff]
    %v121 = vld [vmem:[#allocation4 + $0x44] sm:$0xff]
    %v122 = vld [vmem:[#allocation4 + $0x4c] sm:$0xf]
    %v123 = vld [vmem:[#allocation4 + $0x50] sm:$0xff]
    %v124 = vld [vmem:[#allocation4 + $0x58] sm:$0xff]
    %v125 = vld [vmem:[#allocation4 + $0x60] sm:$0xf]
    %v126 = vld [vmem:[#allocation4 + $0x64] sm:$0xff]
    %v127 = vld [vmem:[#allocation4 + $0x6c] sm:$0xff]
    %v128 = vld [vmem:[#allocation4 + $0x74] sm:$0xf]
    %v129 = vld [vmem:[#allocation4 + $0x78] sm:$0xff]
    %v130 = vld [vmem:[#allocation4 + $0x80] sm:$0xff]
    %v131 = vld [vmem:[#allocation4 + $0x88] sm:$0xf]
    %v132 = vld [vmem:[#allocation4 + $0x8c] sm:$0xff]
    %v133 = vld [vmem:[#allocation4 + $0x94] sm:$0xff]
    %v134 = vld [vmem:[#allocation4 + $0x9c] sm:$0xf]
    %v135 = vld [vmem:[#allocation4 + $0xa0] sm:$0xff]
    %v136 = vld [vmem:[#allocation4 + $0xa8] sm:$0xff]
    %v137 = vld [vmem:[#allocation4 + $0xb0] sm:$0xf]
    %v138 = vld [vmem:[#allocation4 + $0xb4] sm:$0xff]
    %v139 = vld [vmem:[#allocation4 + $0xbc] sm:$0xff]
    %v140 = vld [vmem:[#allocation4 + $0xc4] sm:$0xf]
    %v141 = vld [vmem:[#allocation4 + $0xc8] sm:$0xff]
    %v142 = vld [vmem:[#allocation4 + $0xd0] sm:$0xff]
    %v143 = vld [vmem:[#allocation4 + $0xd8] sm:$0xf]
    %v144 = vld [vmem:[#allocation4 + $0xdc] sm:$0xff]
    %v145 = vld [vmem:[#allocation4 + $0xe4] sm:$0xff]
    %v146 = vld [vmem:[#allocation4 + $0xec] sm:$0xf]
    %v147 = vld [vmem:[#allocation4 + $0xf0] sm:$0xff]
    %v148 = vld [vmem:[#allocation4 + $0xf8] sm:$0xff]
    %v149 = vld [vmem:[#allocation4 + $0x100] sm:$0xf]
    %v150 = vld [vmem:[#allocation4 + $0x104] sm:$0xff]
    %v151 = vld [vmem:[#allocation4 + $0x10c] sm:$0xff]
    %v152 = vld [vmem:[#allocation4 + $0x114] sm:$0xf]
    %v153 = vld [vmem:[#allocation4 + $0x118] sm:$0xff]
    %v154 = vld [vmem:[#allocation4 + $0x120] sm:$0xff]
    %v155 = vld [vmem:[#allocation4 + $0x128] sm:$0xf]
    %v156 = vld [vmem:[#allocation4 + $0x12c] sm:$0xff]
    %v157 = vld [vmem:[#allocation4 + $0x134] sm:$0xff]
    %v158 = vld [vmem:[#allocation4 + $0x13c] sm:$0xf]
    %v159 = vld [vmem:[#allocation4 + $0x140] sm:$0xff]
    %v160 = vld [vmem:[#allocation4 + $0x148] sm:$0xff]
    %v161 = vld [vmem:[#allocation4 + $0x150] sm:$0xf]
    %v162 = vld [vmem:[#allocation4 + $0x154] sm:$0xff]
    %v163 = vld [vmem:[#allocation4 + $0x15c] sm:$0xff]
    %v164 = vld [vmem:[#allocation4 + $0x164] sm:$0xf]
    %v165 = vld [vmem:[#allocation4 + $0x168] sm:$0xff]
    %v166 = vld [vmem:[#allocation4 + $0x170] sm:$0xff]
    %v167 = vld [vmem:[#allocation4 + $0x178] sm:$0xf]
    %v168 = vld [vmem:[#allocation4 + $0x17c] sm:$0xff]
    %v169 = vld [vmem:[#allocation4 + $0x184] sm:$0xff]
    %v170 = vld [vmem:[#allocation4 + $0x18c] sm:$0xf]
    %v171 = vld [vmem:[#allocation4 + $0x190] sm:$0xff]
    %v172 = vld [vmem:[#allocation4 + $0x198] sm:$0xff]
    %v173 = vld [vmem:[#allocation4 + $0x1a0] sm:$0xf]
    %v174 = vld [vmem:[#allocation4 + $0x1a4] sm:$0xff]
    %v175 = vld [vmem:[#allocation4 + $0x1ac] sm:$0xff]
    %v176 = vld [vmem:[#allocation4 + $0x1b4] sm:$0xf]
    %v177 = vld [vmem:[#allocation4 + $0x1b8] sm:$0xff]
    %v178 = vld [vmem:[#allocation4 + $0x1c0] sm:$0xff]
    %v179 = vld [vmem:[#allocation4 + $0x1c8] sm:$0xf]
    %v180 = vld [vmem:[#allocation4 + $0x1cc] sm:$0xff]
    %v181 = vld [vmem:[#allocation4 + $0x1d4] sm:$0xff]
    %v182 = vld [vmem:[#allocation4 + $0x1dc] sm:$0xf]
    %v183 = vld [vmem:[#allocation4 + $0x1e0] sm:$0xff]
    %v184 = vld [vmem:[#allocation4 + $0x1e8] sm:$0xff]
    %v185 = vld [vmem:[#allocation4 + $0x1f0] sm:$0xf]
    %v186 = vld [vmem:[#allocation4 + $0x1f4] sm:$0xff]
    %v187 = vld [vmem:[#allocation4 + $0x1fc] sm:$0xff]
    %v188 = vld [vmem:[#allocation4 + $0x204] sm:$0xf]
    %v189 = vld [vmem:[#allocation4 + $0x208] sm:$0xff]
    %v190 = vld [vmem:[#allocation4 + $0x210] sm:$0xff]
    %v191 = vld [vmem:[#allocation4 + $0x218] sm:$0xf]
    %v192 = vld [vmem:[#allocation4 + $0x21c] sm:$0xff]
    %v193 = vld [vmem:[#allocation4 + $0x224] sm:$0xff]
    %v194 = vld [vmem:[#allocation4 + $0x22c] sm:$0xf]
    %v195 = vld [vmem:[#allocation4 + $0x230] sm:$0xff]
    %v196 = vld [vmem:[#allocation4 + $0x238] sm:$0xff]
    %v197 = vld [vmem:[#allocation4 + $0x240] sm:$0xf]
    %v198 = vld [vmem:[#allocation4 + $0x244] sm:$0xff]
    %v199 = vld [vmem:[#allocation4 + $0x24c] sm:$0xff]
    %v200 = vld [vmem:[#allocation4 + $0x254] sm:$0xf]
    %v201 = vld [vmem:[#allocation4 + $0x258] sm:$0xff]
    %v202 = vld [vmem:[#allocation4 + $0x260] sm:$0xff]
    %v203 = vld [vmem:[#allocation4 + $0x268] sm:$0xf]
    %v204 = vld [vmem:[#allocation4 + $0x26c] sm:$0xff]
    %v205 = vld [vmem:[#allocation4 + $0x274] sm:$0xff]
    %v206 = vld [vmem:[#allocation4 + $0x27c] sm:$0xf]
    %v207 = vld [vmem:[#allocation4 + $0x280] sm:$0xff]
    %v208 = vld [vmem:[#allocation4 + $0x288] sm:$0xff]
    %v209 = vld [vmem:[#allocation4 + $0x290] sm:$0xf]
    %v210 = vld [vmem:[#allocation4 + $0x294] sm:$0xff]
    %v211 = vld [vmem:[#allocation4 + $0x29c] sm:$0xff]
    %v212 = vld [vmem:[#allocation4 + $0x2a4] sm:$0xf]
    %v213 = vld [vmem:[#allocation4 + $0x2a8] sm:$0xff]
    %v214 = vld [vmem:[#allocation4 + $0x2b0] sm:$0xff]
    %v215 = vld [vmem:[#allocation4 + $0x2b8] sm:$0xf]
    %v216 = vld [vmem:[#allocation4 + $0x2bc] sm:$0xff]
    %v217 = vld [vmem:[#allocation4 + $0x2c4] sm:$0xff]
    %v218 = vld [vmem:[#allocation4 + $0x2cc] sm:$0xf]
    %v219 = vld [vmem:[#allocation4 + $0x2d0] sm:$0xff]
    %v220 = vld [vmem:[#allocation4 + $0x2d8] sm:$0xff]
    %v221 = vld [vmem:[#allocation4 + $0x2e0] sm:$0xf]
    %v222 = vld [vmem:[#allocation4 + $0x2e4] sm:$0xff]
    %v223 = vld [vmem:[#allocation4 + $0x2ec] sm:$0xff]
    %v224 = vld [vmem:[#allocation4 + $0x2f4] sm:$0xf]
    %v225 = vld [vmem:[#allocation4 + $0x2f8] sm:$0xff]
    %v226 = vld [vmem:[#allocation4 + $0x300] sm:$0xff]
    %v227 = vld [vmem:[#allocation4 + $0x308] sm:$0xf]
    %v228 = vld [vmem:[#allocation4 + $0x30c] sm:$0xff]
    %v229 = vld [vmem:[#allocation4 + $0x314] sm:$0xff]
    %v230 = vld [vmem:[#allocation4 + $0x31c] sm:$0xf]
    %v231 = vld [vmem:[#allocation4 + $0x320] sm:$0xff]
    %v232 = vld [vmem:[#allocation4 + $0x328] sm:$0xff]
    %v233 = vld [vmem:[#allocation4 + $0x330] sm:$0xf]
    %v234 = vld [vmem:[#allocation4 + $0x334] sm:$0xff]
    %v235 = vld [vmem:[#allocation4 + $0x33c] sm:$0xff]
    %v236 = vld [vmem:[#allocation4 + $0x344] sm:$0xf]
    %v237 = vld [vmem:[#allocation4 + $0x348] sm:$0xff]
    %v238 = vld [vmem:[#allocation4 + $0x350] sm:$0xff]
    %v239 = vld [vmem:[#allocation4 + $0x358] sm:$0xf]
    %v240 = vld [vmem:[#allocation4 + $0x35c] sm:$0xff]
    %v241 = vld [vmem:[#allocation4 + $0x364] sm:$0xff]
    %v242 = vld [vmem:[#allocation4 + $0x36c] sm:$0xf]
    %v243 = vld [vmem:[#allocation4 + $0x370] sm:$0xff]
    %v244 = vld [vmem:[#allocation4 + $0x378] sm:$0xff]
    %v245 = vld [vmem:[#allocation4 + $0x380] sm:$0xf]
    %v246 = vld [vmem:[#allocation4 + $0x384] sm:$0xff]
    %v247 = vld [vmem:[#allocation4 + $0x38c] sm:$0xff]
    %v248 = vld [vmem:[#allocation4 + $0x394] sm:$0xf]
    %v249 = vld [vmem:[#allocation4 + $0x398] sm:$0xff]
    %v250 = vld [vmem:[#allocation4 + $0x3a0] sm:$0xff]
    %v251 = vld [vmem:[#allocation4 + $0x3a8] sm:$0xf]
    %v252 = vld [vmem:[#allocation4 + $0x3ac] sm:$0xff]
    %v253 = vld [vmem:[#allocation4 + $0x3b4] sm:$0xff]
    %v254 = vld [vmem:[#allocation4 + $0x3bc] sm:$0xf]
    %v255 = vld [vmem:[#allocation4 + $0x3c0] sm:$0xff]
    %v256 = vld [vmem:[#allocation4 + $0x3c8] sm:$0xff]
    %v257 = vld [vmem:[#allocation4 + $0x3d0] sm:$0xf]
    %v258 = vld [vmem:[#allocation4 + $0x3d4] sm:$0xff]
    %v259 = vld [vmem:[#allocation4 + $0x3dc] sm:$0xff]
    %v260 = vld [vmem:[#allocation4 + $0x3e4] sm:$0xf]
    %v261 = vld [vmem:[#allocation4 + $0x3e8] sm:$0xff]
    %v262 = vld [vmem:[#allocation4 + $0x3f0] sm:$0xff]
    %v263 = vld [vmem:[#allocation4 + $0x3f8] sm:$0xf]
    %v264 = vld [vmem:[#allocation4 + $0x3fc] sm:$0xff]
    %v265 = vld [vmem:[#allocation4 + $0x404] sm:$0xff]
    %v266 = vld [vmem:[#allocation4 + $0x40c] sm:$0xf]
    %v267 = vld [vmem:[#allocation4 + $0x410] sm:$0xff]
    %v268 = vld [vmem:[#allocation4 + $0x418] sm:$0xff]
    %v269 = vld [vmem:[#allocation4 + $0x420] sm:$0xf]
    %v270 = vld [vmem:[#allocation4 + $0x424] sm:$0xff]
    %v271 = vld [vmem:[#allocation4 + $0x42c] sm:$0xff]
    %v272 = vld [vmem:[#allocation4 + $0x434] sm:$0xf]
    %v273 = vld [vmem:[#allocation4 + $0x438] sm:$0xff]
    %v274 = vld [vmem:[#allocation4 + $0x440] sm:$0xff]
    %v275 = vld [vmem:[#allocation4 + $0x448] sm:$0xf]
    %v276 = vld [vmem:[#allocation4 + $0x44c] sm:$0xff]
    %v277 = vld [vmem:[#allocation4 + $0x454] sm:$0xff]
    %v278 = vld [vmem:[#allocation4 + $0x45c] sm:$0xf]
    %v279 = vld [vmem:[#allocation4 + $0x460] sm:$0xff]
    %v280 = vld [vmem:[#allocation4 + $0x468] sm:$0xff]
    %v281 = vld [vmem:[#allocation4 + $0x470] sm:$0xf]
    %v282 = vld [vmem:[#allocation4 + $0x474] sm:$0xff]
    %v283 = vld [vmem:[#allocation4 + $0x47c] sm:$0xff]
    %v284 = vld [vmem:[#allocation4 + $0x484] sm:$0xf]
    %v285 = vld [vmem:[#allocation4 + $0x488] sm:$0xff]
    %v286 = vld [vmem:[#allocation4 + $0x490] sm:$0xff]
    %v287 = vld [vmem:[#allocation4 + $0x498] sm:$0xf]
    %v288 = vld [vmem:[#allocation4 + $0x49c] sm:$0xff]
    %v289 = vld [vmem:[#allocation4 + $0x4a4] sm:$0xff]
    %v290 = vld [vmem:[#allocation4 + $0x4ac] sm:$0xf]
    %v291 = vld [vmem:[#allocation4 + $0x4b0] sm:$0xff]
    %v292 = vld [vmem:[#allocation4 + $0x4b8] sm:$0xff]
    %v293 = vld [vmem:[#allocation4 + $0x4c0] sm:$0xf]
    %v294 = vld [vmem:[#allocation4 + $0x4c4] sm:$0xff]
    %v295 = vld [vmem:[#allocation4 + $0x4cc] sm:$0xff]
    %v296 = vld [vmem:[#allocation4 + $0x4d4] sm:$0xf]
    %v297 = vld [vmem:[#allocation4 + $0x4d8] sm:$0xff]
    %v298 = vld [vmem:[#allocation4 + $0x4e0] sm:$0xff]
    %v299 = vld [vmem:[#allocation4 + $0x4e8] sm:$0xf]
    %v300 = vld [vmem:[#allocation4 + $0x4ec] sm:$0xff]
    %v301 = vld [vmem:[#allocation4 + $0x4f4] sm:$0xff]
    %v302 = vld [vmem:[#allocation4 + $0x4fc] sm:$0xf]
    %v303 = vld [vmem:[#allocation4 + $0x500] sm:$0xff]
    %v304 = vld [vmem:[#allocation4 + $0x508] sm:$0xff]
    %v305 = vld [vmem:[#allocation4 + $0x510] sm:$0xf]
    %v306 = vld [vmem:[#allocation4 + $0x514] sm:$0xff]
    %v307 = vld [vmem:[#allocation4 + $0x51c] sm:$0xff]
    %v308 = vld [vmem:[#allocation4 + $0x524] sm:$0xf]
    %v309 = vld [vmem:[#allocation4 + $0x528] sm:$0xff]
    %v310 = vld [vmem:[#allocation4 + $0x530] sm:$0xff]
    %v311 = vld [vmem:[#allocation4 + $0x538] sm:$0xf]
    %v312 = vld [vmem:[#allocation4 + $0x53c] sm:$0xff]
    %v313 = vld [vmem:[#allocation4 + $0x544] sm:$0xff]
    %v314 = vld [vmem:[#allocation4 + $0x54c] sm:$0xf]
    %v315 = vld [vmem:[#allocation4 + $0x550] sm:$0xff]
    %v316 = vld [vmem:[#allocation4 + $0x558] sm:$0xff]
    %v317 = vld [vmem:[#allocation4 + $0x560] sm:$0xf]
    %v318 = vld [vmem:[#allocation4 + $0x564] sm:$0xff]
    %v319 = vld [vmem:[#allocation4 + $0x56c] sm:$0xff]
    %v320 = vld [vmem:[#allocation4 + $0x574] sm:$0xf]
    %v321 = vld [vmem:[#allocation4 + $0x578] sm:$0xff]
    %v322 = vld [vmem:[#allocation4 + $0x580] sm:$0xff]
    %v323 = vld [vmem:[#allocation4 + $0x588] sm:$0xf]
    %v324 = vld [vmem:[#allocation4 + $0x58c] sm:$0xff]
    %v325 = vld [vmem:[#allocation4 + $0x594] sm:$0xff]
    %v326 = vld [vmem:[#allocation4 + $0x59c] sm:$0xf]
    %v327 = vld [vmem:[#allocation4 + $0x5a0] sm:$0xff]
    %v328 = vld [vmem:[#allocation4 + $0x5a8] sm:$0xff]
    %v329 = vld [vmem:[#allocation4 + $0x5b0] sm:$0xf]
    %v330 = vld [vmem:[#allocation4 + $0x5b4] sm:$0xff]
    %v331 = vld [vmem:[#allocation4 + $0x5bc] sm:$0xff]
    %v332 = vld [vmem:[#allocation4 + $0x5c4] sm:$0xf]
    %v333 = vld [vmem:[#allocation4 + $0x5c8] sm:$0xff]
    %v334 = vld [vmem:[#allocation4 + $0x5d0] sm:$0xff]
    %v335 = vld [vmem:[#allocation4 + $0x5d8] sm:$0xf]
    %v336 = vld [vmem:[#allocation4 + $0x5dc] sm:$0xff]
    %v337 = vld [vmem:[#allocation4 + $0x5e4] sm:$0xff]
    %v338 = vld [vmem:[#allocation4 + $0x5ec] sm:$0xf]
    %v339 = vld [vmem:[#allocation4 + $0x5f0] sm:$0xff]
    %v340 = vld [vmem:[#allocation4 + $0x5f8] sm:$0xff]
    %v341 = vld [vmem:[#allocation4 + $0x600] sm:$0xf]
    %v342 = vld [vmem:[#allocation4 + $0x604] sm:$0xff]
    %v343 = vld [vmem:[#allocation4 + $0x60c] sm:$0xff]
    %v344 = vld [vmem:[#allocation4 + $0x614] sm:$0xf]
    %v345 = vld [vmem:[#allocation4 + $0x618] sm:$0xff]
    %v346 = vld [vmem:[#allocation4 + $0x620] sm:$0xff]
    %v347 = vld [vmem:[#allocation4 + $0x628] sm:$0xf]
    %v348 = vld [vmem:[#allocation4 + $0x62c] sm:$0xff]
    %v349 = vld [vmem:[#allocation4 + $0x634] sm:$0xff]
    %v350 = vld [vmem:[#allocation4 + $0x63c] sm:$0xf]
    %v351 = vld [vmem:[#allocation4 + $0x640] sm:$0xff]
    %v352 = vld [vmem:[#allocation4 + $0x648] sm:$0xff]
    %v353 = vld [vmem:[#allocation4 + $0x650] sm:$0xf]
    %v354 = vld [vmem:[#allocation4 + $0x654] sm:$0xff]
    %v355 = vld [vmem:[#allocation4 + $0x65c] sm:$0xff]
    %v356 = vld [vmem:[#allocation4 + $0x664] sm:$0xf]
    %v357 = vld [vmem:[#allocation4 + $0x668] sm:$0xff]
    %v358 = vld [vmem:[#allocation4 + $0x670] sm:$0xff]
    %v359 = vld [vmem:[#allocation4 + $0x678] sm:$0xf]
    %v360 = vld [vmem:[#allocation4 + $0x67c] sm:$0xff]
    %v361 = vld [vmem:[#allocation4 + $0x684] sm:$0xff]
    %v362 = vld [vmem:[#allocation4 + $0x68c] sm:$0xf]
    %v363 = vld [vmem:[#allocation4 + $0x690] sm:$0xff]
    %v364 = vld [vmem:[#allocation4 + $0x698] sm:$0xff]
    %v365 = vld [vmem:[#allocation4 + $0x6a0] sm:$0xf]
    %v366 = vld [vmem:[#allocation4 + $0x6a4] sm:$0xff]
    %v367 = vld [vmem:[#allocation4 + $0x6ac] sm:$0xff]
    %v368 = vld [vmem:[#allocation4 + $0x6b4] sm:$0xf]
    %v369 = vld [vmem:[#allocation4 + $0x6b8] sm:$0xff]
    %v370 = vld [vmem:[#allocation4 + $0x6c0] sm:$0xff]
    %v371 = vld [vmem:[#allocation4 + $0x6c8] sm:$0xf]
    %v372 = vld [vmem:[#allocation4 + $0x6cc] sm:$0xff]
    %v373 = vld [vmem:[#allocation4 + $0x6d4] sm:$0xff]
    %v374 = vld [vmem:[#allocation4 + $0x6dc] sm:$0xf]
    %v375 = vld [vmem:[#allocation4 + $0x6e0] sm:$0xff]
    %v376 = vld [vmem:[#allocation4 + $0x6e8] sm:$0xff]
    %v377 = vld [vmem:[#allocation4 + $0x6f0] sm:$0xf]
    %v378 = vld [vmem:[#allocation4 + $0x6f4] sm:$0xff]
    %v379 = vld [vmem:[#allocation4 + $0x6fc] sm:$0xff]
    %v380 = vld [vmem:[#allocation4 + $0x704] sm:$0xf]
    %v381 = vld [vmem:[#allocation4 + $0x708] sm:$0xff]
    %v382 = vld [vmem:[#allocation4 + $0x710] sm:$0xff]
    %v383 = vld [vmem:[#allocation4 + $0x718] sm:$0xf]
    %v384 = vld [vmem:[#allocation4 + $0x71c] sm:$0xff]
    %v385 = vld [vmem:[#allocation4 + $0x724] sm:$0xff]
    %v386 = vld [vmem:[#allocation4 + $0x72c] sm:$0xf]
    %v387 = vld [vmem:[#allocation4 + $0x730] sm:$0xff]
    %v388 = vld [vmem:[#allocation4 + $0x738] sm:$0xff]
    %v389 = vld [vmem:[#allocation4 + $0x740] sm:$0xf]
    %v390 = vld [vmem:[#allocation4 + $0x744] sm:$0xff]
    %v391 = vld [vmem:[#allocation4 + $0x74c] sm:$0xff]
    %v392 = vld [vmem:[#allocation4 + $0x754] sm:$0xf]
    %v393 = vld [vmem:[#allocation4 + $0x758] sm:$0xff]
    %v394 = vld [vmem:[#allocation4 + $0x760] sm:$0xff]
    %v395 = vld [vmem:[#allocation4 + $0x768] sm:$0xf]
    %v396 = vld [vmem:[#allocation4 + $0x76c] sm:$0xff]
    %v397 = vld [vmem:[#allocation4 + $0x774] sm:$0xff]
    %v398 = vld [vmem:[#allocation4 + $0x77c] sm:$0xf]
    %v399 = vld [vmem:[#allocation4 + $0x780] sm:$0xff]
    %v400 = vld [vmem:[#allocation4 + $0x788] sm:$0xff]
    %v401 = vld [vmem:[#allocation4 + $0x790] sm:$0xf]
    %v402 = vld [vmem:[#allocation4 + $0x794] sm:$0xff]
    %v403 = vld [vmem:[#allocation4 + $0x79c] sm:$0xff]
    %v404 = vld [vmem:[#allocation4 + $0x7a4] sm:$0xf]
    %v405 = vld [vmem:[#allocation4 + $0x7a8] sm:$0xff]
    %v406 = vld [vmem:[#allocation4 + $0x7b0] sm:$0xff]
    %v407 = vld [vmem:[#allocation4 + $0x7b8] sm:$0xf]
    %v408 = vld [vmem:[#allocation4 + $0x7bc] sm:$0xff]
    %v409 = vld [vmem:[#allocation4 + $0x7c4] sm:$0xff]
    %v410 = vld [vmem:[#allocation4 + $0x7cc] sm:$0xf]
    %v411 = vld [vmem:[#allocation4 + $0x7d0] sm:$0xff]
    %v412 = vld [vmem:[#allocation4 + $0x7d8] sm:$0xff]
    %v413 = vld [vmem:[#allocation4 + $0x7e0] sm:$0xf]
    %v414 = vld [vmem:[#allocation4 + $0x7e4] sm:$0xff]
    %v415 = vld [vmem:[#allocation4 + $0x7ec] sm:$0xff]
    %v416 = vld [vmem:[#allocation4 + $0x7f4] sm:$0xf]
    %v417 = vld [vmem:[#allocation4 + $0x7f8] sm:$0xff]
    %v418 = vld [vmem:[#allocation4 + $0x800] sm:$0xff]
    %v419 = vld [vmem:[#allocation4 + $0x808] sm:$0xf]
    %v420 = vld [vmem:[#allocation4 + $0x80c] sm:$0xff]
    %v421 = vld [vmem:[#allocation4 + $0x814] sm:$0xff]
    %v422 = vld [vmem:[#allocation4 + $0x81c] sm:$0xf]
    %v423 = vld [vmem:[#allocation4 + $0x820] sm:$0xff]
    %v424 = vld [vmem:[#allocation4 + $0x828] sm:$0xff]
    %v425 = vld [vmem:[#allocation4 + $0x830] sm:$0xf]
    %v426 = vld [vmem:[#allocation4 + $0x834] sm:$0xff]
    %v427 = vld [vmem:[#allocation4 + $0x83c] sm:$0xff]
    %v428 = vld [vmem:[#allocation4 + $0x844] sm:$0xf]
    %v429 = vld [vmem:[#allocation4 + $0x848] sm:$0xff]
    %v430 = vld [vmem:[#allocation4 + $0x850] sm:$0xff]
    %v431 = vld [vmem:[#allocation4 + $0x858] sm:$0xf]
    %v432 = vld [vmem:[#allocation4 + $0x85c] sm:$0xff]
    %v433 = vld [vmem:[#allocation4 + $0x864] sm:$0xff]
    %v434 = vld [vmem:[#allocation4 + $0x86c] sm:$0xf]
    %v435 = vld [vmem:[#allocation4 + $0x870] sm:$0xff]
    %v436 = vld [vmem:[#allocation4 + $0x878] sm:$0xff]
    %v437 = vld [vmem:[#allocation4 + $0x880] sm:$0xf]
    %v438 = vld [vmem:[#allocation4 + $0x884] sm:$0xff]
    %v439 = vld [vmem:[#allocation4 + $0x88c] sm:$0xff]
    %v440 = vld [vmem:[#allocation4 + $0x894] sm:$0xf]
    %v441 = vld [vmem:[#allocation4 + $0x898] sm:$0xff]
    %v442 = vld [vmem:[#allocation4 + $0x8a0] sm:$0xff]
    %v443 = vld [vmem:[#allocation4 + $0x8a8] sm:$0xf]
    %v444 = vld [vmem:[#allocation4 + $0x8ac] sm:$0xff]
    %v445 = vld [vmem:[#allocation4 + $0x8b4] sm:$0xff]
    %v446 = vld [vmem:[#allocation4 + $0x8bc] sm:$0xf]
    %v447 = vld [vmem:[#allocation6] sm:$0x1f]
    %v449 = vlaneseq
    %v450 = vshrl.u32 %v449, 7
    %v451 = vsub.s32 0, %v450
    %v452 = vrot.slane %v447, %v451
    %v453 = vlaneseq
    %v454 = vshrl.u32 %v453, 7
    %v455 = vsub.s32 1, %v454
    %v456 = vrot.slane %v447, %v455
    %v457 = vlaneseq
    %v458 = vshrl.u32 %v457, 7
    %v459 = vsub.s32 2, %v458
    %v460 = vrot.slane %v447, %v459
    %v461 = vlaneseq
    %v462 = vshrl.u32 %v461, 7
    %v463 = vsub.s32 3, %v462
    %v464 = vrot.slane %v447, %v463
    %v465 = vlaneseq
    %v466 = vshrl.u32 %v465, 7
    %v467 = vsub.s32 4, %v466
    %v468 = vrot.slane %v447, %v467
    %v482 = vunpack.c.l.b16 %v103
    %v483 = vunpack.c.h.b16 %v103
    %v484 = vunpack.c.l.b16 %v104
    %v485 = vunpack.c.h.b16 %v104
    %v486 = vunpack.c.l.b16 %v105
    %v487 = vunpack.c.h.b16 %v105
    %v488 = vunpack.c.l.b16 %v106
    %v489 = vunpack.c.l.b16 %v107
    %v490 = vunpack.c.h.b16 %v107
    %v491 = vunpack.c.l.b16 %v108
    %v492 = vunpack.c.h.b16 %v108
    %v493 = vunpack.c.l.b16 %v109
    %v494 = vunpack.c.h.b16 %v109
    %v495 = vunpack.c.l.b16 %v110
    %v496 = vpack.c.b16 %v489, %v482
    %v497 = vpack.c.b16 %v490, %v483
    %v498 = vpack.c.b16 %v491, %v484
    %v499 = vpack.c.b16 %v492, %v485
    %v500 = vpack.c.b16 %v493, %v486
    %v501 = vpack.c.b16 %v494, %v487
    %v502 = vpack.c.b16 %v495, %v488
    %v846 = vunpack.c.l.b16 %v111
    %v847 = vunpack.c.h.b16 %v111
    %v848 = vunpack.c.l.b16 %v112
    %v849 = vunpack.c.h.b16 %v112
    %v850 = vunpack.c.l.b16 %v113
    %v851 = vunpack.c.l.b16 %v114
    %v852 = vunpack.c.h.b16 %v114
    %v853 = vunpack.c.l.b16 %v115
    %v854 = vunpack.c.h.b16 %v115
    %v855 = vunpack.c.l.b16 %v116
    %v856 = vunpack.c.l.b16 %v117
    %v857 = vunpack.c.h.b16 %v117
    %v858 = vunpack.c.l.b16 %v118
    %v859 = vunpack.c.h.b16 %v118
    %v860 = vunpack.c.l.b16 %v119
    %v861 = vunpack.c.l.b16 %v120
    %v862 = vunpack.c.h.b16 %v120
    %v863 = vunpack.c.l.b16 %v121
    %v864 = vunpack.c.h.b16 %v121
    %v865 = vunpack.c.l.b16 %v122
    %v866 = vunpack.c.l.b16 %v123
    %v867 = vunpack.c.h.b16 %v123
    %v868 = vunpack.c.l.b16 %v124
    %v869 = vunpack.c.h.b16 %v124
    %v870 = vunpack.c.l.b16 %v125
    %v871 = vunpack.c.l.b16 %v126
    %v872 = vunpack.c.h.b16 %v126
    %v873 = vunpack.c.l.b16 %v127
    %v874 = vunpack.c.h.b16 %v127
    %v875 = vunpack.c.l.b16 %v128
    %v876 = vunpack.c.l.b16 %v129
    %v877 = vunpack.c.h.b16 %v129
    %v878 = vunpack.c.l.b16 %v130
    %v879 = vunpack.c.h.b16 %v130
    %v880 = vunpack.c.l.b16 %v131
    %v881 = vunpack.c.l.b16 %v132
    %v882 = vunpack.c.h.b16 %v132
    %v883 = vunpack.c.l.b16 %v133
    %v884 = vunpack.c.h.b16 %v133
    %v885 = vunpack.c.l.b16 %v134
    %v886 = vunpack.c.l.b16 %v135
    %v887 = vunpack.c.h.b16 %v135
    %v888 = vunpack.c.l.b16 %v136
    %v889 = vunpack.c.h.b16 %v136
    %v890 = vunpack.c.l.b16 %v137
    %v891 = vunpack.c.l.b16 %v138
    %v892 = vunpack.c.h.b16 %v138
    %v893 = vunpack.c.l.b16 %v139
    %v894 = vunpack.c.h.b16 %v139
    %v895 = vunpack.c.l.b16 %v140
    %v896 = vunpack.c.l.b16 %v141
    %v897 = vunpack.c.h.b16 %v141
    %v898 = vunpack.c.l.b16 %v142
    %v899 = vunpack.c.h.b16 %v142
    %v900 = vunpack.c.l.b16 %v143
    %v901 = vunpack.c.l.b16 %v144
    %v902 = vunpack.c.h.b16 %v144
    %v903 = vunpack.c.l.b16 %v145
    %v904 = vunpack.c.h.b16 %v145
    %v905 = vunpack.c.l.b16 %v146
    %v906 = vunpack.c.l.b16 %v147
    %v907 = vunpack.c.h.b16 %v147
    %v908 = vunpack.c.l.b16 %v148
    %v909 = vunpack.c.h.b16 %v148
    %v910 = vunpack.c.l.b16 %v149
    %v911 = vunpack.c.l.b16 %v150
    %v912 = vunpack.c.h.b16 %v150
    %v913 = vunpack.c.l.b16 %v151
    %v914 = vunpack.c.h.b16 %v151
    %v915 = vunpack.c.l.b16 %v152
    %v916 = vunpack.c.l.b16 %v153
    %v917 = vunpack.c.h.b16 %v153
    %v918 = vunpack.c.l.b16 %v154
    %v919 = vunpack.c.h.b16 %v154
    %v920 = vunpack.c.l.b16 %v155
    %v921 = vunpack.c.l.b16 %v156
    %v922 = vunpack.c.h.b16 %v156
    %v923 = vunpack.c.l.b16 %v157
    %v924 = vunpack.c.h.b16 %v157
    %v925 = vunpack.c.l.b16 %v158
    %v926 = vunpack.c.l.b16 %v159
    %v927 = vunpack.c.h.b16 %v159
    %v928 = vunpack.c.l.b16 %v160
    %v929 = vunpack.c.h.b16 %v160
    %v930 = vunpack.c.l.b16 %v161
    %v931 = vunpack.c.l.b16 %v162
    %v932 = vunpack.c.h.b16 %v162
    %v933 = vunpack.c.l.b16 %v163
    %v934 = vunpack.c.h.b16 %v163
    %v935 = vunpack.c.l.b16 %v164
    %v936 = vunpack.c.l.b16 %v165
    %v937 = vunpack.c.h.b16 %v165
    %v938 = vunpack.c.l.b16 %v166
    %v939 = vunpack.c.h.b16 %v166
    %v940 = vunpack.c.l.b16 %v167
    %v941 = vunpack.c.l.b16 %v168
    %v942 = vunpack.c.h.b16 %v168
    %v943 = vunpack.c.l.b16 %v169
    %v944 = vunpack.c.h.b16 %v169
    %v945 = vunpack.c.l.b16 %v170
    %v946 = vunpack.c.l.b16 %v171
    %v947 = vunpack.c.h.b16 %v171
    %v948 = vunpack.c.l.b16 %v172
    %v949 = vunpack.c.h.b16 %v172
    %v950 = vunpack.c.l.b16 %v173
    %v951 = vunpack.c.l.b16 %v174
    %v952 = vunpack.c.h.b16 %v174
    %v953 = vunpack.c.l.b16 %v175
    %v954 = vunpack.c.h.b16 %v175
    %v955 = vunpack.c.l.b16 %v176
    %v956 = vunpack.c.l.b16 %v177
    %v957 = vunpack.c.h.b16 %v177
    %v958 = vunpack.c.l.b16 %v178
    %v959 = vunpack.c.h.b16 %v178
    %v960 = vunpack.c.l.b16 %v179
    %v961 = vunpack.c.l.b16 %v180
    %v962 = vunpack.c.h.b16 %v180
    %v963 = vunpack.c.l.b16 %v181
    %v964 = vunpack.c.h.b16 %v181
    %v965 = vunpack.c.l.b16 %v182
    %v966 = vunpack.c.l.b16 %v183
    %v967 = vunpack.c.h.b16 %v183
    %v968 = vunpack.c.l.b16 %v184
    %v969 = vunpack.c.h.b16 %v184
    %v970 = vunpack.c.l.b16 %v185
    %v971 = vunpack.c.l.b16 %v186
    %v972 = vunpack.c.h.b16 %v186
    %v973 = vunpack.c.l.b16 %v187
    %v974 = vunpack.c.h.b16 %v187
    %v975 = vunpack.c.l.b16 %v188
    %v976 = vunpack.c.l.b16 %v189
    %v977 = vunpack.c.h.b16 %v189
    %v978 = vunpack.c.l.b16 %v190
    %v979 = vunpack.c.h.b16 %v190
    %v980 = vunpack.c.l.b16 %v191
    %v981 = vunpack.c.l.b16 %v192
    %v982 = vunpack.c.h.b16 %v192
    %v983 = vunpack.c.l.b16 %v193
    %v984 = vunpack.c.h.b16 %v193
    %v985 = vunpack.c.l.b16 %v194
    %v986 = vunpack.c.l.b16 %v195
    %v987 = vunpack.c.h.b16 %v195
    %v988 = vunpack.c.l.b16 %v196
    %v989 = vunpack.c.h.b16 %v196
    %v990 = vunpack.c.l.b16 %v197
    %v991 = vunpack.c.l.b16 %v198
    %v992 = vunpack.c.h.b16 %v198
    %v993 = vunpack.c.l.b16 %v199
    %v994 = vunpack.c.h.b16 %v199
    %v995 = vunpack.c.l.b16 %v200
    %v996 = vunpack.c.l.b16 %v201
    %v997 = vunpack.c.h.b16 %v201
    %v998 = vunpack.c.l.b16 %v202
    %v999 = vunpack.c.h.b16 %v202
    %v1000 = vunpack.c.l.b16 %v203
    %v1001 = vunpack.c.l.b16 %v204
    %v1002 = vunpack.c.h.b16 %v204
    %v1003 = vunpack.c.l.b16 %v205
    %v1004 = vunpack.c.h.b16 %v205
    %v1005 = vunpack.c.l.b16 %v206
    %v1006 = vunpack.c.l.b16 %v207
    %v1007 = vunpack.c.h.b16 %v207
    %v1008 = vunpack.c.l.b16 %v208
    %v1009 = vunpack.c.h.b16 %v208
    %v1010 = vunpack.c.l.b16 %v209
    %v1011 = vunpack.c.l.b16 %v210
    %v1012 = vunpack.c.h.b16 %v210
    %v1013 = vunpack.c.l.b16 %v211
    %v1014 = vunpack.c.h.b16 %v211
    %v1015 = vunpack.c.l.b16 %v212
    %v1016 = vunpack.c.l.b16 %v213
    %v1017 = vunpack.c.h.b16 %v213
    %v1018 = vunpack.c.l.b16 %v214
    %v1019 = vunpack.c.h.b16 %v214
    %v1020 = vunpack.c.l.b16 %v215
    %v1021 = vunpack.c.l.b16 %v216
    %v1022 = vunpack.c.h.b16 %v216
    %v1023 = vunpack.c.l.b16 %v217
    %v1024 = vunpack.c.h.b16 %v217
    %v1025 = vunpack.c.l.b16 %v218
    %v1026 = vunpack.c.l.b16 %v219
    %v1027 = vunpack.c.h.b16 %v219
    %v1028 = vunpack.c.l.b16 %v220
    %v1029 = vunpack.c.h.b16 %v220
    %v1030 = vunpack.c.l.b16 %v221
    %v1031 = vunpack.c.l.b16 %v222
    %v1032 = vunpack.c.h.b16 %v222
    %v1033 = vunpack.c.l.b16 %v223
    %v1034 = vunpack.c.h.b16 %v223
    %v1035 = vunpack.c.l.b16 %v224
    %v1036 = vunpack.c.l.b16 %v225
    %v1037 = vunpack.c.h.b16 %v225
    %v1038 = vunpack.c.l.b16 %v226
    %v1039 = vunpack.c.h.b16 %v226
    %v1040 = vunpack.c.l.b16 %v227
    %v1041 = vunpack.c.l.b16 %v228
    %v1042 = vunpack.c.h.b16 %v228
    %v1043 = vunpack.c.l.b16 %v229
    %v1044 = vunpack.c.h.b16 %v229
    %v1045 = vunpack.c.l.b16 %v230
    %v1046 = vunpack.c.l.b16 %v231
    %v1047 = vunpack.c.h.b16 %v231
    %v1048 = vunpack.c.l.b16 %v232
    %v1049 = vunpack.c.h.b16 %v232
    %v1050 = vunpack.c.l.b16 %v233
    %v1051 = vunpack.c.l.b16 %v234
    %v1052 = vunpack.c.h.b16 %v234
    %v1053 = vunpack.c.l.b16 %v235
    %v1054 = vunpack.c.h.b16 %v235
    %v1055 = vunpack.c.l.b16 %v236
    %v1056 = vunpack.c.l.b16 %v237
    %v1057 = vunpack.c.h.b16 %v237
    %v1058 = vunpack.c.l.b16 %v238
    %v1059 = vunpack.c.h.b16 %v238
    %v1060 = vunpack.c.l.b16 %v239
    %v1061 = vunpack.c.l.b16 %v240
    %v1062 = vunpack.c.h.b16 %v240
    %v1063 = vunpack.c.l.b16 %v241
    %v1064 = vunpack.c.h.b16 %v241
    %v1065 = vunpack.c.l.b16 %v242
    %v1066 = vunpack.c.l.b16 %v243
    %v1067 = vunpack.c.h.b16 %v243
    %v1068 = vunpack.c.l.b16 %v244
    %v1069 = vunpack.c.h.b16 %v244
    %v1070 = vunpack.c.l.b16 %v245
    %v1071 = vunpack.c.l.b16 %v246
    %v1072 = vunpack.c.h.b16 %v246
    %v1073 = vunpack.c.l.b16 %v247
    %v1074 = vunpack.c.h.b16 %v247
    %v1075 = vunpack.c.l.b16 %v248
    %v1076 = vunpack.c.l.b16 %v249
    %v1077 = vunpack.c.h.b16 %v249
    %v1078 = vunpack.c.l.b16 %v250
    %v1079 = vunpack.c.h.b16 %v250
    %v1080 = vunpack.c.l.b16 %v251
    %v1081 = vunpack.c.l.b16 %v252
    %v1082 = vunpack.c.h.b16 %v252
    %v1083 = vunpack.c.l.b16 %v253
    %v1084 = vunpack.c.h.b16 %v253
    %v1085 = vunpack.c.l.b16 %v254
    %v1086 = vunpack.c.l.b16 %v255
    %v1087 = vunpack.c.h.b16 %v255
    %v1088 = vunpack.c.l.b16 %v256
    %v1089 = vunpack.c.h.b16 %v256
    %v1090 = vunpack.c.l.b16 %v257
    %v1091 = vunpack.c.l.b16 %v258
    %v1092 = vunpack.c.h.b16 %v258
    %v1093 = vunpack.c.l.b16 %v259
    %v1094 = vunpack.c.h.b16 %v259
    %v1095 = vunpack.c.l.b16 %v260
    %v1096 = vunpack.c.l.b16 %v261
    %v1097 = vunpack.c.h.b16 %v261
    %v1098 = vunpack.c.l.b16 %v262
    %v1099 = vunpack.c.h.b16 %v262
    %v1100 = vunpack.c.l.b16 %v263
    %v1101 = vunpack.c.l.b16 %v264
    %v1102 = vunpack.c.h.b16 %v264
    %v1103 = vunpack.c.l.b16 %v265
    %v1104 = vunpack.c.h.b16 %v265
    %v1105 = vunpack.c.l.b16 %v266
    %v1106 = vunpack.c.l.b16 %v267
    %v1107 = vunpack.c.h.b16 %v267
    %v1108 = vunpack.c.l.b16 %v268
    %v1109 = vunpack.c.h.b16 %v268
    %v1110 = vunpack.c.l.b16 %v269
    %v1111 = vunpack.c.l.b16 %v270
    %v1112 = vunpack.c.h.b16 %v270
    %v1113 = vunpack.c.l.b16 %v271
    %v1114 = vunpack.c.h.b16 %v271
    %v1115 = vunpack.c.l.b16 %v272
    %v1116 = vunpack.c.l.b16 %v273
    %v1117 = vunpack.c.h.b16 %v273
    %v1118 = vunpack.c.l.b16 %v274
    %v1119 = vunpack.c.h.b16 %v274
    %v1120 = vunpack.c.l.b16 %v275
    %v1121 = vunpack.c.l.b16 %v276
    %v1122 = vunpack.c.h.b16 %v276
    %v1123 = vunpack.c.l.b16 %v277
    %v1124 = vunpack.c.h.b16 %v277
    %v1125 = vunpack.c.l.b16 %v278
    %v1126 = vunpack.c.l.b16 %v279
    %v1127 = vunpack.c.h.b16 %v279
    %v1128 = vunpack.c.l.b16 %v280
    %v1129 = vunpack.c.h.b16 %v280
    %v1130 = vunpack.c.l.b16 %v281
    %v1131 = vunpack.c.l.b16 %v282
    %v1132 = vunpack.c.h.b16 %v282
    %v1133 = vunpack.c.l.b16 %v283
    %v1134 = vunpack.c.h.b16 %v283
    %v1135 = vunpack.c.l.b16 %v284
    %v1136 = vunpack.c.l.b16 %v285
    %v1137 = vunpack.c.h.b16 %v285
    %v1138 = vunpack.c.l.b16 %v286
    %v1139 = vunpack.c.h.b16 %v286
    %v1140 = vunpack.c.l.b16 %v287
    %v1141 = vunpack.c.l.b16 %v288
    %v1142 = vunpack.c.h.b16 %v288
    %v1143 = vunpack.c.l.b16 %v289
    %v1144 = vunpack.c.h.b16 %v289
    %v1145 = vunpack.c.l.b16 %v290
    %v1146 = vunpack.c.l.b16 %v291
    %v1147 = vunpack.c.h.b16 %v291
    %v1148 = vunpack.c.l.b16 %v292
    %v1149 = vunpack.c.h.b16 %v292
    %v1150 = vunpack.c.l.b16 %v293
    %v1151 = vunpack.c.l.b16 %v294
    %v1152 = vunpack.c.h.b16 %v294
    %v1153 = vunpack.c.l.b16 %v295
    %v1154 = vunpack.c.h.b16 %v295
    %v1155 = vunpack.c.l.b16 %v296
    %v1156 = vunpack.c.l.b16 %v297
    %v1157 = vunpack.c.h.b16 %v297
    %v1158 = vunpack.c.l.b16 %v298
    %v1159 = vunpack.c.h.b16 %v298
    %v1160 = vunpack.c.l.b16 %v299
    %v1161 = vunpack.c.l.b16 %v300
    %v1162 = vunpack.c.h.b16 %v300
    %v1163 = vunpack.c.l.b16 %v301
    %v1164 = vunpack.c.h.b16 %v301
    %v1165 = vunpack.c.l.b16 %v302
    %v1166 = vunpack.c.l.b16 %v303
    %v1167 = vunpack.c.h.b16 %v303
    %v1168 = vunpack.c.l.b16 %v304
    %v1169 = vunpack.c.h.b16 %v304
    %v1170 = vunpack.c.l.b16 %v305
    %v1171 = vunpack.c.l.b16 %v306
    %v1172 = vunpack.c.h.b16 %v306
    %v1173 = vunpack.c.l.b16 %v307
    %v1174 = vunpack.c.h.b16 %v307
    %v1175 = vunpack.c.l.b16 %v308
    %v1176 = vunpack.c.l.b16 %v309
    %v1177 = vunpack.c.h.b16 %v309
    %v1178 = vunpack.c.l.b16 %v310
    %v1179 = vunpack.c.h.b16 %v310
    %v1180 = vunpack.c.l.b16 %v311
    %v1181 = vunpack.c.l.b16 %v312
    %v1182 = vunpack.c.h.b16 %v312
    %v1183 = vunpack.c.l.b16 %v313
    %v1184 = vunpack.c.h.b16 %v313
    %v1185 = vunpack.c.l.b16 %v314
    %v1186 = vunpack.c.l.b16 %v315
    %v1187 = vunpack.c.h.b16 %v315
    %v1188 = vunpack.c.l.b16 %v316
    %v1189 = vunpack.c.h.b16 %v316
    %v1190 = vunpack.c.l.b16 %v317
    %v1191 = vunpack.c.l.b16 %v318
    %v1192 = vunpack.c.h.b16 %v318
    %v1193 = vunpack.c.l.b16 %v319
    %v1194 = vunpack.c.h.b16 %v319
    %v1195 = vunpack.c.l.b16 %v320
    %v1196 = vunpack.c.l.b16 %v321
    %v1197 = vunpack.c.h.b16 %v321
    %v1198 = vunpack.c.l.b16 %v322
    %v1199 = vunpack.c.h.b16 %v322
    %v1200 = vunpack.c.l.b16 %v323
    %v1201 = vunpack.c.l.b16 %v324
    %v1202 = vunpack.c.h.b16 %v324
    %v1203 = vunpack.c.l.b16 %v325
    %v1204 = vunpack.c.h.b16 %v325
    %v1205 = vunpack.c.l.b16 %v326
    %v1206 = vunpack.c.l.b16 %v327
    %v1207 = vunpack.c.h.b16 %v327
    %v1208 = vunpack.c.l.b16 %v328
    %v1209 = vunpack.c.h.b16 %v328
    %v1210 = vunpack.c.l.b16 %v329
    %v1211 = vunpack.c.l.b16 %v330
    %v1212 = vunpack.c.h.b16 %v330
    %v1213 = vunpack.c.l.b16 %v331
    %v1214 = vunpack.c.h.b16 %v331
    %v1215 = vunpack.c.l.b16 %v332
    %v1216 = vunpack.c.l.b16 %v333
    %v1217 = vunpack.c.h.b16 %v333
    %v1218 = vunpack.c.l.b16 %v334
    %v1219 = vunpack.c.h.b16 %v334
    %v1220 = vunpack.c.l.b16 %v335
    %v1221 = vunpack.c.l.b16 %v336
    %v1222 = vunpack.c.h.b16 %v336
    %v1223 = vunpack.c.l.b16 %v337
    %v1224 = vunpack.c.h.b16 %v337
    %v1225 = vunpack.c.l.b16 %v338
    %v1226 = vunpack.c.l.b16 %v339
    %v1227 = vunpack.c.h.b16 %v339
    %v1228 = vunpack.c.l.b16 %v340
    %v1229 = vunpack.c.h.b16 %v340
    %v1230 = vunpack.c.l.b16 %v341
    %v1231 = vunpack.c.l.b16 %v342
    %v1232 = vunpack.c.h.b16 %v342
    %v1233 = vunpack.c.l.b16 %v343
    %v1234 = vunpack.c.h.b16 %v343
    %v1235 = vunpack.c.l.b16 %v344
    %v1236 = vunpack.c.l.b16 %v345
    %v1237 = vunpack.c.h.b16 %v345
    %v1238 = vunpack.c.l.b16 %v346
    %v1239 = vunpack.c.h.b16 %v346
    %v1240 = vunpack.c.l.b16 %v347
    %v1241 = vunpack.c.l.b16 %v348
    %v1242 = vunpack.c.h.b16 %v348
    %v1243 = vunpack.c.l.b16 %v349
    %v1244 = vunpack.c.h.b16 %v349
    %v1245 = vunpack.c.l.b16 %v350
    %v1246 = vunpack.c.l.b16 %v351
    %v1247 = vunpack.c.h.b16 %v351
    %v1248 = vunpack.c.l.b16 %v352
    %v1249 = vunpack.c.h.b16 %v352
    %v1250 = vunpack.c.l.b16 %v353
    %v1251 = vunpack.c.l.b16 %v354
    %v1252 = vunpack.c.h.b16 %v354
    %v1253 = vunpack.c.l.b16 %v355
    %v1254 = vunpack.c.h.b16 %v355
    %v1255 = vunpack.c.l.b16 %v356
    %v1256 = vunpack.c.l.b16 %v357
    %v1257 = vunpack.c.h.b16 %v357
    %v1258 = vunpack.c.l.b16 %v358
    %v1259 = vunpack.c.h.b16 %v358
    %v1260 = vunpack.c.l.b16 %v359
    %v1261 = vunpack.c.l.b16 %v360
    %v1262 = vunpack.c.h.b16 %v360
    %v1263 = vunpack.c.l.b16 %v361
    %v1264 = vunpack.c.h.b16 %v361
    %v1265 = vunpack.c.l.b16 %v362
    %v1266 = vunpack.c.l.b16 %v363
    %v1267 = vunpack.c.h.b16 %v363
    %v1268 = vunpack.c.l.b16 %v364
    %v1269 = vunpack.c.h.b16 %v364
    %v1270 = vunpack.c.l.b16 %v365
    %v1271 = vunpack.c.l.b16 %v366
    %v1272 = vunpack.c.h.b16 %v366
    %v1273 = vunpack.c.l.b16 %v367
    %v1274 = vunpack.c.h.b16 %v367
    %v1275 = vunpack.c.l.b16 %v368
    %v1276 = vunpack.c.l.b16 %v369
    %v1277 = vunpack.c.h.b16 %v369
    %v1278 = vunpack.c.l.b16 %v370
    %v1279 = vunpack.c.h.b16 %v370
    %v1280 = vunpack.c.l.b16 %v371
    %v1281 = vunpack.c.l.b16 %v372
    %v1282 = vunpack.c.h.b16 %v372
    %v1283 = vunpack.c.l.b16 %v373
    %v1284 = vunpack.c.h.b16 %v373
    %v1285 = vunpack.c.l.b16 %v374
    %v1286 = vunpack.c.l.b16 %v375
    %v1287 = vunpack.c.h.b16 %v375
    %v1288 = vunpack.c.l.b16 %v376
    %v1289 = vunpack.c.h.b16 %v376
    %v1290 = vunpack.c.l.b16 %v377
    %v1291 = vunpack.c.l.b16 %v378
    %v1292 = vunpack.c.h.b16 %v378
    %v1293 = vunpack.c.l.b16 %v379
    %v1294 = vunpack.c.h.b16 %v379
    %v1295 = vunpack.c.l.b16 %v380
    %v1296 = vunpack.c.l.b16 %v381
    %v1297 = vunpack.c.h.b16 %v381
    %v1298 = vunpack.c.l.b16 %v382
    %v1299 = vunpack.c.h.b16 %v382
    %v1300 = vunpack.c.l.b16 %v383
    %v1301 = vunpack.c.l.b16 %v384
    %v1302 = vunpack.c.h.b16 %v384
    %v1303 = vunpack.c.l.b16 %v385
    %v1304 = vunpack.c.h.b16 %v385
    %v1305 = vunpack.c.l.b16 %v386
    %v1306 = vunpack.c.l.b16 %v387
    %v1307 = vunpack.c.h.b16 %v387
    %v1308 = vunpack.c.l.b16 %v388
    %v1309 = vunpack.c.h.b16 %v388
    %v1310 = vunpack.c.l.b16 %v389
    %v1311 = vunpack.c.l.b16 %v390
    %v1312 = vunpack.c.h.b16 %v390
    %v1313 = vunpack.c.l.b16 %v391
    %v1314 = vunpack.c.h.b16 %v391
    %v1315 = vunpack.c.l.b16 %v392
    %v1316 = vunpack.c.l.b16 %v393
    %v1317 = vunpack.c.h.b16 %v393
    %v1318 = vunpack.c.l.b16 %v394
    %v1319 = vunpack.c.h.b16 %v394
    %v1320 = vunpack.c.l.b16 %v395
    %v1321 = vunpack.c.l.b16 %v396
    %v1322 = vunpack.c.h.b16 %v396
    %v1323 = vunpack.c.l.b16 %v397
    %v1324 = vunpack.c.h.b16 %v397
    %v1325 = vunpack.c.l.b16 %v398
    %v1326 = vunpack.c.l.b16 %v399
    %v1327 = vunpack.c.h.b16 %v399
    %v1328 = vunpack.c.l.b16 %v400
    %v1329 = vunpack.c.h.b16 %v400
    %v1330 = vunpack.c.l.b16 %v401
    %v1331 = vunpack.c.l.b16 %v402
    %v1332 = vunpack.c.h.b16 %v402
    %v1333 = vunpack.c.l.b16 %v403
    %v1334 = vunpack.c.h.b16 %v403
    %v1335 = vunpack.c.l.b16 %v404
    %v1336 = vunpack.c.l.b16 %v405
    %v1337 = vunpack.c.h.b16 %v405
    %v1338 = vunpack.c.l.b16 %v406
    %v1339 = vunpack.c.h.b16 %v406
    %v1340 = vunpack.c.l.b16 %v407
    %v1341 = vunpack.c.l.b16 %v408
    %v1342 = vunpack.c.h.b16 %v408
    %v1343 = vunpack.c.l.b16 %v409
    %v1344 = vunpack.c.h.b16 %v409
    %v1345 = vunpack.c.l.b16 %v410
    %v1346 = vunpack.c.l.b16 %v411
    %v1347 = vunpack.c.h.b16 %v411
    %v1348 = vunpack.c.l.b16 %v412
    %v1349 = vunpack.c.h.b16 %v412
    %v1350 = vunpack.c.l.b16 %v413
    %v1351 = vunpack.c.l.b16 %v414
    %v1352 = vunpack.c.h.b16 %v414
    %v1353 = vunpack.c.l.b16 %v415
    %v1354 = vunpack.c.h.b16 %v415
    %v1355 = vunpack.c.l.b16 %v416
    %v1356 = vunpack.c.l.b16 %v417
    %v1357 = vunpack.c.h.b16 %v417
    %v1358 = vunpack.c.l.b16 %v418
    %v1359 = vunpack.c.h.b16 %v418
    %v1360 = vunpack.c.l.b16 %v419
    %v1361 = vunpack.c.l.b16 %v420
    %v1362 = vunpack.c.h.b16 %v420
    %v1363 = vunpack.c.l.b16 %v421
    %v1364 = vunpack.c.h.b16 %v421
    %v1365 = vunpack.c.l.b16 %v422
    %v1366 = vunpack.c.l.b16 %v423
    %v1367 = vunpack.c.h.b16 %v423
    %v1368 = vunpack.c.l.b16 %v424
    %v1369 = vunpack.c.h.b16 %v424
    %v1370 = vunpack.c.l.b16 %v425
    %v1371 = vunpack.c.l.b16 %v426
    %v1372 = vunpack.c.h.b16 %v426
    %v1373 = vunpack.c.l.b16 %v427
    %v1374 = vunpack.c.h.b16 %v427
    %v1375 = vunpack.c.l.b16 %v428
    %v1376 = vunpack.c.l.b16 %v429
    %v1377 = vunpack.c.h.b16 %v429
    %v1378 = vunpack.c.l.b16 %v430
    %v1379 = vunpack.c.h.b16 %v430
    %v1380 = vunpack.c.l.b16 %v431
    %v1381 = vunpack.c.l.b16 %v432
    %v1382 = vunpack.c.h.b16 %v432
    %v1383 = vunpack.c.l.b16 %v433
    %v1384 = vunpack.c.h.b16 %v433
    %v1385 = vunpack.c.l.b16 %v434
    %v1386 = vunpack.c.l.b16 %v435
    %v1387 = vunpack.c.h.b16 %v435
    %v1388 = vunpack.c.l.b16 %v436
    %v1389 = vunpack.c.h.b16 %v436
    %v1390 = vunpack.c.l.b16 %v437
    %v1391 = vunpack.c.l.b16 %v438
    %v1392 = vunpack.c.h.b16 %v438
    %v1393 = vunpack.c.l.b16 %v439
    %v1394 = vunpack.c.h.b16 %v439
    %v1395 = vunpack.c.l.b16 %v440
    %v1396 = vunpack.c.l.b16 %v441
    %v1397 = vunpack.c.h.b16 %v441
    %v1398 = vunpack.c.l.b16 %v442
    %v1399 = vunpack.c.h.b16 %v442
    %v1400 = vunpack.c.l.b16 %v443
    %v1401 = vunpack.c.l.b16 %v444
    %v1402 = vunpack.c.h.b16 %v444
    %v1403 = vunpack.c.l.b16 %v445
    %v1404 = vunpack.c.h.b16 %v445
    %v1405 = vunpack.c.l.b16 %v446
    %v1406 = vpack.c.b16 %v851, %v846
    %v1407 = vpack.c.b16 %v852, %v847
    %v1408 = vpack.c.b16 %v853, %v848
    %v1409 = vpack.c.b16 %v854, %v849
    %v1410 = vpack.c.b16 %v855, %v850
    %v1411 = vpack.c.b16 %v861, %v856
    %v1412 = vpack.c.b16 %v862, %v857
    %v1413 = vpack.c.b16 %v863, %v858
    %v1414 = vpack.c.b16 %v864, %v859
    %v1415 = vpack.c.b16 %v865, %v860
    %v1416 = vpack.c.b16 %v871, %v866
    %v1417 = vpack.c.b16 %v872, %v867
    %v1418 = vpack.c.b16 %v873, %v868
    %v1419 = vpack.c.b16 %v874, %v869
    %v1420 = vpack.c.b16 %v875, %v870
    %v1421 = vpack.c.b16 %v881, %v876
    %v1422 = vpack.c.b16 %v882, %v877
    %v1423 = vpack.c.b16 %v883, %v878
    %v1424 = vpack.c.b16 %v884, %v879
    %v1425 = vpack.c.b16 %v885, %v880
    %v1426 = vpack.c.b16 %v891, %v886
    %v1427 = vpack.c.b16 %v892, %v887
    %v1428 = vpack.c.b16 %v893, %v888
    %v1429 = vpack.c.b16 %v894, %v889
    %v1430 = vpack.c.b16 %v895, %v890
    %v1431 = vpack.c.b16 %v901, %v896
    %v1432 = vpack.c.b16 %v902, %v897
    %v1433 = vpack.c.b16 %v903, %v898
    %v1434 = vpack.c.b16 %v904, %v899
    %v1435 = vpack.c.b16 %v905, %v900
    %v1436 = vpack.c.b16 %v911, %v906
    %v1437 = vpack.c.b16 %v912, %v907
    %v1438 = vpack.c.b16 %v913, %v908
    %v1439 = vpack.c.b16 %v914, %v909
    %v1440 = vpack.c.b16 %v915, %v910
    %v1441 = vpack.c.b16 %v921, %v916
    %v1442 = vpack.c.b16 %v922, %v917
    %v1443 = vpack.c.b16 %v923, %v918
    %v1444 = vpack.c.b16 %v924, %v919
    %v1445 = vpack.c.b16 %v925, %v920
    %v1446 = vpack.c.b16 %v931, %v926
    %v1447 = vpack.c.b16 %v932, %v927
    %v1448 = vpack.c.b16 %v933, %v928
    %v1449 = vpack.c.b16 %v934, %v929
    %v1450 = vpack.c.b16 %v935, %v930
    %v1451 = vpack.c.b16 %v941, %v936
    %v1452 = vpack.c.b16 %v942, %v937
    %v1453 = vpack.c.b16 %v943, %v938
    %v1454 = vpack.c.b16 %v944, %v939
    %v1455 = vpack.c.b16 %v945, %v940
    %v1456 = vpack.c.b16 %v951, %v946
    %v1457 = vpack.c.b16 %v952, %v947
    %v1458 = vpack.c.b16 %v953, %v948
    %v1459 = vpack.c.b16 %v954, %v949
    %v1460 = vpack.c.b16 %v955, %v950
    %v1461 = vpack.c.b16 %v961, %v956
    %v1462 = vpack.c.b16 %v962, %v957
    %v1463 = vpack.c.b16 %v963, %v958
    %v1464 = vpack.c.b16 %v964, %v959
    %v1465 = vpack.c.b16 %v965, %v960
    %v1466 = vpack.c.b16 %v971, %v966
    %v1467 = vpack.c.b16 %v972, %v967
    %v1468 = vpack.c.b16 %v973, %v968
    %v1469 = vpack.c.b16 %v974, %v969
    %v1470 = vpack.c.b16 %v975, %v970
    %v1471 = vpack.c.b16 %v981, %v976
    %v1472 = vpack.c.b16 %v982, %v977
    %v1473 = vpack.c.b16 %v983, %v978
    %v1474 = vpack.c.b16 %v984, %v979
    %v1475 = vpack.c.b16 %v985, %v980
    %v1476 = vpack.c.b16 %v991, %v986
    %v1477 = vpack.c.b16 %v992, %v987
    %v1478 = vpack.c.b16 %v993, %v988
    %v1479 = vpack.c.b16 %v994, %v989
    %v1480 = vpack.c.b16 %v995, %v990
    %v1481 = vpack.c.b16 %v1001, %v996
    %v1482 = vpack.c.b16 %v1002, %v997
    %v1483 = vpack.c.b16 %v1003, %v998
    %v1484 = vpack.c.b16 %v1004, %v999
    %v1485 = vpack.c.b16 %v1005, %v1000
    %v1486 = vpack.c.b16 %v1011, %v1006
    %v1487 = vpack.c.b16 %v1012, %v1007
    %v1488 = vpack.c.b16 %v1013, %v1008
    %v1489 = vpack.c.b16 %v1014, %v1009
    %v1490 = vpack.c.b16 %v1015, %v1010
    %v1491 = vpack.c.b16 %v1021, %v1016
    %v1492 = vpack.c.b16 %v1022, %v1017
    %v1493 = vpack.c.b16 %v1023, %v1018
    %v1494 = vpack.c.b16 %v1024, %v1019
    %v1495 = vpack.c.b16 %v1025, %v1020
    %v1496 = vpack.c.b16 %v1031, %v1026
    %v1497 = vpack.c.b16 %v1032, %v1027
    %v1498 = vpack.c.b16 %v1033, %v1028
    %v1499 = vpack.c.b16 %v1034, %v1029
    %v1500 = vpack.c.b16 %v1035, %v1030
    %v1501 = vpack.c.b16 %v1041, %v1036
    %v1502 = vpack.c.b16 %v1042, %v1037
    %v1503 = vpack.c.b16 %v1043, %v1038
    %v1504 = vpack.c.b16 %v1044, %v1039
    %v1505 = vpack.c.b16 %v1045, %v1040
    %v1506 = vpack.c.b16 %v1051, %v1046
    %v1507 = vpack.c.b16 %v1052, %v1047
    %v1508 = vpack.c.b16 %v1053, %v1048
    %v1509 = vpack.c.b16 %v1054, %v1049
    %v1510 = vpack.c.b16 %v1055, %v1050
    %v1511 = vpack.c.b16 %v1061, %v1056
    %v1512 = vpack.c.b16 %v1062, %v1057
    %v1513 = vpack.c.b16 %v1063, %v1058
    %v1514 = vpack.c.b16 %v1064, %v1059
    %v1515 = vpack.c.b16 %v1065, %v1060
    %v1516 = vpack.c.b16 %v1071, %v1066
    %v1517 = vpack.c.b16 %v1072, %v1067
    %v1518 = vpack.c.b16 %v1073, %v1068
    %v1519 = vpack.c.b16 %v1074, %v1069
    %v1520 = vpack.c.b16 %v1075, %v1070
    %v1521 = vpack.c.b16 %v1081, %v1076
    %v1522 = vpack.c.b16 %v1082, %v1077
    %v1523 = vpack.c.b16 %v1083, %v1078
    %v1524 = vpack.c.b16 %v1084, %v1079
    %v1525 = vpack.c.b16 %v1085, %v1080
    %v1526 = vpack.c.b16 %v1091, %v1086
    %v1527 = vpack.c.b16 %v1092, %v1087
    %v1528 = vpack.c.b16 %v1093, %v1088
    %v1529 = vpack.c.b16 %v1094, %v1089
    %v1530 = vpack.c.b16 %v1095, %v1090
    %v1531 = vpack.c.b16 %v1101, %v1096
    %v1532 = vpack.c.b16 %v1102, %v1097
    %v1533 = vpack.c.b16 %v1103, %v1098
    %v1534 = vpack.c.b16 %v1104, %v1099
    %v1535 = vpack.c.b16 %v1105, %v1100
    %v1536 = vpack.c.b16 %v1111, %v1106
    %v1537 = vpack.c.b16 %v1112, %v1107
    %v1538 = vpack.c.b16 %v1113, %v1108
    %v1539 = vpack.c.b16 %v1114, %v1109
    %v1540 = vpack.c.b16 %v1115, %v1110
    %v1541 = vpack.c.b16 %v1121, %v1116
    %v1542 = vpack.c.b16 %v1122, %v1117
    %v1543 = vpack.c.b16 %v1123, %v1118
    %v1544 = vpack.c.b16 %v1124, %v1119
    %v1545 = vpack.c.b16 %v1125, %v1120
    %v1546 = vpack.c.b16 %v1131, %v1126
    %v1547 = vpack.c.b16 %v1132, %v1127
    %v1548 = vpack.c.b16 %v1133, %v1128
    %v1549 = vpack.c.b16 %v1134, %v1129
    %v1550 = vpack.c.b16 %v1135, %v1130
    %v1551 = vpack.c.b16 %v1141, %v1136
    %v1552 = vpack.c.b16 %v1142, %v1137
    %v1553 = vpack.c.b16 %v1143, %v1138
    %v1554 = vpack.c.b16 %v1144, %v1139
    %v1555 = vpack.c.b16 %v1145, %v1140
    %v1556 = vpack.c.b16 %v1151, %v1146
    %v1557 = vpack.c.b16 %v1152, %v1147
    %v1558 = vpack.c.b16 %v1153, %v1148
    %v1559 = vpack.c.b16 %v1154, %v1149
    %v1560 = vpack.c.b16 %v1155, %v1150
    %v1561 = vpack.c.b16 %v1161, %v1156
    %v1562 = vpack.c.b16 %v1162, %v1157
    %v1563 = vpack.c.b16 %v1163, %v1158
    %v1564 = vpack.c.b16 %v1164, %v1159
    %v1565 = vpack.c.b16 %v1165, %v1160
    %v1566 = vpack.c.b16 %v1171, %v1166
    %v1567 = vpack.c.b16 %v1172, %v1167
    %v1568 = vpack.c.b16 %v1173, %v1168
    %v1569 = vpack.c.b16 %v1174, %v1169
    %v1570 = vpack.c.b16 %v1175, %v1170
    %v1571 = vpack.c.b16 %v1181, %v1176
    %v1572 = vpack.c.b16 %v1182, %v1177
    %v1573 = vpack.c.b16 %v1183, %v1178
    %v1574 = vpack.c.b16 %v1184, %v1179
    %v1575 = vpack.c.b16 %v1185, %v1180
    %v1576 = vpack.c.b16 %v1191, %v1186
    %v1577 = vpack.c.b16 %v1192, %v1187
    %v1578 = vpack.c.b16 %v1193, %v1188
    %v1579 = vpack.c.b16 %v1194, %v1189
    %v1580 = vpack.c.b16 %v1195, %v1190
    %v1581 = vpack.c.b16 %v1201, %v1196
    %v1582 = vpack.c.b16 %v1202, %v1197
    %v1583 = vpack.c.b16 %v1203, %v1198
    %v1584 = vpack.c.b16 %v1204, %v1199
    %v1585 = vpack.c.b16 %v1205, %v1200
    %v1586 = vpack.c.b16 %v1211, %v1206
    %v1587 = vpack.c.b16 %v1212, %v1207
    %v1588 = vpack.c.b16 %v1213, %v1208
    %v1589 = vpack.c.b16 %v1214, %v1209
    %v1590 = vpack.c.b16 %v1215, %v1210
    %v1591 = vpack.c.b16 %v1221, %v1216
    %v1592 = vpack.c.b16 %v1222, %v1217
    %v1593 = vpack.c.b16 %v1223, %v1218
    %v1594 = vpack.c.b16 %v1224, %v1219
    %v1595 = vpack.c.b16 %v1225, %v1220
    %v1596 = vpack.c.b16 %v1231, %v1226
    %v1597 = vpack.c.b16 %v1232, %v1227
    %v1598 = vpack.c.b16 %v1233, %v1228
    %v1599 = vpack.c.b16 %v1234, %v1229
    %v1600 = vpack.c.b16 %v1235, %v1230
    %v1601 = vpack.c.b16 %v1241, %v1236
    %v1602 = vpack.c.b16 %v1242, %v1237
    %v1603 = vpack.c.b16 %v1243, %v1238
    %v1604 = vpack.c.b16 %v1244, %v1239
    %v1605 = vpack.c.b16 %v1245, %v1240
    %v1606 = vpack.c.b16 %v1251, %v1246
    %v1607 = vpack.c.b16 %v1252, %v1247
    %v1608 = vpack.c.b16 %v1253, %v1248
    %v1609 = vpack.c.b16 %v1254, %v1249
    %v1610 = vpack.c.b16 %v1255, %v1250
    %v1611 = vpack.c.b16 %v1261, %v1256
    %v1612 = vpack.c.b16 %v1262, %v1257
    %v1613 = vpack.c.b16 %v1263, %v1258
    %v1614 = vpack.c.b16 %v1264, %v1259
    %v1615 = vpack.c.b16 %v1265, %v1260
    %v1616 = vpack.c.b16 %v1271, %v1266
    %v1617 = vpack.c.b16 %v1272, %v1267
    %v1618 = vpack.c.b16 %v1273, %v1268
    %v1619 = vpack.c.b16 %v1274, %v1269
    %v1620 = vpack.c.b16 %v1275, %v1270
    %v1621 = vpack.c.b16 %v1281, %v1276
    %v1622 = vpack.c.b16 %v1282, %v1277
    %v1623 = vpack.c.b16 %v1283, %v1278
    %v1624 = vpack.c.b16 %v1284, %v1279
    %v1625 = vpack.c.b16 %v1285, %v1280
    %v1626 = vpack.c.b16 %v1291, %v1286
    %v1627 = vpack.c.b16 %v1292, %v1287
    %v1628 = vpack.c.b16 %v1293, %v1288
    %v1629 = vpack.c.b16 %v1294, %v1289
    %v1630 = vpack.c.b16 %v1295, %v1290
    %v1631 = vpack.c.b16 %v1301, %v1296
    %v1632 = vpack.c.b16 %v1302, %v1297
    %v1633 = vpack.c.b16 %v1303, %v1298
    %v1634 = vpack.c.b16 %v1304, %v1299
    %v1635 = vpack.c.b16 %v1305, %v1300
    %v1636 = vpack.c.b16 %v1311, %v1306
    %v1637 = vpack.c.b16 %v1312, %v1307
    %v1638 = vpack.c.b16 %v1313, %v1308
    %v1639 = vpack.c.b16 %v1314, %v1309
    %v1640 = vpack.c.b16 %v1315, %v1310
    %v1641 = vpack.c.b16 %v1321, %v1316
    %v1642 = vpack.c.b16 %v1322, %v1317
    %v1643 = vpack.c.b16 %v1323, %v1318
    %v1644 = vpack.c.b16 %v1324, %v1319
    %v1645 = vpack.c.b16 %v1325, %v1320
    %v1646 = vpack.c.b16 %v1331, %v1326
    %v1647 = vpack.c.b16 %v1332, %v1327
    %v1648 = vpack.c.b16 %v1333, %v1328
    %v1649 = vpack.c.b16 %v1334, %v1329
    %v1650 = vpack.c.b16 %v1335, %v1330
    %v1651 = vpack.c.b16 %v1341, %v1336
    %v1652 = vpack.c.b16 %v1342, %v1337
    %v1653 = vpack.c.b16 %v1343, %v1338
    %v1654 = vpack.c.b16 %v1344, %v1339
    %v1655 = vpack.c.b16 %v1345, %v1340
    %v1656 = vpack.c.b16 %v1351, %v1346
    %v1657 = vpack.c.b16 %v1352, %v1347
    %v1658 = vpack.c.b16 %v1353, %v1348
    %v1659 = vpack.c.b16 %v1354, %v1349
    %v1660 = vpack.c.b16 %v1355, %v1350
    %v1661 = vpack.c.b16 %v1361, %v1356
    %v1662 = vpack.c.b16 %v1362, %v1357
    %v1663 = vpack.c.b16 %v1363, %v1358
    %v1664 = vpack.c.b16 %v1364, %v1359
    %v1665 = vpack.c.b16 %v1365, %v1360
    %v1666 = vpack.c.b16 %v1371, %v1366
    %v1667 = vpack.c.b16 %v1372, %v1367
    %v1668 = vpack.c.b16 %v1373, %v1368
    %v1669 = vpack.c.b16 %v1374, %v1369
    %v1670 = vpack.c.b16 %v1375, %v1370
    %v1671 = vpack.c.b16 %v1381, %v1376
    %v1672 = vpack.c.b16 %v1382, %v1377
    %v1673 = vpack.c.b16 %v1383, %v1378
    %v1674 = vpack.c.b16 %v1384, %v1379
    %v1675 = vpack.c.b16 %v1385, %v1380
    %v1676 = vpack.c.b16 %v1391, %v1386
    %v1677 = vpack.c.b16 %v1392, %v1387
    %v1678 = vpack.c.b16 %v1393, %v1388
    %v1679 = vpack.c.b16 %v1394, %v1389
    %v1680 = vpack.c.b16 %v1395, %v1390
    %v1681 = vpack.c.b16 %v1401, %v1396
    %v1682 = vpack.c.b16 %v1402, %v1397
    %v1683 = vpack.c.b16 %v1403, %v1398
    %v1684 = vpack.c.b16 %v1404, %v1399
    %v1685 = vpack.c.b16 %v1405, %v1400
    %1966 = vmatprep.subr.bf16.mxu0 %v1407
    %1967 = vmatpush1.bf16.msra.mxu0 %v1406
    %1968 = vmatprep.subr.bf16.mxu0 %v1412
    %1969 = vmatpush1.bf16.msra.mxu0 %v1411
    %1970 = vmatprep.subr.bf16.mxu0 %v1417
    %1971 = vmatpush1.bf16.msra.mxu0 %v1416
    %1972 = vmatprep.subr.bf16.mxu0 %v1422
    %1973 = vmatpush1.bf16.msra.mxu0 %v1421
    %1974 = vmatprep.subr.bf16.mxu0 %v1427
    %1975 = vmatpush1.bf16.msra.mxu0 %v1426
    %1976 = vmatprep.subr.bf16.mxu0 %v1432
    %1977 = vmatpush1.bf16.msra.mxu0 %v1431
    %1978 = vmatprep.subr.bf16.mxu0 %v1437
    %1979 = vmatpush1.bf16.msra.mxu0 %v1436
    %1980 = vmatprep.subr.bf16.mxu0 %v1442
    %1981 = vmatpush1.bf16.msra.mxu0 %v1441
    %1982 = vmatprep.subr.bf16.mxu0 %v1447
    %1983 = vmatpush1.bf16.msra.mxu0 %v1446
    %1984 = vmatprep.subr.bf16.mxu0 %v1452
    %1985 = vmatpush1.bf16.msra.mxu0 %v1451
    %1986 = vmatprep.subr.bf16.mxu0 %v1457
    %1987 = vmatpush1.bf16.msra.mxu0 %v1456
    %1988 = vmatprep.subr.bf16.mxu0 %v1462
    %1989 = vmatpush1.bf16.msra.mxu0 %v1461
    %1990 = vmatprep.subr.bf16.mxu0 %v1467
    %1991 = vmatpush1.bf16.msra.mxu0 %v1466
    %1992 = vmatprep.subr.bf16.mxu0 %v1472
    %1993 = vmatpush1.bf16.msra.mxu0 %v1471
    %1994 = vmatprep.subr.bf16.mxu0 %v1477
    %1995 = vmatpush1.bf16.msra.mxu0 %v1476
    %1996 = vmatprep.subr.bf16.mxu0 %v1482
    %1997 = vmatpush1.bf16.msra.mxu0 %v1481
    %1998 = vmatprep.mubr.bf16.mxu0 %v497
    %1999 = vmatmul.mubr.bf16.gmra.mrb[0].mxu0 %v496
    %v2000 = vpop.f32.mrb[0].mxu0
    %v2001 = vadd.f32 %v452, %v2000
    %v2002 = vpop.f32.mrb[0].mxu0
    %v2003 = vadd.f32 %v456, %v2002
    %v2004 = vpop.f32.mrb[0].mxu0
    %v2005 = vadd.f32 %v452, %v2004
    %v2006 = vpop.f32.mrb[0].mxu0
    %v2007 = vadd.f32 %v456, %v2006
    %2008 = vdwg.mxu0
    %2009 = vmatprep.subr.bf16.mxu0 %v1487
    %2010 = vmatpush1.bf16.msra.mxu0 %v1486
    %2011 = vmatprep.subr.bf16.mxu0 %v1492
    %2012 = vmatpush1.bf16.msra.mxu0 %v1491
    %2013 = vmatprep.subr.bf16.mxu0 %v1497
    %2014 = vmatpush1.bf16.msra.mxu0 %v1496
    %2015 = vmatprep.subr.bf16.mxu0 %v1502
    %2016 = vmatpush1.bf16.msra.mxu0 %v1501
    %2017 = vmatprep.subr.bf16.mxu0 %v1507
    %2018 = vmatpush1.bf16.msra.mxu0 %v1506
    %2019 = vmatprep.subr.bf16.mxu0 %v1512
    %2020 = vmatpush1.bf16.msra.mxu0 %v1511
    %2021 = vmatprep.subr.bf16.mxu0 %v1517
    %2022 = vmatpush1.bf16.msra.mxu0 %v1516
    %2023 = vmatprep.subr.bf16.mxu0 %v1522
    %2024 = vmatpush1.bf16.msra.mxu0 %v1521
    %2025 = vmatprep.subr.bf16.mxu0 %v1527
    %2026 = vmatpush1.bf16.msra.mxu0 %v1526
    %2027 = vmatprep.subr.bf16.mxu0 %v1532
    %2028 = vmatpush1.bf16.msra.mxu0 %v1531
    %2029 = vmatprep.subr.bf16.mxu0 %v1537
    %2030 = vmatpush1.bf16.msra.mxu0 %v1536
    %2031 = vmatprep.subr.bf16.mxu0 %v1542
    %2032 = vmatpush1.bf16.msra.mxu0 %v1541
    %2033 = vmatprep.subr.bf16.mxu0 %v1547
    %2034 = vmatpush1.bf16.msra.mxu0 %v1546
    %2035 = vmatprep.subr.bf16.mxu0 %v1552
    %2036 = vmatpush1.bf16.msra.mxu0 %v1551
    %2037 = vmatprep.subr.bf16.mxu0 %v1557
    %2038 = vmatpush1.bf16.msra.mxu0 %v1556
    %2039 = vmatprep.subr.bf16.mxu0 %v1562
    %2040 = vmatpush1.bf16.msra.mxu0 %v1561
    %2041 = vmatprep.mubr.bf16.mxu0 %v499
    %2042 = vmatmul.mubr.bf16.gmra.mrb[0].mxu0 %v498
    %v2043 = vpop.f32.mrb[0].mxu0
    %v2044 = vadd.f32 %v2001, %v2043
    %v2045 = vpop.f32.mrb[0].mxu0
    %v2046 = vadd.f32 %v2003, %v2045
    %v2047 = vpop.f32.mrb[0].mxu0
    %v2048 = vadd.f32 %v2005, %v2047
    %v2049 = vpop.f32.mrb[0].mxu0
    %v2050 = vadd.f32 %v2007, %v2049
    %2051 = vdwg.mxu0
    %2052 = vmatprep.subr.bf16.mxu0 %v1567
    %2053 = vmatpush1.bf16.msra.mxu0 %v1566
    %2054 = vmatprep.subr.bf16.mxu0 %v1572
    %2055 = vmatpush1.bf16.msra.mxu0 %v1571
    %2056 = vmatprep.subr.bf16.mxu0 %v1577
    %2057 = vmatpush1.bf16.msra.mxu0 %v1576
    %2058 = vmatprep.subr.bf16.mxu0 %v1582
    %2059 = vmatpush1.bf16.msra.mxu0 %v1581
    %2060 = vmatprep.subr.bf16.mxu0 %v1587
    %2061 = vmatpush1.bf16.msra.mxu0 %v1586
    %2062 = vmatprep.subr.bf16.mxu0 %v1592
    %2063 = vmatpush1.bf16.msra.mxu0 %v1591
    %2064 = vmatprep.subr.bf16.mxu0 %v1597
    %2065 = vmatpush1.bf16.msra.mxu0 %v1596
    %2066 = vmatprep.subr.bf16.mxu0 %v1602
    %2067 = vmatpush1.bf16.msra.mxu0 %v1601
    %2068 = vmatprep.subr.bf16.mxu0 %v1607
    %2069 = vmatpush1.bf16.msra.mxu0 %v1606
    %2070 = vmatprep.subr.bf16.mxu0 %v1612
    %2071 = vmatpush1.bf16.msra.mxu0 %v1611
    %2072 = vmatprep.subr.bf16.mxu0 %v1617
    %2073 = vmatpush1.bf16.msra.mxu0 %v1616
    %2074 = vmatprep.subr.bf16.mxu0 %v1622
    %2075 = vmatpush1.bf16.msra.mxu0 %v1621
    %2076 = vmatprep.subr.bf16.mxu0 %v1627
    %2077 = vmatpush1.bf16.msra.mxu0 %v1626
    %2078 = vmatprep.subr.bf16.mxu0 %v1632
    %2079 = vmatpush1.bf16.msra.mxu0 %v1631
    %2080 = vmatprep.subr.bf16.mxu0 %v1637
    %2081 = vmatpush1.bf16.msra.mxu0 %v1636
    %2082 = vmatprep.subr.bf16.mxu0 %v1642
    %2083 = vmatpush1.bf16.msra.mxu0 %v1641
    %2084 = vmatprep.mubr.bf16.mxu0 %v501
    %2085 = vmatmul.mubr.bf16.gmra.mrb[0].mxu0 %v500
    %v2086 = vpop.f32.mrb[0].mxu0
    %v2087 = vadd.f32 %v2044, %v2086
    %v2088 = vpop.f32.mrb[0].mxu0
    %v2089 = vadd.f32 %v2046, %v2088
    %v2090 = vpop.f32.mrb[0].mxu0
    %v2091 = vadd.f32 %v2048, %v2090
    %v2092 = vpop.f32.mrb[0].mxu0
    %v2093 = vadd.f32 %v2050, %v2092
    %2094 = vdwg.mxu0
    %2095 = vmatprep.subr.bf16.mxu0 %v1647
    %2096 = vmatpush1.bf16.msra.mxu0 %v1646
    %2097 = vmatprep.subr.bf16.mxu0 %v1652
    %2098 = vmatpush1.bf16.msra.mxu0 %v1651
    %2099 = vmatprep.subr.bf16.mxu0 %v1657
    %2100 = vmatpush1.bf16.msra.mxu0 %v1656
    %2101 = vmatprep.subr.bf16.mxu0 %v1662
    %2102 = vmatpush1.bf16.msra.mxu0 %v1661
    %2103 = vmatprep.subr.bf16.mxu0 %v1667
    %2104 = vmatpush1.bf16.msra.mxu0 %v1666
    %2105 = vmatprep.subr.bf16.mxu0 %v1672
    %2106 = vmatpush1.bf16.msra.mxu0 %v1671
    %2107 = vmatprep.subr.bf16.mxu0 %v1677
    %2108 = vmatpush1.bf16.msra.mxu0 %v1676
    %2109 = vmatprep.subr.bf16.mxu0 %v1682
    %2110 = vmatpush1.bf16.msra.mxu0 %v1681
    %2111 = vmatprep.subr.bf16.mxu0 0
    %2112 = vmatpush1.bf16.msra.mxu0 0
    %2113 = vmatprep.subr.bf16.mxu0 0
    %2114 = vmatpush1.bf16.msra.mxu0 0
    %2115 = vmatprep.subr.bf16.mxu0 0
    %2116 = vmatpush1.bf16.msra.mxu0 0
    %2117 = vmatprep.subr.bf16.mxu0 0
    %2118 = vmatpush1.bf16.msra.mxu0 0
    %2119 = vmatprep.subr.bf16.mxu0 0
    %2120 = vmatpush1.bf16.msra.mxu0 0
    %2121 = vmatprep.subr.bf16.mxu0 0
    %2122 = vmatpush1.bf16.msra.mxu0 0
    %2123 = vmatprep.subr.bf16.mxu0 0
    %2124 = vmatpush1.bf16.msra.mxu0 0
    %2125 = vmatprep.subr.bf16.mxu0 0
    %2126 = vmatpush1.bf16.msra.mxu0 0
    %2127 = vmatprep.mubr.bf16.mxu0 0
    %2128 = vmatmul.mubr.bf16.gmra.mrb[0].mxu0 %v502
    %v2129 = vpop.f32.mrb[0].mxu0
    %v2130 = vadd.f32 %v2087, %v2129
    %v2131 = vpop.f32.mrb[0].mxu0
    %v2132 = vadd.f32 %v2089, %v2131
    %v2133 = vpop.f32.mrb[0].mxu0
    %v2134 = vadd.f32 %v2091, %v2133
    %v2135 = vpop.f32.mrb[0].mxu0
    %v2136 = vadd.f32 %v2093, %v2135
    %2137 = vdwg.mxu0
    %2138 = vmatprep.subr.bf16.mxu0 %v1409
    %2139 = vmatpush1.bf16.msra.mxu0 %v1408
    %2140 = vmatprep.subr.bf16.mxu0 %v1414
    %2141 = vmatpush1.bf16.msra.mxu0 %v1413
    %2142 = vmatprep.subr.bf16.mxu0 %v1419
    %2143 = vmatpush1.bf16.msra.mxu0 %v1418
    %2144 = vmatprep.subr.bf16.mxu0 %v1424
    %2145 = vmatpush1.bf16.msra.mxu0 %v1423
    %2146 = vmatprep.subr.bf16.mxu0 %v1429
    %2147 = vmatpush1.bf16.msra.mxu0 %v1428
    %2148 = vmatprep.subr.bf16.mxu0 %v1434
    %2149 = vmatpush1.bf16.msra.mxu0 %v1433
    %2150 = vmatprep.subr.bf16.mxu0 %v1439
    %2151 = vmatpush1.bf16.msra.mxu0 %v1438
    %2152 = vmatprep.subr.bf16.mxu0 %v1444
    %2153 = vmatpush1.bf16.msra.mxu0 %v1443
    %2154 = vmatprep.subr.bf16.mxu0 %v1449
    %2155 = vmatpush1.bf16.msra.mxu0 %v1448
    %2156 = vmatprep.subr.bf16.mxu0 %v1454
    %2157 = vmatpush1.bf16.msra.mxu0 %v1453
    %2158 = vmatprep.subr.bf16.mxu0 %v1459
    %2159 = vmatpush1.bf16.msra.mxu0 %v1458
    %2160 = vmatprep.subr.bf16.mxu0 %v1464
    %2161 = vmatpush1.bf16.msra.mxu0 %v1463
    %2162 = vmatprep.subr.bf16.mxu0 %v1469
    %2163 = vmatpush1.bf16.msra.mxu0 %v1468
    %2164 = vmatprep.subr.bf16.mxu0 %v1474
    %2165 = vmatpush1.bf16.msra.mxu0 %v1473
    %2166 = vmatprep.subr.bf16.mxu0 %v1479
    %2167 = vmatpush1.bf16.msra.mxu0 %v1478
    %2168 = vmatprep.subr.bf16.mxu0 %v1484
    %2169 = vmatpush1.bf16.msra.mxu0 %v1483
    %2170 = vmatprep.mubr.bf16.mxu0 %v497
    %2171 = vmatmul.mubr.bf16.gmra.mrb[0].mxu0 %v496
    %v2172 = vpop.f32.mrb[0].mxu0
    %v2173 = vadd.f32 %v460, %v2172
    %v2174 = vpop.f32.mrb[0].mxu0
    %v2175 = vadd.f32 %v464, %v2174
    %v2176 = vpop.f32.mrb[0].mxu0
    %v2177 = vadd.f32 %v460, %v2176
    %v2178 = vpop.f32.mrb[0].mxu0
    %v2179 = vadd.f32 %v464, %v2178
    %2180 = vdwg.mxu0
    %2181 = vmatprep.subr.bf16.mxu0 %v1489
    %2182 = vmatpush1.bf16.msra.mxu0 %v1488
    %2183 = vmatprep.subr.bf16.mxu0 %v1494
    %2184 = vmatpush1.bf16.msra.mxu0 %v1493
    %2185 = vmatprep.subr.bf16.mxu0 %v1499
    %2186 = vmatpush1.bf16.msra.mxu0 %v1498
    %2187 = vmatprep.subr.bf16.mxu0 %v1504
    %2188 = vmatpush1.bf16.msra.mxu0 %v1503
    %2189 = vmatprep.subr.bf16.mxu0 %v1509
    %2190 = vmatpush1.bf16.msra.mxu0 %v1508
    %2191 = vmatprep.subr.bf16.mxu0 %v1514
    %2192 = vmatpush1.bf16.msra.mxu0 %v1513
    %2193 = vmatprep.subr.bf16.mxu0 %v1519
    %2194 = vmatpush1.bf16.msra.mxu0 %v1518
    %2195 = vmatprep.subr.bf16.mxu0 %v1524
    %2196 = vmatpush1.bf16.msra.mxu0 %v1523
    %2197 = vmatprep.subr.bf16.mxu0 %v1529
    %2198 = vmatpush1.bf16.msra.mxu0 %v1528
    %2199 = vmatprep.subr.bf16.mxu0 %v1534
    %2200 = vmatpush1.bf16.msra.mxu0 %v1533
    %2201 = vmatprep.subr.bf16.mxu0 %v1539
    %2202 = vmatpush1.bf16.msra.mxu0 %v1538
    %2203 = vmatprep.subr.bf16.mxu0 %v1544
    %2204 = vmatpush1.bf16.msra.mxu0 %v1543
    %2205 = vmatprep.subr.bf16.mxu0 %v1549
    %2206 = vmatpush1.bf16.msra.mxu0 %v1548
    %2207 = vmatprep.subr.bf16.mxu0 %v1554
    %2208 = vmatpush1.bf16.msra.mxu0 %v1553
    %2209 = vmatprep.subr.bf16.mxu0 %v1559
    %2210 = vmatpush1.bf16.msra.mxu0 %v1558
    %2211 = vmatprep.subr.bf16.mxu0 %v1564
    %2212 = vmatpush1.bf16.msra.mxu0 %v1563
    %2213 = vmatprep.mubr.bf16.mxu0 %v499
    %2214 = vmatmul.mubr.bf16.gmra.mrb[0].mxu0 %v498
    %v2215 = vpop.f32.mrb[0].mxu0
    %v2216 = vadd.f32 %v2173, %v2215
    %v2217 = vpop.f32.mrb[0].mxu0
    %v2218 = vadd.f32 %v2175, %v2217
    %v2219 = vpop.f32.mrb[0].mxu0
    %v2220 = vadd.f32 %v2177, %v2219
    %v2221 = vpop.f32.mrb[0].mxu0
    %v2222 = vadd.f32 %v2179, %v2221
    %2223 = vdwg.mxu0
    %2224 = vmatprep.subr.bf16.mxu0 %v1569
    %2225 = vmatpush1.bf16.msra.mxu0 %v1568
    %2226 = vmatprep.subr.bf16.mxu0 %v1574
    %2227 = vmatpush1.bf16.msra.mxu0 %v1573
    %2228 = vmatprep.subr.bf16.mxu0 %v1579
    %2229 = vmatpush1.bf16.msra.mxu0 %v1578
    %2230 = vmatprep.subr.bf16.mxu0 %v1584
    %2231 = vmatpush1.bf16.msra.mxu0 %v1583
    %2232 = vmatprep.subr.bf16.mxu0 %v1589
    %2233 = vmatpush1.bf16.msra.mxu0 %v1588
    %2234 = vmatprep.subr.bf16.mxu0 %v1594
    %2235 = vmatpush1.bf16.msra.mxu0 %v1593
    %2236 = vmatprep.subr.bf16.mxu0 %v1599
    %2237 = vmatpush1.bf16.msra.mxu0 %v1598
    %2238 = vmatprep.subr.bf16.mxu0 %v1604
    %2239 = vmatpush1.bf16.msra.mxu0 %v1603
    %2240 = vmatprep.subr.bf16.mxu0 %v1609
    %2241 = vmatpush1.bf16.msra.mxu0 %v1608
    %2242 = vmatprep.subr.bf16.mxu0 %v1614
    %2243 = vmatpush1.bf16.msra.mxu0 %v1613
    %2244 = vmatprep.subr.bf16.mxu0 %v1619
    %2245 = vmatpush1.bf16.msra.mxu0 %v1618
    %2246 = vmatprep.subr.bf16.mxu0 %v1624
    %2247 = vmatpush1.bf16.msra.mxu0 %v1623
    %2248 = vmatprep.subr.bf16.mxu0 %v1629
    %2249 = vmatpush1.bf16.msra.mxu0 %v1628
    %2250 = vmatprep.subr.bf16.mxu0 %v1634
    %2251 = vmatpush1.bf16.msra.mxu0 %v1633
    %2252 = vmatprep.subr.bf16.mxu0 %v1639
    %2253 = vmatpush1.bf16.msra.mxu0 %v1638
    %2254 = vmatprep.subr.bf16.mxu0 %v1644
    %2255 = vmatpush1.bf16.msra.mxu0 %v1643
    %2256 = vmatprep.mubr.bf16.mxu0 %v501
    %2257 = vmatmul.mubr.bf16.gmra.mrb[0].mxu0 %v500
    %v2258 = vpop.f32.mrb[0].mxu0
    %v2259 = vadd.f32 %v2216, %v2258
    %v2260 = vpop.f32.mrb[0].mxu0
    %v2261 = vadd.f32 %v2218, %v2260
    %v2262 = vpop.f32.mrb[0].mxu0
    %v2263 = vadd.f32 %v2220, %v2262
    %v2264 = vpop.f32.mrb[0].mxu0
    %v2265 = vadd.f32 %v2222, %v2264
    %2266 = vdwg.mxu0
    %2267 = vmatprep.subr.bf16.mxu0 %v1649
    %2268 = vmatpush1.bf16.msra.mxu0 %v1648
    %2269 = vmatprep.subr.bf16.mxu0 %v1654
    %2270 = vmatpush1.bf16.msra.mxu0 %v1653
    %2271 = vmatprep.subr.bf16.mxu0 %v1659
    %2272 = vmatpush1.bf16.msra.mxu0 %v1658
    %2273 = vmatprep.subr.bf16.mxu0 %v1664
    %2274 = vmatpush1.bf16.msra.mxu0 %v1663
    %2275 = vmatprep.subr.bf16.mxu0 %v1669
    %2276 = vmatpush1.bf16.msra.mxu0 %v1668
    %2277 = vmatprep.subr.bf16.mxu0 %v1674
    %2278 = vmatpush1.bf16.msra.mxu0 %v1673
    %2279 = vmatprep.subr.bf16.mxu0 %v1679
    %2280 = vmatpush1.bf16.msra.mxu0 %v1678
    %2281 = vmatprep.subr.bf16.mxu0 %v1684
    %2282 = vmatpush1.bf16.msra.mxu0 %v1683
    %2283 = vmatprep.subr.bf16.mxu0 0
    %2284 = vmatpush1.bf16.msra.mxu0 0
    %2285 = vmatprep.subr.bf16.mxu0 0
    %2286 = vmatpush1.bf16.msra.mxu0 0
    %2287 = vmatprep.subr.bf16.mxu0 0
    %2288 = vmatpush1.bf16.msra.mxu0 0
    %2289 = vmatprep.subr.bf16.mxu0 0
    %2290 = vmatpush1.bf16.msra.mxu0 0
    %2291 = vmatprep.subr.bf16.mxu0 0
    %2292 = vmatpush1.bf16.msra.mxu0 0
    %2293 = vmatprep.subr.bf16.mxu0 0
    %2294 = vmatpush1.bf16.msra.mxu0 0
    %2295 = vmatprep.subr.bf16.mxu0 0
    %2296 = vmatpush1.bf16.msra.mxu0 0
    %2297 = vmatprep.subr.bf16.mxu0 0
    %2298 = vmatpush1.bf16.msra.mxu0 0
    %2299 = vmatprep.mubr.bf16.mxu0 0
    %2300 = vmatmul.mubr.bf16.gmra.mrb[0].mxu0 %v502
    %v2301 = vpop.f32.mrb[0].mxu0
    %v2302 = vadd.f32 %v2259, %v2301
    %v2303 = vpop.f32.mrb[0].mxu0
    %v2304 = vadd.f32 %v2261, %v2303
    %v2305 = vpop.f32.mrb[0].mxu0
    %v2306 = vadd.f32 %v2263, %v2305
    %v2307 = vpop.f32.mrb[0].mxu0
    %v2308 = vadd.f32 %v2265, %v2307
    %2309 = vdwg.mxu0
    %2310 = vmatprep.subr.bf16.mxu0 0
    %2311 = vmatpush1.bf16.msra.mxu0 %v1410
    %2312 = vmatprep.subr.bf16.mxu0 0
    %2313 = vmatpush1.bf16.msra.mxu0 %v1415
    %2314 = vmatprep.subr.bf16.mxu0 0
    %2315 = vmatpush1.bf16.msra.mxu0 %v1420
    %2316 = vmatprep.subr.bf16.mxu0 0
    %2317 = vmatpush1.bf16.msra.mxu0 %v1425
    %2318 = vmatprep.subr.bf16.mxu0 0
    %2319 = vmatpush1.bf16.msra.mxu0 %v1430
    %2320 = vmatprep.subr.bf16.mxu0 0
    %2321 = vmatpush1.bf16.msra.mxu0 %v1435
    %2322 = vmatprep.subr.bf16.mxu0 0
    %2323 = vmatpush1.bf16.msra.mxu0 %v1440
    %2324 = vmatprep.subr.bf16.mxu0 0
    %2325 = vmatpush1.bf16.msra.mxu0 %v1445
    %2326 = vmatprep.subr.bf16.mxu0 0
    %2327 = vmatpush1.bf16.msra.mxu0 %v1450
    %2328 = vmatprep.subr.bf16.mxu0 0
    %2329 = vmatpush1.bf16.msra.mxu0 %v1455
    %2330 = vmatprep.subr.bf16.mxu0 0
    %2331 = vmatpush1.bf16.msra.mxu0 %v1460
    %2332 = vmatprep.subr.bf16.mxu0 0
    %2333 = vmatpush1.bf16.msra.mxu0 %v1465
    %2334 = vmatprep.subr.bf16.mxu0 0
    %2335 = vmatpush1.bf16.msra.mxu0 %v1470
    %2336 = vmatprep.subr.bf16.mxu0 0
    %2337 = vmatpush1.bf16.msra.mxu0 %v1475
    %2338 = vmatprep.subr.bf16.mxu0 0
    %2339 = vmatpush1.bf16.msra.mxu0 %v1480
    %2340 = vmatprep.subr.bf16.mxu0 0
    %2341 = vmatpush1.bf16.msra.mxu0 %v1485
    %2342 = vmatprep.mubr.bf16.mxu0 %v497
    %2343 = vmatmul.mubr.bf16.gmra.mrb[0].mxu0 %v496
    %v2344 = vpop.f32.mrb[0].mxu0
    %v2345 = vadd.f32 %v468, %v2344
    %v2346 = vpop.f32.mrb[0].mxu0
    %v2347 = vpop.f32.mrb[0].mxu0
    %v2348 = vadd.f32 %v468, %v2347
    %v2349 = vpop.f32.mrb[0].mxu0
    %2350 = vdwg.mxu0
    %2351 = vmatprep.subr.bf16.mxu0 0
    %2352 = vmatpush1.bf16.msra.mxu0 %v1490
    %2353 = vmatprep.subr.bf16.mxu0 0
    %2354 = vmatpush1.bf16.msra.mxu0 %v1495
    %2355 = vmatprep.subr.bf16.mxu0 0
    %2356 = vmatpush1.bf16.msra.mxu0 %v1500
    %2357 = vmatprep.subr.bf16.mxu0 0
    %2358 = vmatpush1.bf16.msra.mxu0 %v1505
    %2359 = vmatprep.subr.bf16.mxu0 0
    %2360 = vmatpush1.bf16.msra.mxu0 %v1510
    %2361 = vmatprep.subr.bf16.mxu0 0
    %2362 = vmatpush1.bf16.msra.mxu0 %v1515
    %2363 = vmatprep.subr.bf16.mxu0 0
    %2364 = vmatpush1.bf16.msra.mxu0 %v1520
    %2365 = vmatprep.subr.bf16.mxu0 0
    %2366 = vmatpush1.bf16.msra.mxu0 %v1525
    %2367 = vmatprep.subr.bf16.mxu0 0
    %2368 = vmatpush1.bf16.msra.mxu0 %v1530
    %2369 = vmatprep.subr.bf16.mxu0 0
    %2370 = vmatpush1.bf16.msra.mxu0 %v1535
    %2371 = vmatprep.subr.bf16.mxu0 0
    %2372 = vmatpush1.bf16.msra.mxu0 %v1540
    %2373 = vmatprep.subr.bf16.mxu0 0
    %2374 = vmatpush1.bf16.msra.mxu0 %v1545
    %2375 = vmatprep.subr.bf16.mxu0 0
    %2376 = vmatpush1.bf16.msra.mxu0 %v1550
    %2377 = vmatprep.subr.bf16.mxu0 0
    %2378 = vmatpush1.bf16.msra.mxu0 %v1555
    %2379 = vmatprep.subr.bf16.mxu0 0
    %2380 = vmatpush1.bf16.msra.mxu0 %v1560
    %2381 = vmatprep.subr.bf16.mxu0 0
    %2382 = vmatpush1.bf16.msra.mxu0 %v1565
    %2383 = vmatprep.mubr.bf16.mxu0 %v499
    %2384 = vmatmul.mubr.bf16.gmra.mrb[0].mxu0 %v498
    %v2385 = vpop.f32.mrb[0].mxu0
    %v2386 = vadd.f32 %v2345, %v2385
    %v2387 = vpop.f32.mrb[0].mxu0
    %v2388 = vpop.f32.mrb[0].mxu0
    %v2389 = vadd.f32 %v2348, %v2388
    %v2390 = vpop.f32.mrb[0].mxu0
    %2391 = vdwg.mxu0
    %2392 = vmatprep.subr.bf16.mxu0 0
    %2393 = vmatpush1.bf16.msra.mxu0 %v1570
    %2394 = vmatprep.subr.bf16.mxu0 0
    %2395 = vmatpush1.bf16.msra.mxu0 %v1575
    %2396 = vmatprep.subr.bf16.mxu0 0
    %2397 = vmatpush1.bf16.msra.mxu0 %v1580
    %2398 = vmatprep.subr.bf16.mxu0 0
    %2399 = vmatpush1.bf16.msra.mxu0 %v1585
    %2400 = vmatprep.subr.bf16.mxu0 0
    %2401 = vmatpush1.bf16.msra.mxu0 %v1590
    %2402 = vmatprep.subr.bf16.mxu0 0
    %2403 = vmatpush1.bf16.msra.mxu0 %v1595
    %2404 = vmatprep.subr.bf16.mxu0 0
    %2405 = vmatpush1.bf16.msra.mxu0 %v1600
    %2406 = vmatprep.subr.bf16.mxu0 0
    %2407 = vmatpush1.bf16.msra.mxu0 %v1605
    %2408 = vmatprep.subr.bf16.mxu0 0
    %2409 = vmatpush1.bf16.msra.mxu0 %v1610
    %2410 = vmatprep.subr.bf16.mxu0 0
    %2411 = vmatpush1.bf16.msra.mxu0 %v1615
    %2412 = vmatprep.subr.bf16.mxu0 0
    %2413 = vmatpush1.bf16.msra.mxu0 %v1620
    %2414 = vmatprep.subr.bf16.mxu0 0
    %2415 = vmatpush1.bf16.msra.mxu0 %v1625
    %2416 = vmatprep.subr.bf16.mxu0 0
    %2417 = vmatpush1.bf16.msra.mxu0 %v1630
    %2418 = vmatprep.subr.bf16.mxu0 0
    %2419 = vmatpush1.bf16.msra.mxu0 %v1635
    %2420 = vmatprep.subr.bf16.mxu0 0
    %2421 = vmatpush1.bf16.msra.mxu0 %v1640
    %2422 = vmatprep.subr.bf16.mxu0 0
    %2423 = vmatpush1.bf16.msra.mxu0 %v1645
    %2424 = vmatprep.mubr.bf16.mxu0 %v501
    %2425 = vmatmul.mubr.bf16.gmra.mrb[0].mxu0 %v500
    %v2426 = vpop.f32.mrb[0].mxu0
    %v2427 = vadd.f32 %v2386, %v2426
    %v2428 = vpop.f32.mrb[0].mxu0
    %v2429 = vpop.f32.mrb[0].mxu0
    %v2430 = vadd.f32 %v2389, %v2429
    %v2431 = vpop.f32.mrb[0].mxu0
    %2432 = vdwg.mxu0
    %2433 = vmatprep.subr.bf16.mxu0 0
    %2434 = vmatpush1.bf16.msra.mxu0 %v1650
    %2435 = vmatprep.subr.bf16.mxu0 0
    %2436 = vmatpush1.bf16.msra.mxu0 %v1655
    %2437 = vmatprep.subr.bf16.mxu0 0
    %2438 = vmatpush1.bf16.msra.mxu0 %v1660
    %2439 = vmatprep.subr.bf16.mxu0 0
    %2440 = vmatpush1.bf16.msra.mxu0 %v1665
    %2441 = vmatprep.subr.bf16.mxu0 0
    %2442 = vmatpush1.bf16.msra.mxu0 %v1670
    %2443 = vmatprep.subr.bf16.mxu0 0
    %2444 = vmatpush1.bf16.msra.mxu0 %v1675
    %2445 = vmatprep.subr.bf16.mxu0 0
    %2446 = vmatpush1.bf16.msra.mxu0 %v1680
    %2447 = vmatprep.subr.bf16.mxu0 0
    %2448 = vmatpush1.bf16.msra.mxu0 %v1685
    %2449 = vmatprep.subr.bf16.mxu0 0
    %2450 = vmatpush1.bf16.msra.mxu0 0
    %2451 = vmatprep.subr.bf16.mxu0 0
    %2452 = vmatpush1.bf16.msra.mxu0 0
    %2453 = vmatprep.subr.bf16.mxu0 0
    %2454 = vmatpush1.bf16.msra.mxu0 0
    %2455 = vmatprep.subr.bf16.mxu0 0
    %2456 = vmatpush1.bf16.msra.mxu0 0
    %2457 = vmatprep.subr.bf16.mxu0 0
    %2458 = vmatpush1.bf16.msra.mxu0 0
    %2459 = vmatprep.subr.bf16.mxu0 0
    %2460 = vmatpush1.bf16.msra.mxu0 0
    %2461 = vmatprep.subr.bf16.mxu0 0
    %2462 = vmatpush1.bf16.msra.mxu0 0
    %2463 = vmatprep.subr.bf16.mxu0 0
    %2464 = vmatpush1.bf16.msra.mxu0 0
    %2465 = vmatprep.mubr.bf16.mxu0 0
    %2466 = vmatmul.mubr.bf16.gmra.mrb[0].mxu0 %v502
    %v2467 = vpop.f32.mrb[0].mxu0
    %v2468 = vadd.f32 %v2427, %v2467
    %v2469 = vpop.f32.mrb[0].mxu0
    %v2470 = vpop.f32.mrb[0].mxu0
    %v2471 = vadd.f32 %v2430, %v2470
    %v2472 = vpop.f32.mrb[0].mxu0
    %2473 = vdwg.mxu0
    %v2474 = vmul.f32 %v2130, 0.5
    %v2475 = vmul.f32 %v2132, 0.5
    %v2476 = vmul.f32 %v2302, 0.5
    %v2477 = vmul.f32 %v2304, 0.5
    %v2478 = vmul.f32 %v2468, 0.5
    %v2479 = vmul.f32 %v2134, 0.5
    %v2480 = vmul.f32 %v2136, 0.5
    %v2481 = vmul.f32 %v2306, 0.5
    %v2482 = vmul.f32 %v2308, 0.5
    %v2483 = vmul.f32 %v2471, 0.5
    %v2484 = vadd.f32 %v2474, 0.0
    %v2485 = vadd.f32 %v2475, 0.0
    %v2486 = vadd.f32 %v2476, 0.0
    %v2487 = vadd.f32 %v2477, 0.0
    %v2488 = vadd.f32 %v2478, 0.0
    %v2489 = vadd.f32 %v2479, 0.0
    %v2490 = vadd.f32 %v2480, 0.0
    %v2491 = vadd.f32 %v2481, 0.0
    %v2492 = vadd.f32 %v2482, 0.0
    %v2493 = vadd.f32 %v2483, 0.0
    %vm2494 = vcmp.ge.f32.partialorder %v2484, 1.0
    %vm2495 = vcmp.ge.f32.partialorder %v2485, 1.0
    %vm2496 = vcmp.ge.f32.partialorder %v2486, 1.0
    %vm2497 = vcmp.ge.f32.partialorder %v2487, 1.0
    %vm2498 = vcmp.ge.f32.partialorder %v2488, 1.0
    %vm2499 = vcmp.ge.f32.partialorder %v2489, 1.0
    %vm2500 = vcmp.ge.f32.partialorder %v2490, 1.0
    %vm2501 = vcmp.ge.f32.partialorder %v2491, 1.0
    %vm2502 = vcmp.ge.f32.partialorder %v2492, 1.0
    %vm2503 = vcmp.ge.f32.partialorder %v2493, 1.0
    %v2504 = vsel %vm2494, 1.0, 0.0
    %v2505 = vsel %vm2495, 1.0, 0.0
    %v2506 = vsel %vm2496, 1.0, 0.0
    %v2507 = vsel %vm2497, 1.0, 0.0
    %v2508 = vsel %vm2498, 1.0, 0.0
    %v2509 = vsel %vm2499, 1.0, 0.0
    %v2510 = vsel %vm2500, 1.0, 0.0
    %v2511 = vsel %vm2501, 1.0, 0.0
    %v2512 = vsel %vm2502, 1.0, 0.0
    %v2513 = vsel %vm2503, 1.0, 0.0
    %v2514 = vpack.c.bf16 %v2509, %v2504
    %v2515 = vpack.c.bf16 %v2510, %v2505
    %v2516 = vpack.c.bf16 %v2511, %v2506
    %v2517 = vpack.c.bf16 %v2512, %v2507
    %v2518 = vpack.c.bf16 %v2513, %v2508
    %2519 = vst [vmem:[#allocation2] sm:$0xff] %v2514
    %2520 = vst [vmem:[#allocation2 + $0x8] sm:$0xff] %v2515
    %2521 = vst [vmem:[#allocation2 + $0x10] sm:$0xff] %v2516
    %2522 = vst [vmem:[#allocation2 + $0x18] sm:$0xff] %v2517
    %2523 = vst [vmem:[#allocation2 + $0x20] sm:$0xff] %v2518
    %v2524 = vsel %vm2494, 0.0, %v2484
    %v2525 = vsel %vm2495, 0.0, %v2485
    %v2526 = vsel %vm2496, 0.0, %v2486
    %v2527 = vsel %vm2497, 0.0, %v2487
    %v2528 = vsel %vm2498, 0.0, %v2488
    %v2529 = vsel %vm2499, 0.0, %v2489
    %v2530 = vsel %vm2500, 0.0, %v2490
    %v2531 = vsel %vm2501, 0.0, %v2491
    %v2532 = vsel %vm2502, 0.0, %v2492
    %v2533 = vsel %vm2503, 0.0, %v2493
    %v2534 = vmul.f32 %v2524, 0.5
    %v2535 = vmul.f32 %v2525, 0.5
    %v2536 = vmul.f32 %v2526, 0.5
    %v2537 = vmul.f32 %v2527, 0.5
    %v2538 = vmul.f32 %v2528, 0.5
    %v2539 = vmul.f32 %v2529, 0.5
    %v2540 = vmul.f32 %v2530, 0.5
    %v2541 = vmul.f32 %v2531, 0.5
    %v2542 = vmul.f32 %v2532, 0.5
    %v2543 = vmul.f32 %v2533, 0.5
    %v2544 = vadd.f32 %v2534, %v2474
    %v2545 = vadd.f32 %v2535, %v2475
    %v2546 = vadd.f32 %v2536, %v2476
    %v2547 = vadd.f32 %v2537, %v2477
    %v2548 = vadd.f32 %v2538, %v2478
    %v2549 = vadd.f32 %v2539, %v2479
    %v2550 = vadd.f32 %v2540, %v2480
    %v2551 = vadd.f32 %v2541, %v2481
    %v2552 = vadd.f32 %v2542, %v2482
    %v2553 = vadd.f32 %v2543, %v2483
    %vm2554 = vcmp.ge.f32.partialorder %v2544, 1.0
    %vm2555 = vcmp.ge.f32.partialorder %v2545, 1.0
    %vm2556 = vcmp.ge.f32.partialorder %v2546, 1.0
    %vm2557 = vcmp.ge.f32.partialorder %v2547, 1.0
    %vm2558 = vcmp.ge.f32.partialorder %v2548, 1.0
    %vm2559 = vcmp.ge.f32.partialorder %v2549, 1.0
    %vm2560 = vcmp.ge.f32.partialorder %v2550, 1.0
    %vm2561 = vcmp.ge.f32.partialorder %v2551, 1.0
    %vm2562 = vcmp.ge.f32.partialorder %v2552, 1.0
    %vm2563 = vcmp.ge.f32.partialorder %v2553, 1.0
    %v2564 = vsel %vm2554, 1.0, 0.0
    %v2565 = vsel %vm2555, 1.0, 0.0
    %v2566 = vsel %vm2556, 1.0, 0.0
    %v2567 = vsel %vm2557, 1.0, 0.0
    %v2568 = vsel %vm2558, 1.0, 0.0
    %v2569 = vsel %vm2559, 1.0, 0.0
    %v2570 = vsel %vm2560, 1.0, 0.0
    %v2571 = vsel %vm2561, 1.0, 0.0
    %v2572 = vsel %vm2562, 1.0, 0.0
    %v2573 = vsel %vm2563, 1.0, 0.0
    %v2574 = vpack.c.bf16 %v2569, %v2564
    %v2575 = vpack.c.bf16 %v2570, %v2565
    %v2576 = vpack.c.bf16 %v2571, %v2566
    %v2577 = vpack.c.bf16 %v2572, %v2567
    %v2578 = vpack.c.bf16 %v2573, %v2568
    %2579 = vst [vmem:[#allocation2 + $0x28] sm:$0xff] %v2574
    %2580 = vst [vmem:[#allocation2 + $0x30] sm:$0xff] %v2575
    %2581 = vst [vmem:[#allocation2 + $0x38] sm:$0xff] %v2576
    %2582 = vst [vmem:[#allocation2 + $0x40] sm:$0xff] %v2577
    %2583 = vst [vmem:[#allocation2 + $0x48] sm:$0xff] %v2578
    %v2584 = vsel %vm2554, 0.0, %v2544
    %v2585 = vsel %vm2555, 0.0, %v2545
    %v2586 = vsel %vm2556, 0.0, %v2546
    %v2587 = vsel %vm2557, 0.0, %v2547
    %v2588 = vsel %vm2558, 0.0, %v2548
    %v2589 = vsel %vm2559, 0.0, %v2549
    %v2590 = vsel %vm2560, 0.0, %v2550
    %v2591 = vsel %vm2561, 0.0, %v2551
    %v2592 = vsel %vm2562, 0.0, %v2552
    %v2593 = vsel %vm2563, 0.0, %v2553
    %v2594 = vmul.f32 %v2584, 0.5
    %v2595 = vmul.f32 %v2585, 0.5
    %v2596 = vmul.f32 %v2586, 0.5
    %v2597 = vmul.f32 %v2587, 0.5
    %v2598 = vmul.f32 %v2588, 0.5
    %v2599 = vmul.f32 %v2589, 0.5
    %v2600 = vmul.f32 %v2590, 0.5
    %v2601 = vmul.f32 %v2591, 0.5
    %v2602 = vmul.f32 %v2592, 0.5
    %v2603 = vmul.f32 %v2593, 0.5
    %v2604 = vadd.f32 %v2594, %v2474
    %v2605 = vadd.f32 %v2595, %v2475
    %v2606 = vadd.f32 %v2596, %v2476
    %v2607 = vadd.f32 %v2597, %v2477
    %v2608 = vadd.f32 %v2598, %v2478
    %v2609 = vadd.f32 %v2599, %v2479
    %v2610 = vadd.f32 %v2600, %v2480
    %v2611 = vadd.f32 %v2601, %v2481
    %v2612 = vadd.f32 %v2602, %v2482
    %v2613 = vadd.f32 %v2603, %v2483
    %vm2614 = vcmp.ge.f32.partialorder %v2604, 1.0
    %vm2615 = vcmp.ge.f32.partialorder %v2605, 1.0
    %vm2616 = vcmp.ge.f32.partialorder %v2606, 1.0
    %vm2617 = vcmp.ge.f32.partialorder %v2607, 1.0
    %vm2618 = vcmp.ge.f32.partialorder %v2608, 1.0
    %vm2619 = vcmp.ge.f32.partialorder %v2609, 1.0
    %vm2620 = vcmp.ge.f32.partialorder %v2610, 1.0
    %vm2621 = vcmp.ge.f32.partialorder %v2611, 1.0
    %vm2622 = vcmp.ge.f32.partialorder %v2612, 1.0
    %vm2623 = vcmp.ge.f32.partialorder %v2613, 1.0
    %v2624 = vsel %vm2614, 1.0, 0.0
    %v2625 = vsel %vm2615, 1.0, 0.0
    %v2626 = vsel %vm2616, 1.0, 0.0
    %v2627 = vsel %vm2617, 1.0, 0.0
    %v2628 = vsel %vm2618, 1.0, 0.0
    %v2629 = vsel %vm2619, 1.0, 0.0
    %v2630 = vsel %vm2620, 1.0, 0.0
    %v2631 = vsel %vm2621, 1.0, 0.0
    %v2632 = vsel %vm2622, 1.0, 0.0
    %v2633 = vsel %vm2623, 1.0, 0.0
    %v2634 = vpack.c.bf16 %v2629, %v2624
    %v2635 = vpack.c.bf16 %v2630, %v2625
    %v2636 = vpack.c.bf16 %v2631, %v2626
    %v2637 = vpack.c.bf16 %v2632, %v2627
    %v2638 = vpack.c.bf16 %v2633, %v2628
    %2639 = vst [vmem:[#allocation2 + $0x50] sm:$0xff] %v2634
    %2640 = vst [vmem:[#allocation2 + $0x58] sm:$0xff] %v2635
    %2641 = vst [vmem:[#allocation2 + $0x60] sm:$0xff] %v2636
    %2642 = vst [vmem:[#allocation2 + $0x68] sm:$0xff] %v2637
    %2643 = vst [vmem:[#allocation2 + $0x70] sm:$0xff] %v2638
    %v2644 = vsel %vm2614, 0.0, %v2604
    %v2645 = vsel %vm2615, 0.0, %v2605
    %v2646 = vsel %vm2616, 0.0, %v2606
    %v2647 = vsel %vm2617, 0.0, %v2607
    %v2648 = vsel %vm2618, 0.0, %v2608
    %v2649 = vsel %vm2619, 0.0, %v2609
    %v2650 = vsel %vm2620, 0.0, %v2610
    %v2651 = vsel %vm2621, 0.0, %v2611
    %v2652 = vsel %vm2622, 0.0, %v2612
    %v2653 = vsel %vm2623, 0.0, %v2613
    %v2654 = vmul.f32 %v2644, 0.5
    %v2655 = vmul.f32 %v2645, 0.5
    %v2656 = vmul.f32 %v2646, 0.5
    %v2657 = vmul.f32 %v2647, 0.5
    %v2658 = vmul.f32 %v2648, 0.5
    %v2659 = vmul.f32 %v2649, 0.5
    %v2660 = vmul.f32 %v2650, 0.5
    %v2661 = vmul.f32 %v2651, 0.5
    %v2662 = vmul.f32 %v2652, 0.5
    %v2663 = vmul.f32 %v2653, 0.5
    %v2664 = vadd.f32 %v2654, %v2474
    %v2665 = vadd.f32 %v2655, %v2475
    %v2666 = vadd.f32 %v2656, %v2476
    %v2667 = vadd.f32 %v2657, %v2477
    %v2668 = vadd.f32 %v2658, %v2478
    %v2669 = vadd.f32 %v2659, %v2479
    %v2670 = vadd.f32 %v2660, %v2480
    %v2671 = vadd.f32 %v2661, %v2481
    %v2672 = vadd.f32 %v2662, %v2482
    %v2673 = vadd.f32 %v2663, %v2483
    %vm2674 = vcmp.ge.f32.partialorder %v2664, 1.0
    %vm2675 = vcmp.ge.f32.partialorder %v2665, 1.0
    %vm2676 = vcmp.ge.f32.partialorder %v2666, 1.0
    %vm2677 = vcmp.ge.f32.partialorder %v2667, 1.0
    %vm2678 = vcmp.ge.f32.partialorder %v2668, 1.0
    %vm2679 = vcmp.ge.f32.partialorder %v2669, 1.0
    %vm2680 = vcmp.ge.f32.partialorder %v2670, 1.0
    %vm2681 = vcmp.ge.f32.partialorder %v2671, 1.0
    %vm2682 = vcmp.ge.f32.partialorder %v2672, 1.0
    %vm2683 = vcmp.ge.f32.partialorder %v2673, 1.0
    %v2684 = vsel %vm2674, 1.0, 0.0
    %v2685 = vsel %vm2675, 1.0, 0.0
    %v2686 = vsel %vm2676, 1.0, 0.0
    %v2687 = vsel %vm2677, 1.0, 0.0
    %v2688 = vsel %vm2678, 1.0, 0.0
    %v2689 = vsel %vm2679, 1.0, 0.0
    %v2690 = vsel %vm2680, 1.0, 0.0
    %v2691 = vsel %vm2681, 1.0, 0.0
    %v2692 = vsel %vm2682, 1.0, 0.0
    %v2693 = vsel %vm2683, 1.0, 0.0
    %v2694 = vpack.c.bf16 %v2689, %v2684
    %v2695 = vpack.c.bf16 %v2690, %v2685
    %v2696 = vpack.c.bf16 %v2691, %v2686
    %v2697 = vpack.c.bf16 %v2692, %v2687
    %v2698 = vpack.c.bf16 %v2693, %v2688
    %2699 = vst [vmem:[#allocation2 + $0x78] sm:$0xff] %v2694
    %2700 = vst [vmem:[#allocation2 + $0x80] sm:$0xff] %v2695
    %2701 = vst [vmem:[#allocation2 + $0x88] sm:$0xff] %v2696
    %2702 = vst [vmem:[#allocation2 + $0x90] sm:$0xff] %v2697
    %2703 = vst [vmem:[#allocation2 + $0x98] sm:$0xff] %v2698
    %v2704 = vsel %vm2674, 0.0, %v2664
    %v2705 = vsel %vm2675, 0.0, %v2665
    %v2706 = vsel %vm2676, 0.0, %v2666
    %v2707 = vsel %vm2677, 0.0, %v2667
    %v2708 = vsel %vm2678, 0.0, %v2668
    %v2709 = vsel %vm2679, 0.0, %v2669
    %v2710 = vsel %vm2680, 0.0, %v2670
    %v2711 = vsel %vm2681, 0.0, %v2671
    %v2712 = vsel %vm2682, 0.0, %v2672
    %v2713 = vsel %vm2683, 0.0, %v2673
    %v2714 = vmul.f32 %v2704, 0.5
    %v2715 = vmul.f32 %v2705, 0.5
    %v2716 = vmul.f32 %v2706, 0.5
    %v2717 = vmul.f32 %v2707, 0.5
    %v2718 = vmul.f32 %v2708, 0.5
    %v2719 = vmul.f32 %v2709, 0.5
    %v2720 = vmul.f32 %v2710, 0.5
    %v2721 = vmul.f32 %v2711, 0.5
    %v2722 = vmul.f32 %v2712, 0.5
    %v2723 = vmul.f32 %v2713, 0.5
    %v2724 = vadd.f32 %v2714, %v2474
    %v2725 = vadd.f32 %v2715, %v2475
    %v2726 = vadd.f32 %v2716, %v2476
    %v2727 = vadd.f32 %v2717, %v2477
    %v2728 = vadd.f32 %v2718, %v2478
    %v2729 = vadd.f32 %v2719, %v2479
    %v2730 = vadd.f32 %v2720, %v2480
    %v2731 = vadd.f32 %v2721, %v2481
    %v2732 = vadd.f32 %v2722, %v2482
    %v2733 = vadd.f32 %v2723, %v2483
    %vm2734 = vcmp.ge.f32.partialorder %v2724, 1.0
    %vm2735 = vcmp.ge.f32.partialorder %v2725, 1.0
    %vm2736 = vcmp.ge.f32.partialorder %v2726, 1.0
    %vm2737 = vcmp.ge.f32.partialorder %v2727, 1.0
    %vm2738 = vcmp.ge.f32.partialorder %v2728, 1.0
    %vm2739 = vcmp.ge.f32.partialorder %v2729, 1.0
    %vm2740 = vcmp.ge.f32.partialorder %v2730, 1.0
    %vm2741 = vcmp.ge.f32.partialorder %v2731, 1.0
    %vm2742 = vcmp.ge.f32.partialorder %v2732, 1.0
    %vm2743 = vcmp.ge.f32.partialorder %v2733, 1.0
    %v2744 = vsel %vm2734, 1.0, 0.0
    %v2745 = vsel %vm2735, 1.0, 0.0
    %v2746 = vsel %vm2736, 1.0, 0.0
    %v2747 = vsel %vm2737, 1.0, 0.0
    %v2748 = vsel %vm2738, 1.0, 0.0
    %v2749 = vsel %vm2739, 1.0, 0.0
    %v2750 = vsel %vm2740, 1.0, 0.0
    %v2751 = vsel %vm2741, 1.0, 0.0
    %v2752 = vsel %vm2742, 1.0, 0.0
    %v2753 = vsel %vm2743, 1.0, 0.0
    %v2754 = vpack.c.bf16 %v2749, %v2744
    %v2755 = vpack.c.bf16 %v2750, %v2745
    %v2756 = vpack.c.bf16 %v2751, %v2746
    %v2757 = vpack.c.bf16 %v2752, %v2747
    %v2758 = vpack.c.bf16 %v2753, %v2748
    %2759 = vst [vmem:[#allocation2 + $0xa0] sm:$0xff] %v2754
    %2760 = vst [vmem:[#allocation2 + $0xa8] sm:$0xff] %v2755
    %2761 = vst [vmem:[#allocation2 + $0xb0] sm:$0xff] %v2756
    %2762 = vst [vmem:[#allocation2 + $0xb8] sm:$0xff] %v2757
    %2763 = vst [vmem:[#allocation2 + $0xc0] sm:$0xff] %v2758
    %v2764 = vsel %vm2734, 0.0, %v2724
    %v2765 = vsel %vm2735, 0.0, %v2725
    %v2766 = vsel %vm2736, 0.0, %v2726
    %v2767 = vsel %vm2737, 0.0, %v2727
    %v2768 = vsel %vm2738, 0.0, %v2728
    %v2769 = vsel %vm2739, 0.0, %v2729
    %v2770 = vsel %vm2740, 0.0, %v2730
    %v2771 = vsel %vm2741, 0.0, %v2731
    %v2772 = vsel %vm2742, 0.0, %v2732
    %v2773 = vsel %vm2743, 0.0, %v2733
    %v2774 = vmul.f32 %v2764, 0.5
    %v2775 = vmul.f32 %v2765, 0.5
    %v2776 = vmul.f32 %v2766, 0.5
    %v2777 = vmul.f32 %v2767, 0.5
    %v2778 = vmul.f32 %v2768, 0.5
    %v2779 = vmul.f32 %v2769, 0.5
    %v2780 = vmul.f32 %v2770, 0.5
    %v2781 = vmul.f32 %v2771, 0.5
    %v2782 = vmul.f32 %v2772, 0.5
    %v2783 = vmul.f32 %v2773, 0.5
    %v2784 = vadd.f32 %v2774, %v2474
    %v2785 = vadd.f32 %v2775, %v2475
    %v2786 = vadd.f32 %v2776, %v2476
    %v2787 = vadd.f32 %v2777, %v2477
    %v2788 = vadd.f32 %v2778, %v2478
    %v2789 = vadd.f32 %v2779, %v2479
    %v2790 = vadd.f32 %v2780, %v2480
    %v2791 = vadd.f32 %v2781, %v2481
    %v2792 = vadd.f32 %v2782, %v2482
    %v2793 = vadd.f32 %v2783, %v2483
    %vm2794 = vcmp.ge.f32.partialorder %v2784, 1.0
    %vm2795 = vcmp.ge.f32.partialorder %v2785, 1.0
    %vm2796 = vcmp.ge.f32.partialorder %v2786, 1.0
    %vm2797 = vcmp.ge.f32.partialorder %v2787, 1.0
    %vm2798 = vcmp.ge.f32.partialorder %v2788, 1.0
    %vm2799 = vcmp.ge.f32.partialorder %v2789, 1.0
    %vm2800 = vcmp.ge.f32.partialorder %v2790, 1.0
    %vm2801 = vcmp.ge.f32.partialorder %v2791, 1.0
    %vm2802 = vcmp.ge.f32.partialorder %v2792, 1.0
    %vm2803 = vcmp.ge.f32.partialorder %v2793, 1.0
    %v2804 = vsel %vm2794, 1.0, 0.0
    %v2805 = vsel %vm2795, 1.0, 0.0
    %v2806 = vsel %vm2796, 1.0, 0.0
    %v2807 = vsel %vm2797, 1.0, 0.0
    %v2808 = vsel %vm2798, 1.0, 0.0
    %v2809 = vsel %vm2799, 1.0, 0.0
    %v2810 = vsel %vm2800, 1.0, 0.0
    %v2811 = vsel %vm2801, 1.0, 0.0
    %v2812 = vsel %vm2802, 1.0, 0.0
    %v2813 = vsel %vm2803, 1.0, 0.0
    %v2814 = vpack.c.bf16 %v2809, %v2804
    %v2815 = vpack.c.bf16 %v2810, %v2805
    %v2816 = vpack.c.bf16 %v2811, %v2806
    %v2817 = vpack.c.bf16 %v2812, %v2807
    %v2818 = vpack.c.bf16 %v2813, %v2808
    %2819 = vst [vmem:[#allocation2 + $0xc8] sm:$0xff] %v2814
    %2820 = vst [vmem:[#allocation2 + $0xd0] sm:$0xff] %v2815
    %2821 = vst [vmem:[#allocation2 + $0xd8] sm:$0xff] %v2816
    %2822 = vst [vmem:[#allocation2 + $0xe0] sm:$0xff] %v2817
    %2823 = vst [vmem:[#allocation2 + $0xe8] sm:$0xff] %v2818
    %v2824 = vsel %vm2794, 0.0, %v2784
    %v2825 = vsel %vm2795, 0.0, %v2785
    %v2826 = vsel %vm2796, 0.0, %v2786
    %v2827 = vsel %vm2797, 0.0, %v2787
    %v2828 = vsel %vm2798, 0.0, %v2788
    %v2829 = vsel %vm2799, 0.0, %v2789
    %v2830 = vsel %vm2800, 0.0, %v2790
    %v2831 = vsel %vm2801, 0.0, %v2791
    %v2832 = vsel %vm2802, 0.0, %v2792
    %v2833 = vsel %vm2803, 0.0, %v2793
    %v2834 = vmul.f32 %v2824, 0.5
    %v2835 = vmul.f32 %v2825, 0.5
    %v2836 = vmul.f32 %v2826, 0.5
    %v2837 = vmul.f32 %v2827, 0.5
    %v2838 = vmul.f32 %v2828, 0.5
    %v2839 = vmul.f32 %v2829, 0.5
    %v2840 = vmul.f32 %v2830, 0.5
    %v2841 = vmul.f32 %v2831, 0.5
    %v2842 = vmul.f32 %v2832, 0.5
    %v2843 = vmul.f32 %v2833, 0.5
    %v2844 = vadd.f32 %v2834, %v2474
    %v2845 = vadd.f32 %v2835, %v2475
    %v2846 = vadd.f32 %v2836, %v2476
    %v2847 = vadd.f32 %v2837, %v2477
    %v2848 = vadd.f32 %v2838, %v2478
    %v2849 = vadd.f32 %v2839, %v2479
    %v2850 = vadd.f32 %v2840, %v2480
    %v2851 = vadd.f32 %v2841, %v2481
    %v2852 = vadd.f32 %v2842, %v2482
    %v2853 = vadd.f32 %v2843, %v2483
    %vm2854 = vcmp.ge.f32.partialorder %v2844, 1.0
    %vm2855 = vcmp.ge.f32.partialorder %v2845, 1.0
    %vm2856 = vcmp.ge.f32.partialorder %v2846, 1.0
    %vm2857 = vcmp.ge.f32.partialorder %v2847, 1.0
    %vm2858 = vcmp.ge.f32.partialorder %v2848, 1.0
    %vm2859 = vcmp.ge.f32.partialorder %v2849, 1.0
    %vm2860 = vcmp.ge.f32.partialorder %v2850, 1.0
    %vm2861 = vcmp.ge.f32.partialorder %v2851, 1.0
    %vm2862 = vcmp.ge.f32.partialorder %v2852, 1.0
    %vm2863 = vcmp.ge.f32.partialorder %v2853, 1.0
    %v2864 = vsel %vm2854, 1.0, 0.0
    %v2865 = vsel %vm2855, 1.0, 0.0
    %v2866 = vsel %vm2856, 1.0, 0.0
    %v2867 = vsel %vm2857, 1.0, 0.0
    %v2868 = vsel %vm2858, 1.0, 0.0
    %v2869 = vsel %vm2859, 1.0, 0.0
    %v2870 = vsel %vm2860, 1.0, 0.0
    %v2871 = vsel %vm2861, 1.0, 0.0
    %v2872 = vsel %vm2862, 1.0, 0.0
    %v2873 = vsel %vm2863, 1.0, 0.0
    %v2874 = vpack.c.bf16 %v2869, %v2864
    %v2875 = vpack.c.bf16 %v2870, %v2865
    %v2876 = vpack.c.bf16 %v2871, %v2866
    %v2877 = vpack.c.bf16 %v2872, %v2867
    %v2878 = vpack.c.bf16 %v2873, %v2868
    %2879 = vst [vmem:[#allocation2 + $0xf0] sm:$0xff] %v2874
    %2880 = vst [vmem:[#allocation2 + $0xf8] sm:$0xff] %v2875
    %2881 = vst [vmem:[#allocation2 + $0x100] sm:$0xff] %v2876
    %2882 = vst [vmem:[#allocation2 + $0x108] sm:$0xff] %v2877
    %2883 = vst [vmem:[#allocation2 + $0x110] sm:$0xff] %v2878
    %v2884 = vsel %vm2854, 0.0, %v2844
    %v2885 = vsel %vm2855, 0.0, %v2845
    %v2886 = vsel %vm2856, 0.0, %v2846
    %v2887 = vsel %vm2857, 0.0, %v2847
    %v2888 = vsel %vm2858, 0.0, %v2848
    %v2889 = vsel %vm2859, 0.0, %v2849
    %v2890 = vsel %vm2860, 0.0, %v2850
    %v2891 = vsel %vm2861, 0.0, %v2851
    %v2892 = vsel %vm2862, 0.0, %v2852
    %v2893 = vsel %vm2863, 0.0, %v2853
    %v2894 = vmul.f32 %v2884, 0.5
    %v2895 = vmul.f32 %v2885, 0.5
    %v2896 = vmul.f32 %v2886, 0.5
    %v2897 = vmul.f32 %v2887, 0.5
    %v2898 = vmul.f32 %v2888, 0.5
    %v2899 = vmul.f32 %v2889, 0.5
    %v2900 = vmul.f32 %v2890, 0.5
    %v2901 = vmul.f32 %v2891, 0.5
    %v2902 = vmul.f32 %v2892, 0.5
    %v2903 = vmul.f32 %v2893, 0.5
    %v2904 = vadd.f32 %v2894, %v2474
    %v2905 = vadd.f32 %v2895, %v2475
    %v2906 = vadd.f32 %v2896, %v2476
    %v2907 = vadd.f32 %v2897, %v2477
    %v2908 = vadd.f32 %v2898, %v2478
    %v2909 = vadd.f32 %v2899, %v2479
    %v2910 = vadd.f32 %v2900, %v2480
    %v2911 = vadd.f32 %v2901, %v2481
    %v2912 = vadd.f32 %v2902, %v2482
    %v2913 = vadd.f32 %v2903, %v2483
    %vm2914 = vcmp.ge.f32.partialorder %v2904, 1.0
    %vm2915 = vcmp.ge.f32.partialorder %v2905, 1.0
    %vm2916 = vcmp.ge.f32.partialorder %v2906, 1.0
    %vm2917 = vcmp.ge.f32.partialorder %v2907, 1.0
    %vm2918 = vcmp.ge.f32.partialorder %v2908, 1.0
    %vm2919 = vcmp.ge.f32.partialorder %v2909, 1.0
    %vm2920 = vcmp.ge.f32.partialorder %v2910, 1.0
    %vm2921 = vcmp.ge.f32.partialorder %v2911, 1.0
    %vm2922 = vcmp.ge.f32.partialorder %v2912, 1.0
    %vm2923 = vcmp.ge.f32.partialorder %v2913, 1.0
    %v2924 = vsel %vm2914, 1.0, 0.0
    %v2925 = vsel %vm2915, 1.0, 0.0
    %v2926 = vsel %vm2916, 1.0, 0.0
    %v2927 = vsel %vm2917, 1.0, 0.0
    %v2928 = vsel %vm2918, 1.0, 0.0
    %v2929 = vsel %vm2919, 1.0, 0.0
    %v2930 = vsel %vm2920, 1.0, 0.0
    %v2931 = vsel %vm2921, 1.0, 0.0
    %v2932 = vsel %vm2922, 1.0, 0.0
    %v2933 = vsel %vm2923, 1.0, 0.0
    %v2934 = vpack.c.bf16 %v2929, %v2924
    %v2935 = vpack.c.bf16 %v2930, %v2925
    %v2936 = vpack.c.bf16 %v2931, %v2926
    %v2937 = vpack.c.bf16 %v2932, %v2927
    %v2938 = vpack.c.bf16 %v2933, %v2928
    %2939 = vst [vmem:[#allocation2 + $0x118] sm:$0xff] %v2934
    %2940 = vst [vmem:[#allocation2 + $0x120] sm:$0xff] %v2935
    %2941 = vst [vmem:[#allocation2 + $0x128] sm:$0xff] %v2936
    %2942 = vst [vmem:[#allocation2 + $0x130] sm:$0xff] %v2937
    %2943 = vst [vmem:[#allocation2 + $0x138] sm:$0xff] %v2938
    %v2944 = vld [vmem:[#allocation2] sm:$0xff]
    %v2945 = vld [vmem:[#allocation2 + $0x8] sm:$0xff]
    %v2946 = vld [vmem:[#allocation2 + $0x10] sm:$0xff]
    %v2947 = vld [vmem:[#allocation2 + $0x18] sm:$0xff]
    %v2948 = vld [vmem:[#allocation2 + $0x20] sm:$0xff]
    %v2949 = vld [vmem:[#allocation2 + $0x28] sm:$0xff]
    %v2950 = vld [vmem:[#allocation2 + $0x30] sm:$0xff]
    %v2951 = vld [vmem:[#allocation2 + $0x38] sm:$0xff]
    %v2952 = vld [vmem:[#allocation2 + $0x40] sm:$0xff]
    %v2953 = vld [vmem:[#allocation2 + $0x48] sm:$0xff]
    %v2954 = vld [vmem:[#allocation2 + $0x50] sm:$0xff]
    %v2955 = vld [vmem:[#allocation2 + $0x58] sm:$0xff]
    %v2956 = vld [vmem:[#allocation2 + $0x60] sm:$0xff]
    %v2957 = vld [vmem:[#allocation2 + $0x68] sm:$0xff]
    %v2958 = vld [vmem:[#allocation2 + $0x70] sm:$0xff]
    %v2959 = vld [vmem:[#allocation2 + $0x78] sm:$0xff]
    %v2960 = vld [vmem:[#allocation2 + $0x80] sm:$0xff]
    %v2961 = vld [vmem:[#allocation2 + $0x88] sm:$0xff]
    %v2962 = vld [vmem:[#allocation2 + $0x90] sm:$0xff]
    %v2963 = vld [vmem:[#allocation2 + $0x98] sm:$0xff]
    %v2964 = vld [vmem:[#allocation2 + $0xa0] sm:$0xff]
    %v2965 = vld [vmem:[#allocation2 + $0xa8] sm:$0xff]
    %v2966 = vld [vmem:[#allocation2 + $0xb0] sm:$0xff]
    %v2967 = vld [vmem:[#allocation2 + $0xb8] sm:$0xff]
    %v2968 = vld [vmem:[#allocation2 + $0xc0] sm:$0xff]
    %v2969 = vld [vmem:[#allocation2 + $0xc8] sm:$0xff]
    %v2970 = vld [vmem:[#allocation2 + $0xd0] sm:$0xff]
    %v2971 = vld [vmem:[#allocation2 + $0xd8] sm:$0xff]
    %v2972 = vld [vmem:[#allocation2 + $0xe0] sm:$0xff]
    %v2973 = vld [vmem:[#allocation2 + $0xe8] sm:$0xff]
    %v2974 = vld [vmem:[#allocation2 + $0xf0] sm:$0xff]
    %v2975 = vld [vmem:[#allocation2 + $0xf8] sm:$0xff]
    %v2976 = vld [vmem:[#allocation2 + $0x100] sm:$0xff]
    %v2977 = vld [vmem:[#allocation2 + $0x108] sm:$0xff]
    %v2978 = vld [vmem:[#allocation2 + $0x110] sm:$0xff]
    %v2979 = vld [vmem:[#allocation2 + $0x118] sm:$0xff]
    %v2980 = vld [vmem:[#allocation2 + $0x120] sm:$0xff]
    %v2981 = vld [vmem:[#allocation2 + $0x128] sm:$0xff]
    %v2982 = vld [vmem:[#allocation2 + $0x130] sm:$0xff]
    %v2983 = vld [vmem:[#allocation2 + $0x138] sm:$0xff]
    %v2984 = vld [vmem:[#allocation8] sm:$0xf]
    %v2985 = vld [vmem:[#allocation8 + $0x4] sm:$0xf]
    %v2986 = vld [vmem:[#allocation8 + $0x8] sm:$0xf]
    %v2987 = vld [vmem:[#allocation8 + $0xc] sm:$0xf]
    %v2988 = vld [vmem:[#allocation8 + $0x10] sm:$0xf]
    %v2989 = vld [vmem:[#allocation8 + $0x14] sm:$0xf]
    %v2990 = vld [vmem:[#allocation8 + $0x18] sm:$0xf]
    %v2991 = vld [vmem:[#allocation8 + $0x1c] sm:$0xf]
    %v2992 = vld [vmem:[#allocation8 + $0x20] sm:$0xf]
    %v2993 = vld [vmem:[#allocation8 + $0x24] sm:$0xf]
    %v2994 = vld [vmem:[#allocation8 + $0x28] sm:$0xf]
    %v2995 = vld [vmem:[#allocation8 + $0x2c] sm:$0xf]
    %v2996 = vld [vmem:[#allocation8 + $0x30] sm:$0xf]
    %v2997 = vld [vmem:[#allocation8 + $0x34] sm:$0xf]
    %v2998 = vld [vmem:[#allocation8 + $0x38] sm:$0xf]
    %v2999 = vld [vmem:[#allocation8 + $0x3c] sm:$0xf]
    %v3000 = vld [vmem:[#allocation8 + $0x40] sm:$0xf]
    %v3001 = vld [vmem:[#allocation8 + $0x44] sm:$0xf]
    %v3002 = vld [vmem:[#allocation8 + $0x48] sm:$0xf]
    %v3003 = vld [vmem:[#allocation8 + $0x4c] sm:$0xf]
    %v3004 = vld [vmem:[#allocation8 + $0x50] sm:$0xf]
    %v3005 = vld [vmem:[#allocation8 + $0x54] sm:$0xf]
    %v3006 = vld [vmem:[#allocation8 + $0x58] sm:$0xf]
    %v3007 = vld [vmem:[#allocation8 + $0x5c] sm:$0xf]
    %v3008 = vld [vmem:[#allocation8 + $0x60] sm:$0xf]
    %v3009 = vld [vmem:[#allocation8 + $0x64] sm:$0xf]
    %v3010 = vld [vmem:[#allocation8 + $0x68] sm:$0xf]
    %v3011 = vld [vmem:[#allocation8 + $0x6c] sm:$0xf]
    %v3012 = vld [vmem:[#allocation8 + $0x70] sm:$0xf]
    %v3013 = vld [vmem:[#allocation8 + $0x74] sm:$0xf]
    %v3014 = vld [vmem:[#allocation8 + $0x78] sm:$0xf]
    %v3015 = vld [vmem:[#allocation8 + $0x7c] sm:$0xf]
    %v3016 = vld [vmem:[#allocation8 + $0x80] sm:$0xf]
    %v3017 = vld [vmem:[#allocation8 + $0x84] sm:$0xf]
    %v3018 = vld [vmem:[#allocation8 + $0x88] sm:$0xf]
    %v3019 = vld [vmem:[#allocation8 + $0x8c] sm:$0xf]
    %v3020 = vld [vmem:[#allocation8 + $0x90] sm:$0xf]
    %v3021 = vld [vmem:[#allocation8 + $0x94] sm:$0xf]
    %v3022 = vld [vmem:[#allocation8 + $0x98] sm:$0xf]
    %v3023 = vld [vmem:[#allocation8 + $0x9c] sm:$0xf]
    %v3024 = vld [vmem:[#allocation8 + $0xa0] sm:$0xf]
    %v3025 = vld [vmem:[#allocation8 + $0xa4] sm:$0xf]
    %v3026 = vld [vmem:[#allocation8 + $0xa8] sm:$0xf]
    %v3027 = vld [vmem:[#allocation8 + $0xac] sm:$0xf]
    %v3028 = vld [vmem:[#allocation8 + $0xb0] sm:$0xf]
    %v3029 = vld [vmem:[#allocation8 + $0xb4] sm:$0xf]
    %v3030 = vld [vmem:[#allocation8 + $0xb8] sm:$0xf]
    %v3031 = vld [vmem:[#allocation8 + $0xbc] sm:$0xf]
    %v3032 = vld [vmem:[#allocation8 + $0xc0] sm:$0xf]
    %v3033 = vld [vmem:[#allocation8 + $0xc4] sm:$0xf]
    %v3034 = vld [vmem:[#allocation8 + $0xc8] sm:$0xf]
    %v3035 = vld [vmem:[#allocation8 + $0xcc] sm:$0xf]
    %v3036 = vld [vmem:[#allocation8 + $0xd0] sm:$0xf]
    %v3037 = vld [vmem:[#allocation8 + $0xd4] sm:$0xf]
    %v3038 = vld [vmem:[#allocation8 + $0xd8] sm:$0xf]
    %v3039 = vld [vmem:[#allocation8 + $0xdc] sm:$0xf]
    %v3040 = vld [vmem:[#allocation8 + $0xe0] sm:$0xf]
    %v3041 = vld [vmem:[#allocation8 + $0xe4] sm:$0xf]
    %v3042 = vld [vmem:[#allocation8 + $0xe8] sm:$0xf]
    %v3043 = vld [vmem:[#allocation8 + $0xec] sm:$0xf]
    %v3044 = vld [vmem:[#allocation8 + $0xf0] sm:$0xf]
    %v3045 = vld [vmem:[#allocation8 + $0xf4] sm:$0xf]
    %v3046 = vld [vmem:[#allocation8 + $0xf8] sm:$0xf]
    %v3047 = vld [vmem:[#allocation8 + $0xfc] sm:$0xf]
    %v3048 = vld [vmem:[#allocation8 + $0x100] sm:$0xf]
    %v3049 = vld [vmem:[#allocation8 + $0x104] sm:$0xf]
    %v3050 = vld [vmem:[#allocation8 + $0x108] sm:$0xf]
    %v3051 = vld [vmem:[#allocation8 + $0x10c] sm:$0xf]
    %v3052 = vld [vmem:[#allocation8 + $0x110] sm:$0xf]
    %v3053 = vld [vmem:[#allocation8 + $0x114] sm:$0xf]
    %v3054 = vld [vmem:[#allocation8 + $0x118] sm:$0xf]
    %v3055 = vld [vmem:[#allocation8 + $0x11c] sm:$0xf]
    %v3056 = vld [vmem:[#allocation8 + $0x120] sm:$0xf]
    %v3057 = vld [vmem:[#allocation8 + $0x124] sm:$0xf]
    %v3058 = vld [vmem:[#allocation8 + $0x128] sm:$0xf]
    %v3059 = vld [vmem:[#allocation8 + $0x12c] sm:$0xf]
    %v3060 = vld [vmem:[#allocation8 + $0x130] sm:$0xf]
    %v3061 = vld [vmem:[#allocation8 + $0x134] sm:$0xf]
    %v3062 = vld [vmem:[#allocation8 + $0x138] sm:$0xf]
    %v3063 = vld [vmem:[#allocation8 + $0x13c] sm:$0xf]
    %v3064 = vld [vmem:[#allocation9] sm:$0x1]
    %v3066 = vlaneseq
    %v3067 = vshrl.u32 %v3066, 7
    %v3068 = vsub.s32 0, %v3067
    %v3069 = vrot.slane %v3064, %v3068
    %v3151 = vunpack.c.l.b16 %v2984
    %v3152 = vunpack.c.l.b16 %v2985
    %v3153 = vunpack.c.l.b16 %v2986
    %v3154 = vunpack.c.l.b16 %v2987
    %v3155 = vunpack.c.l.b16 %v2988
    %v3156 = vunpack.c.l.b16 %v2989
    %v3157 = vunpack.c.l.b16 %v2990
    %v3158 = vunpack.c.l.b16 %v2991
    %v3159 = vunpack.c.l.b16 %v2992
    %v3160 = vunpack.c.l.b16 %v2993
    %v3161 = vunpack.c.l.b16 %v2994
    %v3162 = vunpack.c.l.b16 %v2995
    %v3163 = vunpack.c.l.b16 %v2996
    %v3164 = vunpack.c.l.b16 %v2997
    %v3165 = vunpack.c.l.b16 %v2998
    %v3166 = vunpack.c.l.b16 %v2999
    %v3167 = vunpack.c.l.b16 %v3000
    %v3168 = vunpack.c.l.b16 %v3001
    %v3169 = vunpack.c.l.b16 %v3002
    %v3170 = vunpack.c.l.b16 %v3003
    %v3171 = vunpack.c.l.b16 %v3004
    %v3172 = vunpack.c.l.b16 %v3005
    %v3173 = vunpack.c.l.b16 %v3006
    %v3174 = vunpack.c.l.b16 %v3007
    %v3175 = vunpack.c.l.b16 %v3008
    %v3176 = vunpack.c.l.b16 %v3009
    %v3177 = vunpack.c.l.b16 %v3010
    %v3178 = vunpack.c.l.b16 %v3011
    %v3179 = vunpack.c.l.b16 %v3012
    %v3180 = vunpack.c.l.b16 %v3013
    %v3181 = vunpack.c.l.b16 %v3014
    %v3182 = vunpack.c.l.b16 %v3015
    %v3183 = vunpack.c.l.b16 %v3016
    %v3184 = vunpack.c.l.b16 %v3017
    %v3185 = vunpack.c.l.b16 %v3018
    %v3186 = vunpack.c.l.b16 %v3019
    %v3187 = vunpack.c.l.b16 %v3020
    %v3188 = vunpack.c.l.b16 %v3021
    %v3189 = vunpack.c.l.b16 %v3022
    %v3190 = vunpack.c.l.b16 %v3023
    %v3191 = vunpack.c.l.b16 %v3024
    %v3192 = vunpack.c.l.b16 %v3025
    %v3193 = vunpack.c.l.b16 %v3026
    %v3194 = vunpack.c.l.b16 %v3027
    %v3195 = vunpack.c.l.b16 %v3028
    %v3196 = vunpack.c.l.b16 %v3029
    %v3197 = vunpack.c.l.b16 %v3030
    %v3198 = vunpack.c.l.b16 %v3031
    %v3199 = vunpack.c.l.b16 %v3032
    %v3200 = vunpack.c.l.b16 %v3033
    %v3201 = vunpack.c.l.b16 %v3034
    %v3202 = vunpack.c.l.b16 %v3035
    %v3203 = vunpack.c.l.b16 %v3036
    %v3204 = vunpack.c.l.b16 %v3037
    %v3205 = vunpack.c.l.b16 %v3038
    %v3206 = vunpack.c.l.b16 %v3039
    %v3207 = vunpack.c.l.b16 %v3040
    %v3208 = vunpack.c.l.b16 %v3041
    %v3209 = vunpack.c.l.b16 %v3042
    %v3210 = vunpack.c.l.b16 %v3043
    %v3211 = vunpack.c.l.b16 %v3044
    %v3212 = vunpack.c.l.b16 %v3045
    %v3213 = vunpack.c.l.b16 %v3046
    %v3214 = vunpack.c.l.b16 %v3047
    %v3215 = vunpack.c.l.b16 %v3048
    %v3216 = vunpack.c.l.b16 %v3049
    %v3217 = vunpack.c.l.b16 %v3050
    %v3218 = vunpack.c.l.b16 %v3051
    %v3219 = vunpack.c.l.b16 %v3052
    %v3220 = vunpack.c.l.b16 %v3053
    %v3221 = vunpack.c.l.b16 %v3054
    %v3222 = vunpack.c.l.b16 %v3055
    %v3223 = vunpack.c.l.b16 %v3056
    %v3224 = vunpack.c.l.b16 %v3057
    %v3225 = vunpack.c.l.b16 %v3058
    %v3226 = vunpack.c.l.b16 %v3059
    %v3227 = vunpack.c.l.b16 %v3060
    %v3228 = vunpack.c.l.b16 %v3061
    %v3229 = vunpack.c.l.b16 %v3062
    %v3230 = vunpack.c.l.b16 %v3063
    %v3231 = vpack.c.b16 %v3152, %v3151
    %v3232 = vpack.c.b16 %v3154, %v3153
    %v3233 = vpack.c.b16 %v3156, %v3155
    %v3234 = vpack.c.b16 %v3158, %v3157
    %v3235 = vpack.c.b16 %v3160, %v3159
    %v3236 = vpack.c.b16 %v3162, %v3161
    %v3237 = vpack.c.b16 %v3164, %v3163
    %v3238 = vpack.c.b16 %v3166, %v3165
    %v3239 = vpack.c.b16 %v3168, %v3167
    %v3240 = vpack.c.b16 %v3170, %v3169
    %v3241 = vpack.c.b16 %v3172, %v3171
    %v3242 = vpack.c.b16 %v3174, %v3173
    %v3243 = vpack.c.b16 %v3176, %v3175
    %v3244 = vpack.c.b16 %v3178, %v3177
    %v3245 = vpack.c.b16 %v3180, %v3179
    %v3246 = vpack.c.b16 %v3182, %v3181
    %v3247 = vpack.c.b16 %v3184, %v3183
    %v3248 = vpack.c.b16 %v3186, %v3185
    %v3249 = vpack.c.b16 %v3188, %v3187
    %v3250 = vpack.c.b16 %v3190, %v3189
    %v3251 = vpack.c.b16 %v3192, %v3191
    %v3252 = vpack.c.b16 %v3194, %v3193
    %v3253 = vpack.c.b16 %v3196, %v3195
    %v3254 = vpack.c.b16 %v3198, %v3197
    %v3255 = vpack.c.b16 %v3200, %v3199
    %v3256 = vpack.c.b16 %v3202, %v3201
    %v3257 = vpack.c.b16 %v3204, %v3203
    %v3258 = vpack.c.b16 %v3206, %v3205
    %v3259 = vpack.c.b16 %v3208, %v3207
    %v3260 = vpack.c.b16 %v3210, %v3209
    %v3261 = vpack.c.b16 %v3212, %v3211
    %v3262 = vpack.c.b16 %v3214, %v3213
    %v3263 = vpack.c.b16 %v3216, %v3215
    %v3264 = vpack.c.b16 %v3218, %v3217
    %v3265 = vpack.c.b16 %v3220, %v3219
    %v3266 = vpack.c.b16 %v3222, %v3221
    %v3267 = vpack.c.b16 %v3224, %v3223
    %v3268 = vpack.c.b16 %v3226, %v3225
    %v3269 = vpack.c.b16 %v3228, %v3227
    %v3270 = vpack.c.b16 %v3230, %v3229
    %3311 = vmatprep.subr.bf16.mxu0 0
    %3312 = vmatpush1.bf16.msra.mxu0 %v3231
    %3313 = vmatprep.subr.bf16.mxu0 0
    %3314 = vmatpush1.bf16.msra.mxu0 %v3232
    %3315 = vmatprep.subr.bf16.mxu0 0
    %3316 = vmatpush1.bf16.msra.mxu0 %v3233
    %3317 = vmatprep.subr.bf16.mxu0 0
    %3318 = vmatpush1.bf16.msra.mxu0 %v3234
    %3319 = vmatprep.subr.bf16.mxu0 0
    %3320 = vmatpush1.bf16.msra.mxu0 %v3235
    %3321 = vmatprep.subr.bf16.mxu0 0
    %3322 = vmatpush1.bf16.msra.mxu0 %v3236
    %3323 = vmatprep.subr.bf16.mxu0 0
    %3324 = vmatpush1.bf16.msra.mxu0 %v3237
    %3325 = vmatprep.subr.bf16.mxu0 0
    %3326 = vmatpush1.bf16.msra.mxu0 %v3238
    %3327 = vmatprep.subr.bf16.mxu0 0
    %3328 = vmatpush1.bf16.msra.mxu0 %v3239
    %3329 = vmatprep.subr.bf16.mxu0 0
    %3330 = vmatpush1.bf16.msra.mxu0 %v3240
    %3331 = vmatprep.subr.bf16.mxu0 0
    %3332 = vmatpush1.bf16.msra.mxu0 %v3241
    %3333 = vmatprep.subr.bf16.mxu0 0
    %3334 = vmatpush1.bf16.msra.mxu0 %v3242
    %3335 = vmatprep.subr.bf16.mxu0 0
    %3336 = vmatpush1.bf16.msra.mxu0 %v3243
    %3337 = vmatprep.subr.bf16.mxu0 0
    %3338 = vmatpush1.bf16.msra.mxu0 %v3244
    %3339 = vmatprep.subr.bf16.mxu0 0
    %3340 = vmatpush1.bf16.msra.mxu0 %v3245
    %3341 = vmatprep.subr.bf16.mxu0 0
    %3342 = vmatpush1.bf16.msra.mxu0 %v3246
    %3343 = vmatprep.mubr.bf16.mxu0 %v2945
    %3344 = vmatmul.mubr.bf16.gmra.mrb[0].mxu0 %v2944
    %v3345 = vpop.f32.mrb[0].mxu0
    %v3346 = vadd.f32 %v3069, %v3345
    %v3347 = vpop.f32.mrb[0].mxu0
    %v3348 = vpop.f32.mrb[0].mxu0
    %v3349 = vadd.f32 %v3069, %v3348
    %v3350 = vpop.f32.mrb[0].mxu0
    %3351 = vmatprep.mubr.bf16.mxu0 %v2950
    %3352 = vmatmul.mubr.bf16.gmra.mrb[0].mxu0 %v2949
    %v3353 = vpop.f32.mrb[0].mxu0
    %v3354 = vadd.f32 %v3069, %v3353
    %v3355 = vpop.f32.mrb[0].mxu0
    %v3356 = vpop.f32.mrb[0].mxu0
    %v3357 = vadd.f32 %v3069, %v3356
    %v3358 = vpop.f32.mrb[0].mxu0
    %3359 = vmatprep.mubr.bf16.mxu0 %v2955
    %3360 = vmatmul.mubr.bf16.gmra.mrb[0].mxu0 %v2954
    %v3361 = vpop.f32.mrb[0].mxu0
    %v3362 = vadd.f32 %v3069, %v3361
    %v3363 = vpop.f32.mrb[0].mxu0
    %v3364 = vpop.f32.mrb[0].mxu0
    %v3365 = vadd.f32 %v3069, %v3364
    %v3366 = vpop.f32.mrb[0].mxu0
    %3367 = vmatprep.mubr.bf16.mxu0 %v2960
    %3368 = vmatmul.mubr.bf16.gmra.mrb[0].mxu0 %v2959
    %v3369 = vpop.f32.mrb[0].mxu0
    %v3370 = vadd.f32 %v3069, %v3369
    %v3371 = vpop.f32.mrb[0].mxu0
    %v3372 = vpop.f32.mrb[0].mxu0
    %v3373 = vadd.f32 %v3069, %v3372
    %v3374 = vpop.f32.mrb[0].mxu0
    %3375 = vmatprep.mubr.bf16.mxu0 %v2965
    %3376 = vmatmul.mubr.bf16.gmra.mrb[0].mxu0 %v2964
    %v3377 = vpop.f32.mrb[0].mxu0
    %v3378 = vadd.f32 %v3069, %v3377
    %v3379 = vpop.f32.mrb[0].mxu0
    %v3380 = vpop.f32.mrb[0].mxu0
    %v3381 = vadd.f32 %v3069, %v3380
    %v3382 = vpop.f32.mrb[0].mxu0
    %3383 = vmatprep.mubr.bf16.mxu0 %v2970
    %3384 = vmatmul.mubr.bf16.gmra.mrb[0].mxu0 %v2969
    %v3385 = vpop.f32.mrb[0].mxu0
    %v3386 = vadd.f32 %v3069, %v3385
    %v3387 = vpop.f32.mrb[0].mxu0
    %v3388 = vpop.f32.mrb[0].mxu0
    %v3389 = vadd.f32 %v3069, %v3388
    %v3390 = vpop.f32.mrb[0].mxu0
    %3391 = vmatprep.mubr.bf16.mxu0 %v2975
    %3392 = vmatmul.mubr.bf16.gmra.mrb[0].mxu0 %v2974
    %v3393 = vpop.f32.mrb[0].mxu0
    %v3394 = vadd.f32 %v3069, %v3393
    %v3395 = vpop.f32.mrb[0].mxu0
    %v3396 = vpop.f32.mrb[0].mxu0
    %v3397 = vadd.f32 %v3069, %v3396
    %v3398 = vpop.f32.mrb[0].mxu0
    %3399 = vmatprep.mubr.bf16.mxu0 %v2980
    %3400 = vmatmul.mubr.bf16.gmra.mrb[0].mxu0 %v2979
    %v3401 = vpop.f32.mrb[0].mxu0
    %v3402 = vadd.f32 %v3069, %v3401
    %v3403 = vpop.f32.mrb[0].mxu0
    %v3404 = vpop.f32.mrb[0].mxu0
    %v3405 = vadd.f32 %v3069, %v3404
    %v3406 = vpop.f32.mrb[0].mxu0
    %3407 = vdwg.mxu0
    %3408 = vmatprep.subr.bf16.mxu0 0
    %3409 = vmatpush1.bf16.msra.mxu0 %v3247
    %3410 = vmatprep.subr.bf16.mxu0 0
    %3411 = vmatpush1.bf16.msra.mxu0 %v3248
    %3412 = vmatprep.subr.bf16.mxu0 0
    %3413 = vmatpush1.bf16.msra.mxu0 %v3249
    %3414 = vmatprep.subr.bf16.mxu0 0
    %3415 = vmatpush1.bf16.msra.mxu0 %v3250
    %3416 = vmatprep.subr.bf16.mxu0 0
    %3417 = vmatpush1.bf16.msra.mxu0 %v3251
    %3418 = vmatprep.subr.bf16.mxu0 0
    %3419 = vmatpush1.bf16.msra.mxu0 %v3252
    %3420 = vmatprep.subr.bf16.mxu0 0
    %3421 = vmatpush1.bf16.msra.mxu0 %v3253
    %3422 = vmatprep.subr.bf16.mxu0 0
    %3423 = vmatpush1.bf16.msra.mxu0 %v3254
    %3424 = vmatprep.subr.bf16.mxu0 0
    %3425 = vmatpush1.bf16.msra.mxu0 %v3255
    %3426 = vmatprep.subr.bf16.mxu0 0
    %3427 = vmatpush1.bf16.msra.mxu0 %v3256
    %3428 = vmatprep.subr.bf16.mxu0 0
    %3429 = vmatpush1.bf16.msra.mxu0 %v3257
    %3430 = vmatprep.subr.bf16.mxu0 0
    %3431 = vmatpush1.bf16.msra.mxu0 %v3258
    %3432 = vmatprep.subr.bf16.mxu0 0
    %3433 = vmatpush1.bf16.msra.mxu0 %v3259
    %3434 = vmatprep.subr.bf16.mxu0 0
    %3435 = vmatpush1.bf16.msra.mxu0 %v3260
    %3436 = vmatprep.subr.bf16.mxu0 0
    %3437 = vmatpush1.bf16.msra.mxu0 %v3261
    %3438 = vmatprep.subr.bf16.mxu0 0
    %3439 = vmatpush1.bf16.msra.mxu0 %v3262
    %3440 = vmatprep.mubr.bf16.mxu0 %v2947
    %3441 = vmatmul.mubr.bf16.gmra.mrb[0].mxu0 %v2946
    %v3442 = vpop.f32.mrb[0].mxu0
    %v3443 = vadd.f32 %v3346, %v3442
    %v3444 = vpop.f32.mrb[0].mxu0
    %v3445 = vpop.f32.mrb[0].mxu0
    %v3446 = vadd.f32 %v3349, %v3445
    %v3447 = vpop.f32.mrb[0].mxu0
    %3448 = vmatprep.mubr.bf16.mxu0 %v2952
    %3449 = vmatmul.mubr.bf16.gmra.mrb[0].mxu0 %v2951
    %v3450 = vpop.f32.mrb[0].mxu0
    %v3451 = vadd.f32 %v3354, %v3450
    %v3452 = vpop.f32.mrb[0].mxu0
    %v3453 = vpop.f32.mrb[0].mxu0
    %v3454 = vadd.f32 %v3357, %v3453
    %v3455 = vpop.f32.mrb[0].mxu0
    %3456 = vmatprep.mubr.bf16.mxu0 %v2957
    %3457 = vmatmul.mubr.bf16.gmra.mrb[0].mxu0 %v2956
    %v3458 = vpop.f32.mrb[0].mxu0
    %v3459 = vadd.f32 %v3362, %v3458
    %v3460 = vpop.f32.mrb[0].mxu0
    %v3461 = vpop.f32.mrb[0].mxu0
    %v3462 = vadd.f32 %v3365, %v3461
    %v3463 = vpop.f32.mrb[0].mxu0
    %3464 = vmatprep.mubr.bf16.mxu0 %v2962
    %3465 = vmatmul.mubr.bf16.gmra.mrb[0].mxu0 %v2961
    %v3466 = vpop.f32.mrb[0].mxu0
    %v3467 = vadd.f32 %v3370, %v3466
    %v3468 = vpop.f32.mrb[0].mxu0
    %v3469 = vpop.f32.mrb[0].mxu0
    %v3470 = vadd.f32 %v3373, %v3469
    %v3471 = vpop.f32.mrb[0].mxu0
    %3472 = vmatprep.mubr.bf16.mxu0 %v2967
    %3473 = vmatmul.mubr.bf16.gmra.mrb[0].mxu0 %v2966
    %v3474 = vpop.f32.mrb[0].mxu0
    %v3475 = vadd.f32 %v3378, %v3474
    %v3476 = vpop.f32.mrb[0].mxu0
    %v3477 = vpop.f32.mrb[0].mxu0
    %v3478 = vadd.f32 %v3381, %v3477
    %v3479 = vpop.f32.mrb[0].mxu0
    %3480 = vmatprep.mubr.bf16.mxu0 %v2972
    %3481 = vmatmul.mubr.bf16.gmra.mrb[0].mxu0 %v2971
    %v3482 = vpop.f32.mrb[0].mxu0
    %v3483 = vadd.f32 %v3386, %v3482
    %v3484 = vpop.f32.mrb[0].mxu0
    %v3485 = vpop.f32.mrb[0].mxu0
    %v3486 = vadd.f32 %v3389, %v3485
    %v3487 = vpop.f32.mrb[0].mxu0
    %3488 = vmatprep.mubr.bf16.mxu0 %v2977
    %3489 = vmatmul.mubr.bf16.gmra.mrb[0].mxu0 %v2976
    %v3490 = vpop.f32.mrb[0].mxu0
    %v3491 = vadd.f32 %v3394, %v3490
    %v3492 = vpop.f32.mrb[0].mxu0
    %v3493 = vpop.f32.mrb[0].mxu0
    %v3494 = vadd.f32 %v3397, %v3493
    %v3495 = vpop.f32.mrb[0].mxu0
    %3496 = vmatprep.mubr.bf16.mxu0 %v2982
    %3497 = vmatmul.mubr.bf16.gmra.mrb[0].mxu0 %v2981
    %v3498 = vpop.f32.mrb[0].mxu0
    %v3499 = vadd.f32 %v3402, %v3498
    %v3500 = vpop.f32.mrb[0].mxu0
    %v3501 = vpop.f32.mrb[0].mxu0
    %v3502 = vadd.f32 %v3405, %v3501
    %v3503 = vpop.f32.mrb[0].mxu0
    %3504 = vdwg.mxu0
    %3505 = vmatprep.subr.bf16.mxu0 0
    %3506 = vmatpush1.bf16.msra.mxu0 %v3263
    %3507 = vmatprep.subr.bf16.mxu0 0
    %3508 = vmatpush1.bf16.msra.mxu0 %v3264
    %3509 = vmatprep.subr.bf16.mxu0 0
    %3510 = vmatpush1.bf16.msra.mxu0 %v3265
    %3511 = vmatprep.subr.bf16.mxu0 0
    %3512 = vmatpush1.bf16.msra.mxu0 %v3266
    %3513 = vmatprep.subr.bf16.mxu0 0
    %3514 = vmatpush1.bf16.msra.mxu0 %v3267
    %3515 = vmatprep.subr.bf16.mxu0 0
    %3516 = vmatpush1.bf16.msra.mxu0 %v3268
    %3517 = vmatprep.subr.bf16.mxu0 0
    %3518 = vmatpush1.bf16.msra.mxu0 %v3269
    %3519 = vmatprep.subr.bf16.mxu0 0
    %3520 = vmatpush1.bf16.msra.mxu0 %v3270
    %3521 = vmatprep.subr.bf16.mxu0 0
    %3522 = vmatpush1.bf16.msra.mxu0 0
    %3523 = vmatprep.subr.bf16.mxu0 0
    %3524 = vmatpush1.bf16.msra.mxu0 0
    %3525 = vmatprep.subr.bf16.mxu0 0
    %3526 = vmatpush1.bf16.msra.mxu0 0
    %3527 = vmatprep.subr.bf16.mxu0 0
    %3528 = vmatpush1.bf16.msra.mxu0 0
    %3529 = vmatprep.subr.bf16.mxu0 0
    %3530 = vmatpush1.bf16.msra.mxu0 0
    %3531 = vmatprep.subr.bf16.mxu0 0
    %3532 = vmatpush1.bf16.msra.mxu0 0
    %3533 = vmatprep.subr.bf16.mxu0 0
    %3534 = vmatpush1.bf16.msra.mxu0 0
    %3535 = vmatprep.subr.bf16.mxu0 0
    %3536 = vmatpush1.bf16.msra.mxu0 0
    %3537 = vmatprep.mubr.bf16.mxu0 0
    %3538 = vmatmul.mubr.bf16.gmra.mrb[0].mxu0 %v2948
    %v3539 = vpop.f32.mrb[0].mxu0
    %v3540 = vadd.f32 %v3443, %v3539
    %v3541 = vpop.f32.mrb[0].mxu0
    %v3542 = vpop.f32.mrb[0].mxu0
    %v3543 = vadd.f32 %v3446, %v3542
    %v3544 = vpop.f32.mrb[0].mxu0
    %3545 = vmatprep.mubr.bf16.mxu0 0
    %3546 = vmatmul.mubr.bf16.gmra.mrb[0].mxu0 %v2953
    %v3547 = vpop.f32.mrb[0].mxu0
    %v3548 = vadd.f32 %v3451, %v3547
    %v3549 = vpop.f32.mrb[0].mxu0
    %v3550 = vpop.f32.mrb[0].mxu0
    %v3551 = vadd.f32 %v3454, %v3550
    %v3552 = vpop.f32.mrb[0].mxu0
    %3553 = vmatprep.mubr.bf16.mxu0 0
    %3554 = vmatmul.mubr.bf16.gmra.mrb[0].mxu0 %v2958
    %v3555 = vpop.f32.mrb[0].mxu0
    %v3556 = vadd.f32 %v3459, %v3555
    %v3557 = vpop.f32.mrb[0].mxu0
    %v3558 = vpop.f32.mrb[0].mxu0
    %v3559 = vadd.f32 %v3462, %v3558
    %v3560 = vpop.f32.mrb[0].mxu0
    %3561 = vmatprep.mubr.bf16.mxu0 0
    %3562 = vmatmul.mubr.bf16.gmra.mrb[0].mxu0 %v2963
    %v3563 = vpop.f32.mrb[0].mxu0
    %v3564 = vadd.f32 %v3467, %v3563
    %v3565 = vpop.f32.mrb[0].mxu0
    %v3566 = vpop.f32.mrb[0].mxu0
    %v3567 = vadd.f32 %v3470, %v3566
    %v3568 = vpop.f32.mrb[0].mxu0
    %3569 = vmatprep.mubr.bf16.mxu0 0
    %3570 = vmatmul.mubr.bf16.gmra.mrb[0].mxu0 %v2968
    %v3571 = vpop.f32.mrb[0].mxu0
    %v3572 = vadd.f32 %v3475, %v3571
    %v3573 = vpop.f32.mrb[0].mxu0
    %v3574 = vpop.f32.mrb[0].mxu0
    %v3575 = vadd.f32 %v3478, %v3574
    %v3576 = vpop.f32.mrb[0].mxu0
    %3577 = vmatprep.mubr.bf16.mxu0 0
    %3578 = vmatmul.mubr.bf16.gmra.mrb[0].mxu0 %v2973
    %v3579 = vpop.f32.mrb[0].mxu0
    %v3580 = vadd.f32 %v3483, %v3579
    %v3581 = vpop.f32.mrb[0].mxu0
    %v3582 = vpop.f32.mrb[0].mxu0
    %v3583 = vadd.f32 %v3486, %v3582
    %v3584 = vpop.f32.mrb[0].mxu0
    %3585 = vmatprep.mubr.bf16.mxu0 0
    %3586 = vmatmul.mubr.bf16.gmra.mrb[0].mxu0 %v2978
    %v3587 = vpop.f32.mrb[0].mxu0
    %v3588 = vadd.f32 %v3491, %v3587
    %v3589 = vpop.f32.mrb[0].mxu0
    %v3590 = vpop.f32.mrb[0].mxu0
    %v3591 = vadd.f32 %v3494, %v3590
    %v3592 = vpop.f32.mrb[0].mxu0
    %3593 = vmatprep.mubr.bf16.mxu0 0
    %3594 = vmatmul.mubr.bf16.gmra.mrb[0].mxu0 %v2983
    %v3595 = vpop.f32.mrb[0].mxu0
    %v3596 = vadd.f32 %v3499, %v3595
    %v3597 = vpop.f32.mrb[0].mxu0
    %v3598 = vpop.f32.mrb[0].mxu0
    %v3599 = vadd.f32 %v3502, %v3598
    %v3600 = vpop.f32.mrb[0].mxu0
    %3601 = vdwg.mxu0
    %v3602 = vmul.f32 %v3540, 0.5
    %v3603 = vmul.f32 %v3543, 0.5
    %v3604 = vmul.f32 %v3548, 0.5
    %v3605 = vmul.f32 %v3551, 0.5
    %v3606 = vmul.f32 %v3556, 0.5
    %v3607 = vmul.f32 %v3559, 0.5
    %v3608 = vmul.f32 %v3564, 0.5
    %v3609 = vmul.f32 %v3567, 0.5
    %v3610 = vmul.f32 %v3572, 0.5
    %v3611 = vmul.f32 %v3575, 0.5
    %v3612 = vmul.f32 %v3580, 0.5
    %v3613 = vmul.f32 %v3583, 0.5
    %v3614 = vmul.f32 %v3588, 0.5
    %v3615 = vmul.f32 %v3591, 0.5
    %v3616 = vmul.f32 %v3596, 0.5
    %v3617 = vmul.f32 %v3599, 0.5
    %v3618 = vadd.f32 %v3602, 0.0
    %v3619 = vadd.f32 %v3603, 0.0
    %vm3620 = vcmp.ge.f32.partialorder %v3618, 1.0
    %vm3621 = vcmp.ge.f32.partialorder %v3619, 1.0
    %v3622 = vsel %vm3620, 1.0, 0.0
    %v3623 = vsel %vm3621, 1.0, 0.0
    %v3624 = vpack.c.bf16 %v3623, %v3622
    %3625 = vst [vmem:[#allocation3] sm:$0xff] %v3624
    %v3626 = vsel %vm3620, 0.0, %v3618
    %v3627 = vsel %vm3621, 0.0, %v3619
    %v3628 = vmul.f32 %v3626, 0.5
    %v3629 = vmul.f32 %v3627, 0.5
    %v3630 = vadd.f32 %v3628, %v3604
    %v3631 = vadd.f32 %v3629, %v3605
    %vm3632 = vcmp.ge.f32.partialorder %v3630, 1.0
    %vm3633 = vcmp.ge.f32.partialorder %v3631, 1.0
    %v3634 = vsel %vm3632, 1.0, 0.0
    %v3635 = vsel %vm3633, 1.0, 0.0
    %v3636 = vpack.c.bf16 %v3635, %v3634
    %3637 = vst [vmem:[#allocation3 + $0x8] sm:$0xff] %v3636
    %v3638 = vsel %vm3632, 0.0, %v3630
    %v3639 = vsel %vm3633, 0.0, %v3631
    %v3640 = vmul.f32 %v3638, 0.5
    %v3641 = vmul.f32 %v3639, 0.5
    %v3642 = vadd.f32 %v3640, %v3606
    %v3643 = vadd.f32 %v3641, %v3607
    %vm3644 = vcmp.ge.f32.partialorder %v3642, 1.0
    %vm3645 = vcmp.ge.f32.partialorder %v3643, 1.0
    %v3646 = vsel %vm3644, 1.0, 0.0
    %v3647 = vsel %vm3645, 1.0, 0.0
    %v3648 = vpack.c.bf16 %v3647, %v3646
    %3649 = vst [vmem:[#allocation3 + $0x10] sm:$0xff] %v3648
    %v3650 = vsel %vm3644, 0.0, %v3642
    %v3651 = vsel %vm3645, 0.0, %v3643
    %v3652 = vmul.f32 %v3650, 0.5
    %v3653 = vmul.f32 %v3651, 0.5
    %v3654 = vadd.f32 %v3652, %v3608
    %v3655 = vadd.f32 %v3653, %v3609
    %vm3656 = vcmp.ge.f32.partialorder %v3654, 1.0
    %vm3657 = vcmp.ge.f32.partialorder %v3655, 1.0
    %v3658 = vsel %vm3656, 1.0, 0.0
    %v3659 = vsel %vm3657, 1.0, 0.0
    %v3660 = vpack.c.bf16 %v3659, %v3658
    %3661 = vst [vmem:[#allocation3 + $0x18] sm:$0xff] %v3660
    %v3662 = vsel %vm3656, 0.0, %v3654
    %v3663 = vsel %vm3657, 0.0, %v3655
    %v3664 = vmul.f32 %v3662, 0.5
    %v3665 = vmul.f32 %v3663, 0.5
    %v3666 = vadd.f32 %v3664, %v3610
    %v3667 = vadd.f32 %v3665, %v3611
    %vm3668 = vcmp.ge.f32.partialorder %v3666, 1.0
    %vm3669 = vcmp.ge.f32.partialorder %v3667, 1.0
    %v3670 = vsel %vm3668, 1.0, 0.0
    %v3671 = vsel %vm3669, 1.0, 0.0
    %v3672 = vpack.c.bf16 %v3671, %v3670
    %3673 = vst [vmem:[#allocation3 + $0x20] sm:$0xff] %v3672
    %v3674 = vsel %vm3668, 0.0, %v3666
    %v3675 = vsel %vm3669, 0.0, %v3667
    %v3676 = vmul.f32 %v3674, 0.5
    %v3677 = vmul.f32 %v3675, 0.5
    %v3678 = vadd.f32 %v3676, %v3612
    %v3679 = vadd.f32 %v3677, %v3613
    %vm3680 = vcmp.ge.f32.partialorder %v3678, 1.0
    %vm3681 = vcmp.ge.f32.partialorder %v3679, 1.0
    %v3682 = vsel %vm3680, 1.0, 0.0
    %v3683 = vsel %vm3681, 1.0, 0.0
    %v3684 = vpack.c.bf16 %v3683, %v3682
    %3685 = vst [vmem:[#allocation3 + $0x28] sm:$0xff] %v3684
    %v3686 = vsel %vm3680, 0.0, %v3678
    %v3687 = vsel %vm3681, 0.0, %v3679
    %v3688 = vmul.f32 %v3686, 0.5
    %v3689 = vmul.f32 %v3687, 0.5
    %v3690 = vadd.f32 %v3688, %v3614
    %v3691 = vadd.f32 %v3689, %v3615
    %vm3692 = vcmp.ge.f32.partialorder %v3690, 1.0
    %vm3693 = vcmp.ge.f32.partialorder %v3691, 1.0
    %v3694 = vsel %vm3692, 1.0, 0.0
    %v3695 = vsel %vm3693, 1.0, 0.0
    %v3696 = vpack.c.bf16 %v3695, %v3694
    %3697 = vst [vmem:[#allocation3 + $0x30] sm:$0xff] %v3696
    %v3698 = vsel %vm3692, 0.0, %v3690
    %v3699 = vsel %vm3693, 0.0, %v3691
    %v3700 = vmul.f32 %v3698, 0.5
    %v3701 = vmul.f32 %v3699, 0.5
    %v3702 = vadd.f32 %v3700, %v3616
    %v3703 = vadd.f32 %v3701, %v3617
    %vm3704 = vcmp.ge.f32.partialorder %v3702, 1.0
    %vm3705 = vcmp.ge.f32.partialorder %v3703, 1.0
    %v3706 = vsel %vm3704, 1.0, 0.0
    %v3707 = vsel %vm3705, 1.0, 0.0
    %v3708 = vpack.c.bf16 %v3707, %v3706
    %3709 = vst [vmem:[#allocation3 + $0x38] sm:$0xff] %v3708
    %v3710 = vld [vmem:[#allocation3] sm:$0xff]
    %v3711 = vld [vmem:[#allocation3 + $0x8] sm:$0xff]
    %v3712 = vld [vmem:[#allocation3 + $0x10] sm:$0xff]
    %v3713 = vld [vmem:[#allocation3 + $0x18] sm:$0xff]
    %v3714 = vld [vmem:[#allocation3 + $0x20] sm:$0xff]
    %v3715 = vld [vmem:[#allocation3 + $0x28] sm:$0xff]
    %v3716 = vld [vmem:[#allocation3 + $0x30] sm:$0xff]
    %v3717 = vld [vmem:[#allocation3 + $0x38] sm:$0xff]
    %v3718 = vld [vmem:[#allocation11] sm:$0xf]
    %v3719 = vld [vmem:[#allocation11 + $0x4] sm:$0xf]
    %v3720 = vld [vmem:[#allocation11 + $0x8] sm:$0xf]
    %v3721 = vld [vmem:[#allocation11 + $0xc] sm:$0xf]
    %v3722 = vld [vmem:[#allocation11 + $0x10] sm:$0xf]
    %v3723 = vld [vmem:[#allocation11 + $0x14] sm:$0xf]
    %v3724 = vld [vmem:[#allocation11 + $0x18] sm:$0xf]
    %v3725 = vld [vmem:[#allocation11 + $0x1c] sm:$0xf]
    %v3726 = vld [vmem:[#allocation11 + $0x20] sm:$0xf]
    %v3727 = vld [vmem:[#allocation11 + $0x24] sm:$0xf]
    %v3728 = vld [vmem:[#allocation11 + $0x28] sm:$0xf]
    %v3729 = vld [vmem:[#allocation11 + $0x2c] sm:$0xf]
    %v3730 = vld [vmem:[#allocation11 + $0x30] sm:$0xf]
    %v3731 = vld [vmem:[#allocation11 + $0x34] sm:$0xf]
    %v3732 = vld [vmem:[#allocation11 + $0x38] sm:$0xf]
    %v3733 = vld [vmem:[#allocation11 + $0x3c] sm:$0xf]
    %v3734 = vld [vmem:[#allocation12] sm:$0x1]
    %v3736 = vlaneseq
    %v3737 = vshrl.u32 %v3736, 7
    %v3738 = vsub.s32 0, %v3737
    %v3739 = vrot.slane %v3734, %v3738
    %v3757 = vunpack.c.l.b16 %v3718
    %v3758 = vunpack.c.l.b16 %v3719
    %v3759 = vunpack.c.l.b16 %v3720
    %v3760 = vunpack.c.l.b16 %v3721
    %v3761 = vunpack.c.l.b16 %v3722
    %v3762 = vunpack.c.l.b16 %v3723
    %v3763 = vunpack.c.l.b16 %v3724
    %v3764 = vunpack.c.l.b16 %v3725
    %v3765 = vunpack.c.l.b16 %v3726
    %v3766 = vunpack.c.l.b16 %v3727
    %v3767 = vunpack.c.l.b16 %v3728
    %v3768 = vunpack.c.l.b16 %v3729
    %v3769 = vunpack.c.l.b16 %v3730
    %v3770 = vunpack.c.l.b16 %v3731
    %v3771 = vunpack.c.l.b16 %v3732
    %v3772 = vunpack.c.l.b16 %v3733
    %v3773 = vpack.c.b16 %v3758, %v3757
    %v3774 = vpack.c.b16 %v3760, %v3759
    %v3775 = vpack.c.b16 %v3762, %v3761
    %v3776 = vpack.c.b16 %v3764, %v3763
    %v3777 = vpack.c.b16 %v3766, %v3765
    %v3778 = vpack.c.b16 %v3768, %v3767
    %v3779 = vpack.c.b16 %v3770, %v3769
    %v3780 = vpack.c.b16 %v3772, %v3771
    %3789 = vmatprep.subr.bf16.mxu0 0
    %3790 = vmatpush1.bf16.msra.mxu0 %v3773
    %3791 = vmatprep.subr.bf16.mxu0 0
    %3792 = vmatpush1.bf16.msra.mxu0 %v3774
    %3793 = vmatprep.subr.bf16.mxu0 0
    %3794 = vmatpush1.bf16.msra.mxu0 %v3775
    %3795 = vmatprep.subr.bf16.mxu0 0
    %3796 = vmatpush1.bf16.msra.mxu0 %v3776
    %3797 = vmatprep.subr.bf16.mxu0 0
    %3798 = vmatpush1.bf16.msra.mxu0 %v3777
    %3799 = vmatprep.subr.bf16.mxu0 0
    %3800 = vmatpush1.bf16.msra.mxu0 %v3778
    %3801 = vmatprep.subr.bf16.mxu0 0
    %3802 = vmatpush1.bf16.msra.mxu0 %v3779
    %3803 = vmatprep.subr.bf16.mxu0 0
    %3804 = vmatpush1.bf16.msra.mxu0 %v3780
    %3805 = vmatprep.subr.bf16.mxu0 0
    %3806 = vmatpush1.bf16.msra.mxu0 0
    %3807 = vmatprep.subr.bf16.mxu0 0
    %3808 = vmatpush1.bf16.msra.mxu0 0
    %3809 = vmatprep.subr.bf16.mxu0 0
    %3810 = vmatpush1.bf16.msra.mxu0 0
    %3811 = vmatprep.subr.bf16.mxu0 0
    %3812 = vmatpush1.bf16.msra.mxu0 0
    %3813 = vmatprep.subr.bf16.mxu0 0
    %3814 = vmatpush1.bf16.msra.mxu0 0
    %3815 = vmatprep.subr.bf16.mxu0 0
    %3816 = vmatpush1.bf16.msra.mxu0 0
    %3817 = vmatprep.subr.bf16.mxu0 0
    %3818 = vmatpush1.bf16.msra.mxu0 0
    %3819 = vmatprep.subr.bf16.mxu0 0
    %3820 = vmatpush1.bf16.msra.mxu0 0
    %3821 = vmatprep.mubr.bf16.mxu0 0
    %3822 = vmatmul.mubr.bf16.gmra.mrb[0].mxu0 %v3710
    %v3823 = vpop.f32.mrb[0].mxu0
    %v3824 = vadd.f32 %v3739, %v3823
    %v3825 = vpop.f32.mrb[0].mxu0
    %v3826 = vpop.f32.mrb[0].mxu0
    %v3827 = vadd.f32 %v3739, %v3826
    %v3828 = vpop.f32.mrb[0].mxu0
    %3829 = vmatprep.mubr.bf16.mxu0 0
    %3830 = vmatmul.mubr.bf16.gmra.mrb[0].mxu0 %v3711
    %v3831 = vpop.f32.mrb[0].mxu0
    %v3832 = vadd.f32 %v3739, %v3831
    %v3833 = vpop.f32.mrb[0].mxu0
    %v3834 = vpop.f32.mrb[0].mxu0
    %v3835 = vadd.f32 %v3739, %v3834
    %v3836 = vpop.f32.mrb[0].mxu0
    %3837 = vmatprep.mubr.bf16.mxu0 0
    %3838 = vmatmul.mubr.bf16.gmra.mrb[0].mxu0 %v3712
    %v3839 = vpop.f32.mrb[0].mxu0
    %v3840 = vadd.f32 %v3739, %v3839
    %v3841 = vpop.f32.mrb[0].mxu0
    %v3842 = vpop.f32.mrb[0].mxu0
    %v3843 = vadd.f32 %v3739, %v3842
    %v3844 = vpop.f32.mrb[0].mxu0
    %3845 = vmatprep.mubr.bf16.mxu0 0
    %3846 = vmatmul.mubr.bf16.gmra.mrb[0].mxu0 %v3713
    %v3847 = vpop.f32.mrb[0].mxu0
    %v3848 = vadd.f32 %v3739, %v3847
    %v3849 = vpop.f32.mrb[0].mxu0
    %v3850 = vpop.f32.mrb[0].mxu0
    %v3851 = vadd.f32 %v3739, %v3850
    %v3852 = vpop.f32.mrb[0].mxu0
    %3853 = vmatprep.mubr.bf16.mxu0 0
    %3854 = vmatmul.mubr.bf16.gmra.mrb[0].mxu0 %v3714
    %v3855 = vpop.f32.mrb[0].mxu0
    %v3856 = vadd.f32 %v3739, %v3855
    %v3857 = vpop.f32.mrb[0].mxu0
    %v3858 = vpop.f32.mrb[0].mxu0
    %v3859 = vadd.f32 %v3739, %v3858
    %v3860 = vpop.f32.mrb[0].mxu0
    %3861 = vmatprep.mubr.bf16.mxu0 0
    %3862 = vmatmul.mubr.bf16.gmra.mrb[0].mxu0 %v3715
    %v3863 = vpop.f32.mrb[0].mxu0
    %v3864 = vadd.f32 %v3739, %v3863
    %v3865 = vpop.f32.mrb[0].mxu0
    %v3866 = vpop.f32.mrb[0].mxu0
    %v3867 = vadd.f32 %v3739, %v3866
    %v3868 = vpop.f32.mrb[0].mxu0
    %3869 = vmatprep.mubr.bf16.mxu0 0
    %3870 = vmatmul.mubr.bf16.gmra.mrb[0].mxu0 %v3716
    %v3871 = vpop.f32.mrb[0].mxu0
    %v3872 = vadd.f32 %v3739, %v3871
    %v3873 = vpop.f32.mrb[0].mxu0
    %v3874 = vpop.f32.mrb[0].mxu0
    %v3875 = vadd.f32 %v3739, %v3874
    %v3876 = vpop.f32.mrb[0].mxu0
    %3877 = vmatprep.mubr.bf16.mxu0 0
    %3878 = vmatmul.mubr.bf16.gmra.mrb[0].mxu0 %v3717
    %v3879 = vpop.f32.mrb[0].mxu0
    %v3880 = vadd.f32 %v3739, %v3879
    %v3881 = vpop.f32.mrb[0].mxu0
    %v3882 = vpop.f32.mrb[0].mxu0
    %v3883 = vadd.f32 %v3739, %v3882
    %v3884 = vpop.f32.mrb[0].mxu0
    %3885 = vdwg.mxu0
    %v3886 = vmul.f32 %v3824, 0.5
    %v3887 = vmul.f32 %v3827, 0.5
    %v3888 = vmul.f32 %v3832, 0.5
    %v3889 = vmul.f32 %v3835, 0.5
    %v3890 = vmul.f32 %v3840, 0.5
    %v3891 = vmul.f32 %v3843, 0.5
    %v3892 = vmul.f32 %v3848, 0.5
    %v3893 = vmul.f32 %v3851, 0.5
    %v3894 = vmul.f32 %v3856, 0.5
    %v3895 = vmul.f32 %v3859, 0.5
    %v3896 = vmul.f32 %v3864, 0.5
    %v3897 = vmul.f32 %v3867, 0.5
    %v3898 = vmul.f32 %v3872, 0.5
    %v3899 = vmul.f32 %v3875, 0.5
    %v3900 = vmul.f32 %v3880, 0.5
    %v3901 = vmul.f32 %v3883, 0.5
    %v3902 = vadd.f32 %v3886, 0.0
    %v3903 = vadd.f32 %v3887, 0.0
    %vm3904 = vcmp.ge.f32.partialorder %v3902, 1.0
    %vm3905 = vcmp.ge.f32.partialorder %v3903, 1.0
    %v3906 = vsel %vm3904, 1.0, 0.0
    %v3907 = vsel %vm3905, 1.0, 0.0
    %v3908 = vadd.f32 %v3906, 0.0
    %v3909 = vadd.f32 %v3907, 0.0
    %v3910 = vsel %vm3904, 0.0, %v3902
    %v3911 = vsel %vm3905, 0.0, %v3903
    %v3912 = vmul.f32 %v3910, 0.5
    %v3913 = vmul.f32 %v3911, 0.5
    %v3914 = vadd.f32 %v3912, %v3888
    %v3915 = vadd.f32 %v3913, %v3889
    %vm3916 = vcmp.ge.f32.partialorder %v3914, 1.0
    %vm3917 = vcmp.ge.f32.partialorder %v3915, 1.0
    %v3918 = vsel %vm3916, 1.0, 0.0
    %v3919 = vsel %vm3917, 1.0, 0.0
    %v3920 = vadd.f32 %v3908, %v3918
    %v3921 = vadd.f32 %v3909, %v3919
    %v3922 = vsel %vm3916, 0.0, %v3914
    %v3923 = vsel %vm3917, 0.0, %v3915
    %v3924 = vmul.f32 %v3922, 0.5
    %v3925 = vmul.f32 %v3923, 0.5
    %v3926 = vadd.f32 %v3924, %v3890
    %v3927 = vadd.f32 %v3925, %v3891
    %vm3928 = vcmp.ge.f32.partialorder %v3926, 1.0
    %vm3929 = vcmp.ge.f32.partialorder %v3927, 1.0
    %v3930 = vsel %vm3928, 1.0, 0.0
    %v3931 = vsel %vm3929, 1.0, 0.0
    %v3932 = vadd.f32 %v3920, %v3930
    %v3933 = vadd.f32 %v3921, %v3931
    %v3934 = vsel %vm3928, 0.0, %v3926
    %v3935 = vsel %vm3929, 0.0, %v3927
    %v3936 = vmul.f32 %v3934, 0.5
    %v3937 = vmul.f32 %v3935, 0.5
    %v3938 = vadd.f32 %v3936, %v3892
    %v3939 = vadd.f32 %v3937, %v3893
    %vm3940 = vcmp.ge.f32.partialorder %v3938, 1.0
    %vm3941 = vcmp.ge.f32.partialorder %v3939, 1.0
    %v3942 = vsel %vm3940, 1.0, 0.0
    %v3943 = vsel %vm3941, 1.0, 0.0
    %v3944 = vadd.f32 %v3932, %v3942
    %v3945 = vadd.f32 %v3933, %v3943
    %v3946 = vsel %vm3940, 0.0, %v3938
    %v3947 = vsel %vm3941, 0.0, %v3939
    %v3948 = vmul.f32 %v3946, 0.5
    %v3949 = vmul.f32 %v3947, 0.5
    %v3950 = vadd.f32 %v3948, %v3894
    %v3951 = vadd.f32 %v3949, %v3895
    %vm3952 = vcmp.ge.f32.partialorder %v3950, 1.0
    %vm3953 = vcmp.ge.f32.partialorder %v3951, 1.0
    %v3954 = vsel %vm3952, 1.0, 0.0
    %v3955 = vsel %vm3953, 1.0, 0.0
    %v3956 = vadd.f32 %v3944, %v3954
    %v3957 = vadd.f32 %v3945, %v3955
    %v3958 = vsel %vm3952, 0.0, %v3950
    %v3959 = vsel %vm3953, 0.0, %v3951
    %v3960 = vmul.f32 %v3958, 0.5
    %v3961 = vmul.f32 %v3959, 0.5
    %v3962 = vadd.f32 %v3960, %v3896
    %v3963 = vadd.f32 %v3961, %v3897
    %vm3964 = vcmp.ge.f32.partialorder %v3962, 1.0
    %vm3965 = vcmp.ge.f32.partialorder %v3963, 1.0
    %v3966 = vsel %vm3964, 1.0, 0.0
    %v3967 = vsel %vm3965, 1.0, 0.0
    %v3968 = vadd.f32 %v3956, %v3966
    %v3969 = vadd.f32 %v3957, %v3967
    %v3970 = vsel %vm3964, 0.0, %v3962
    %v3971 = vsel %vm3965, 0.0, %v3963
    %v3972 = vmul.f32 %v3970, 0.5
    %v3973 = vmul.f32 %v3971, 0.5
    %v3974 = vadd.f32 %v3972, %v3898
    %v3975 = vadd.f32 %v3973, %v3899
    %vm3976 = vcmp.ge.f32.partialorder %v3974, 1.0
    %vm3977 = vcmp.ge.f32.partialorder %v3975, 1.0
    %v3978 = vsel %vm3976, 1.0, 0.0
    %v3979 = vsel %vm3977, 1.0, 0.0
    %v3980 = vadd.f32 %v3968, %v3978
    %v3981 = vadd.f32 %v3969, %v3979
    %v3982 = vsel %vm3976, 0.0, %v3974
    %v3983 = vsel %vm3977, 0.0, %v3975
    %v3984 = vmul.f32 %v3982, 0.5
    %v3985 = vmul.f32 %v3983, 0.5
    %v3986 = vadd.f32 %v3984, %v3900
    %v3987 = vadd.f32 %v3985, %v3901
    %vm3988 = vcmp.ge.f32.partialorder %v3986, 1.0
    %vm3989 = vcmp.ge.f32.partialorder %v3987, 1.0
    %v3990 = vsel %vm3988, 1.0, 0.0
    %v3991 = vsel %vm3989, 1.0, 0.0
    %v3992 = vadd.f32 %v3980, %v3990
    %v3993 = vadd.f32 %v3981, %v3991
    %v3994 = vmul.f32 %v3992, 0.125
    %v3995 = vmul.f32 %v3993, 0.125
    %3996 = vst [vmem:[%s7] sm:$0xff] %v3994
    %3997 = vst [vmem:[%s7 + $0x8] sm:$0xff] %v3995
    // Predicated region
    $region54: #{sddtp_csnn_forward.1} parent=1 // pred_check
      _
    $region55: #{sddtp_csnn_forward.1} parent=1 // pred_check_branch
      %3999 = sbr.rel (0) target = $region57
    $region56: #{sddtp_csnn_forward.1} parent=1 // pred_region
      _
    $region57: #{sddtp_csnn_forward.1} parent=1 // pred_fallthru
      _
    // Predicated region
    $region58: #{sddtp_csnn_forward.1} parent=1 // pred_check
      _
    $region59: #{sddtp_csnn_forward.1} parent=1 // pred_check_branch
      %4001 = sbr.rel (0) target = $region61
    $region60: #{sddtp_csnn_forward.1} parent=1 // pred_region
      _
    $region61: #{sddtp_csnn_forward.1} parent=1 // pred_fallthru
      _
    %4002 = vsyncpa [#allocation5], 1
    %4003 = vsyncpa [#allocation7], 1
    %4004 = vsyncpa [#allocation10], 1
    %4005 = vsyncpa [#allocation13], 1

</llo_original>
